<compile_context>
chip_gen: v7x
topology: tpu7x:2x2x1
jax: 0.10.0
libtpu: 0.0.40
codegen_flags: <defaults>
</compile_context>

<pallas_src>
import functools

import jax
import jax.numpy as jnp
from jax.experimental import pallas as pl
from jax.experimental.pallas import tpu as pltpu

INF = 100000.0
USELESS_OBJECTS = True   # module flag


# ----------------------------------------------------------------------------
# Feature probes (run eagerly, cached)
# ----------------------------------------------------------------------------
_BUFFERED1_OK = None


def _probe_kernel(x_ref, o_ref):
    o_ref[...] = x_ref[...]


def _buffered1_supported():
    """Check once whether pipeline_mode=pl.Buffered(1) lowers on this jax/TPU."""
    global _BUFFERED1_OK
    if _BUFFERED1_OK is not None:
        return _BUFFERED1_OK
    try:
        spec = pl.BlockSpec((8, 128), lambda i: (0, 0), pipeline_mode=pl.Buffered(1))
        fn = pl.pallas_call(
            _probe_kernel,
            out_shape=jax.ShapeDtypeStruct((8, 128), jnp.float32),
            grid=(2,),
            in_specs=[spec],
            out_specs=pl.BlockSpec((8, 128), lambda i: (0, 0)),
        )
        with jax.ensure_compile_time_eval():   # never stage the probe into a trace
            x = jnp.ones((8, 128), jnp.float32)
            y = fn(x)
            jax.block_until_ready(y)
            ok = bool(jnp.array_equal(y, x))
        _BUFFERED1_OK = ok
    except Exception:
        _BUFFERED1_OK = False
    return _BUFFERED1_OK


def _bf16_transcendentals_ok():
    """bf16-native VPU/EUP exists on v6e / v7x, not on v5e (or older)."""
    try:
        kind = jax.devices()[0].device_kind.lower()
    except Exception:
        return False
    return any(tag in kind for tag in ("v6", "v7", "7x"))


def _choose_bb(B, S):
    """Batch block: bb*S >= 256 MXU rows if possible, preferring >=2 grid steps."""
    divs = [d for d in range(1, B + 1) if B % d == 0]
    cands = [d for d in divs if B // d >= 2] or divs   # keep megacore shardable
    target = max(1, -(-256 // S))                      # ceil(256 / S)
    meets = [d for d in cands if d >= target]
    return min(meets) if meets else max(cands)


# ----------------------------------------------------------------------------
# Fused kernel: projections + additive attention + BiLSTM + max-pool + FC
# ----------------------------------------------------------------------------
def _fused_kernel(f3d_ref, obj_ref, mask_ref,
                  wlin_ref, ww_ref, wu_ref, abias_ref,
                  wih_ref, whh_ref, blstm_ref, wfc_ref, bfc_ref,
                  outf_ref, outb_ref, pend_ref, *, act_dtype):
    Bb, S, F3D = f3d_ref.shape
    _, O, H = obj_ref.shape
    Hh = whh_ref.shape[1]
    G = 4 * Hh
    bf16 = jnp.bfloat16
    f32 = jnp.float32

    # grid-invariant parameter rows (hoisted once)
    blin = abias_ref[0:1, :]
    bwb = abias_ref[1:2, :]            # W bias + self.b, folded at pack time
    bu = abias_ref[2:3, :]
    wattn = abias_ref[3:4, :]          # weight of self.w  (1, H)
    whh_f = whh_ref[0]                 # (Hh, 4Hh) bf16, gate order i,f,o,g
    whh_b = whh_ref[1]

    # ---- batched projections: collapse (Bb*S) / (Bb*O) into the MXU M dim ----
    x3d = f3d_ref[...].reshape(Bb * S, F3D)
    f = jnp.dot(x3d.astype(bf16), wlin_ref[...], preferred_element_type=f32) + blin   # (Bb*S, H)
    f_bf = f.astype(bf16)
    wfb = jnp.dot(f_bf, ww_ref[...], preferred_element_type=f32) + bwb                # Wf + b
    objs = obj_ref[...].reshape(Bb * O, H)
    uo = jnp.dot(objs.astype(bf16), wu_ref[...], preferred_element_type=f32) + bu     # (Bb*O, H)
    uo_bf = uo.astype(bf16)

    # ---- additive attention over objects ----
    # softmax weights sum to 1  =>  attn_objects = (Wf + b) + softmax(scores) @ Uobjs
    # (the self.w bias cancels in the softmax and is dropped)
    mask_inf = mask_ref[...] * INF                      # (Bb, 1, O), hoisted out of the unroll
    ctx_rows = []
    for b in range(Bb):
        wfb_b = wfb[b * S:(b + 1) * S, :]               # (S, H)
        uo_b = uo[b * O:(b + 1) * O, :]                 # (O, H)
        af = wfb_b[:, None, :] + uo_b[None, :, :]       # (S, O, H) f32 = attn_feat
        # tanh in act_dtype (bf16 on v6e/v7x); score sum / mask / softmax stay f32
        sc = jnp.sum(jnp.tanh(af.astype(act_dtype)) * wattn, axis=-1)   # (S, O) f32
        if USELESS_OBJECTS:
            sc = sc - mask_inf[b]                       # (1, O) broadcast
        m = jnp.max(sc, axis=-1, keepdims=True)
        p_un = jnp.exp(sc - m)                          # unnormalised weights (f32)
        rinv = pl.reciprocal(jnp.sum(p_un, axis=-1, keepdims=True), approx=True)
        ctx = jnp.dot(p_un.astype(bf16), uo_bf[b * O:(b + 1) * O, :],
                      preferred_element_type=f32)
        ctx_rows.append(wfb_b + ctx * rinv)             # (S, H) attn_objects
    attn = ctx_rows[0] if Bb == 1 else jnp.concatenate(ctx_rows, axis=0)   # (Bb*S, H)

    # ---- BiLSTM input projection for BOTH directions, hoisted out of time loop ----
    wih = wih_ref[...]                                  # (2H, 8Hh) bf16, [fwd | bwd]
    gates_x = (jnp.dot(f_bf, wih[0:H, :], preferred_element_type=f32)
               + jnp.dot(attn.astype(bf16), wih[H:2 * H, :], preferred_element_type=f32)
               + blstm_ref[...])                        # (Bb*S, 2G)
    gxf = gates_x[:, 0:G].reshape(Bb, S, G)
    gxb = gates_x[:, G:2 * G].reshape(Bb, S, G)
    # hoist the (sublane-strided) per-time-step row reads off the serial recurrence
    gxf_t = [gxf[:, t, :] for t in range(S)]
    gxb_t = [gxb[:, t, :] for t in range(S)]

    def cell(gates, c):
        ga = gates.astype(act_dtype)                    # bf16 gates on v6e/v7x
        sig = jax.nn.sigmoid(ga[:, 0:3 * Hh])           # i | f | o in one pass
        g = jnp.tanh(ga[:, 3 * Hh:4 * Hh])
        c_new = sig[:, Hh:2 * Hh].astype(f32) * c + (sig[:, 0:Hh] * g).astype(f32)
        h_new = sig[:, 2 * Hh:3 * Hh].astype(f32) * jnp.tanh(c_new)   # c/h state f32
        return h_new, c_new

    h_f = jnp.zeros((Bb, Hh), f32)
    c_f = jnp.zeros((Bb, Hh), f32)
    h_b = jnp.zeros((Bb, Hh), f32)
    c_b = jnp.zeros((Bb, Hh), f32)
    act_f = None
    act_b = None
    # Interleave fwd (t = s) and bwd (t = S-1-s): the two independent recurrences
    # hide each other's MXU/EUP latency.  Each h_t goes straight into the output
    # slab and the max-pool is a running maximum (no live `outs` lists).
    for s in range(S):
        tb = S - 1 - s
        gates_f = gxf_t[s] + jnp.dot(h_f.astype(bf16), whh_f, preferred_element_type=f32)
        gates_b = gxb_t[tb] + jnp.dot(h_b.astype(bf16), whh_b, preferred_element_type=f32)
        h_f, c_f = cell(gates_f, c_f)
        h_b, c_b = cell(gates_b, c_b)
        outf_ref[:, :, s * Hh:(s + 1) * Hh] = h_f[:, None, :]
        outb_ref[:, :, tb * Hh:(tb + 1) * Hh] = h_b[:, None, :]
        act_f = h_f if s == 0 else jnp.maximum(act_f, h_f)
        act_b = h_b if s == 0 else jnp.maximum(act_b, h_b)

    # action = max over time, pending = action @ Wfc + bfc (Wfc pre-padded to 128 lanes)
    pend = (jnp.dot(act_f.astype(bf16), wfc_ref[0:Hh, :], preferred_element_type=f32)
            + jnp.dot(act_b.astype(bf16), wfc_ref[Hh:2 * Hh, :], preferred_element_type=f32)
            + bfc_ref[...])
    pend_ref[...] = pend[:, None, :]


# ----------------------------------------------------------------------------
# Parameter packing
# ----------------------------------------------------------------------------
def _pack_params(p, semp):
    bf16 = jnp.bfloat16
    H = p["wlin"].shape[1]
    SEM = p["wfc"].shape[1]

    def perm(w):   # permute gate columns (i, f, g, o) -> (i, f, o, g)
        i_, f_, g_, o_ = jnp.split(w, 4, axis=-1)
        return jnp.concatenate([i_, f_, o_, g_], axis=-1)

    abias = jnp.zeros((8, H), jnp.float32)
    abias = (abias.at[0].set(p["blin"][0])
                  .at[1].set(p["bw"][0] + p["bvec"][0])   # W bias + self.b folded
                  .at[2].set(p["bu"][0])
                  .at[3].set(p["wattn"][0]))
    # self.w bias (battn) cancels in the softmax -> not shipped to the kernel

    wih = jnp.concatenate([perm(p["wih_f"]), perm(p["wih_b"])], axis=1).astype(bf16)  # (2H, 8Hh)
    whh = jnp.stack([perm(p["whh_f"]), perm(p["whh_b"])], axis=0).astype(bf16)        # (2, Hh, 4Hh)
    blstm = jnp.concatenate([perm(p["b_f"]), perm(p["b_b"])], axis=1)                 # (1, 8Hh) f32

    wfc_pad = jnp.zeros((H, semp), bf16).at[:, :SEM].set(p["wfc"].astype(bf16))
    bfc_pad = jnp.zeros((1, semp), jnp.float32).at[:, :SEM].set(p["bfc"])

    return dict(wlin=p["wlin"].astype(bf16), ww=p["ww"].astype(bf16),
                wu=p["wu"].astype(bf16), abias=abias,
                wih=wih, whh=whh, blstm=blstm, wfc=wfc_pad, bfc=bfc_pad)


# ----------------------------------------------------------------------------
# Wrapper
# ----------------------------------------------------------------------------
def predicate_level_encoder(features3d, objects, objects_mask, p, *,
                            bb=None, use_bf16_act=None):
    B, S, F3D = features3d.shape
    _, O, H = objects.shape
    Hh = p["whh_f"].shape[0]
    SEM = p["wfc"].shape[1]
    SEMP = ((SEM + 127) // 128) * 128

    if bb is None:
        bb = _choose_bb(B, S)
    assert B % bb == 0
    if use_bf16_act is None:
        use_bf16_act = _bf16_transcendentals_ok()
    act_dtype = jnp.bfloat16 if use_bf16_act else jnp.float32

    pk = _pack_params(p, SEMP)
    mask3 = objects_mask.reshape(B, 1, O).astype(jnp.float32)

    # grid-invariant weights: single-buffered when the installed jax supports it
    rep_kw = dict(pipeline_mode=pl.Buffered(1)) if _buffered1_supported() else {}

    def rep(a):
        return pl.BlockSpec(a.shape, lambda b: (0,) * a.ndim, **rep_kw)

    kernel = functools.partial(_fused_kernel, act_dtype=act_dtype)

    outf, outb, pend = pl.pallas_call(
        kernel,
        out_shape=(jax.ShapeDtypeStruct((B, 1, S * Hh), jnp.float32),
                   jax.ShapeDtypeStruct((B, 1, S * Hh), jnp.float32),
                   jax.ShapeDtypeStruct((B, 1, SEMP), jnp.float32)),
        grid=(B // bb,),
        in_specs=[
            pl.BlockSpec((bb, S, F3D), lambda b: (b, 0, 0)),
            pl.BlockSpec((bb, O, H), lambda b: (b, 0, 0)),
            pl.BlockSpec((bb, 1, O), lambda b: (b, 0, 0)),
            rep(pk["wlin"]), rep(pk["ww"]), rep(pk["wu"]), rep(pk["abias"]),
            rep(pk["wih"]), rep(pk["whh"]), rep(pk["blstm"]),
            rep(pk["wfc"]), rep(pk["bfc"]),
        ],
        out_specs=(pl.BlockSpec((bb, 1, S * Hh), lambda b: (b, 0, 0)),
                   pl.BlockSpec((bb, 1, S * Hh), lambda b: (b, 0, 0)),
                   pl.BlockSpec((bb, 1, SEMP), lambda b: (b, 0, 0))),
        compiler_params=pltpu.CompilerParams(
            dimension_semantics=("parallel",),
            vmem_limit_bytes=64 * 1024 * 1024),   # sized for v7x's 64 MiB physical VMEM
    )(features3d, objects, mask3,
      pk["wlin"], pk["ww"], pk["wu"], pk["abias"],
      pk["wih"], pk["whh"], pk["blstm"], pk["wfc"], pk["bfc"])

    fwd = outf[:, 0, :].reshape(B, S, Hh)
    bwd = outb[:, 0, :].reshape(B, S, Hh)
    action_features = jnp.concatenate([fwd, bwd], axis=-1)   # (B, S, H)
    action_pending = pend[:, 0, :SEM]                        # (B, SEM)
    return action_features, action_pending


# ----------------------------------------------------------------------------
# Deterministic synthetic parameters (shapes from module __init__)
# ----------------------------------------------------------------------------
def init_params(key, feature3d_dim, hidden_dim, semantics_dim):
    H, Hh = hidden_dim, hidden_dim // 2
    ks = jax.random.split(key, 16)

    def w(k, din, dout, scale=0.1):
        return jax.random.normal(k, (din, dout), jnp.float32) * scale

    return dict(
        wlin=w(ks[0], feature3d_dim, H), blin=jax.random.normal(ks[1], (1, H), jnp.float32) * 0.01,
        ww=w(ks[2], H, H),               bw=jax.random.normal(ks[3], (1, H), jnp.float32) * 0.01,
        wu=w(ks[4], H, H),               bu=jax.random.normal(ks[5], (1, H), jnp.float32) * 0.01,
        bvec=jnp.ones((1, H), jnp.float32),                         # self.b = ones(hidden_dim)
        wattn=jax.random.normal(ks[6], (1, H), jnp.float32) * 0.1,  # self.w weight (1, H)
        battn=jax.random.normal(ks[7], (1, 1), jnp.float32) * 0.01,
        wih_f=w(ks[8], 2 * H, 4 * Hh),   whh_f=w(ks[9], Hh, 4 * Hh),
        b_f=jax.random.normal(ks[10], (1, 4 * Hh), jnp.float32) * 0.01,   # b_ih + b_hh combined
        wih_b=w(ks[11], 2 * H, 4 * Hh),  whh_b=w(ks[12], Hh, 4 * Hh),
        b_b=jax.random.normal(ks[13], (1, 4 * Hh), jnp.float32) * 0.01,
        wfc=w(ks[14], H, semantics_dim), bfc=jax.random.normal(ks[15], (1, semantics_dim), jnp.float32) * 0.01,
    )


# ----------------------------------------------------------------------------
# Pure-JAX f32 reference (mirrors the PyTorch forward, gate order i,f,g,o)
# ----------------------------------------------------------------------------
_HP = jax.lax.Precision.HIGHEST


def _ref_lstm_dir(x, wih, whh, b, reverse):
    Bn, S, _ = x.shape
    Hh = whh.shape[0]
    h = jnp.zeros((Bn, Hh), jnp.float32)
    c = jnp.zeros((Bn, Hh), jnp.float32)
    outs = [None] * S
    order = range(S - 1, -1, -1) if reverse else range(S)
    for t in order:
        gates = (jnp.dot(x[:, t, :], wih, precision=_HP)
                 + jnp.dot(h, whh, precision=_HP) + b)
        i = jax.nn.sigmoid(gates[:, 0:Hh])
        f = jax.nn.sigmoid(gates[:, Hh:2 * Hh])
        g = jnp.tanh(gates[:, 2 * Hh:3 * Hh])
        o = jax.nn.sigmoid(gates[:, 3 * Hh:4 * Hh])
        c = f * c + i * g
        h = o * jnp.tanh(c)
        outs[t] = h
    return jnp.stack(outs, axis=1)


def reference(features3d, objects, objects_mask, p):
    f = jnp.einsum("bsf,fh->bsh", features3d, p["wlin"], precision=_HP) + p["blin"]
    wf = jnp.einsum("bsh,hk->bsk", f, p["ww"], precision=_HP) + p["bw"]
    uo = jnp.einsum("boh,hk->bok", objects, p["wu"], precision=_HP) + p["bu"]
    attn_feat = wf[:, :, None, :] + uo[:, None, :, :] + p["bvec"]
    scores = jnp.sum(jnp.tanh(attn_feat) * p["wattn"], axis=-1) + p["battn"][0, 0]
    if USELESS_OBJECTS:
        scores = scores - objects_mask[:, None, :].astype(jnp.float32) * INF
    w = jax.nn.softmax(scores, axis=-1)
    attn_obj = jnp.einsum("bso,bsoh->bsh", w, attn_feat, precision=_HP)
    feats = jnp.concatenate([f, attn_obj], axis=-1)
    fwd = _ref_lstm_dir(feats, p["wih_f"], p["whh_f"], p["b_f"], False)
    bwd = _ref_lstm_dir(feats, p["wih_b"], p["whh_b"], p["b_b"], True)
    out = jnp.concatenate([fwd, bwd], axis=-1)
    action = jnp.max(out, axis=1)
    return out, jnp.dot(action, p["wfc"], precision=_HP) + p["bfc"]


if __name__ == "__main__":
    B, S, F3D, O, H, SEM = 2, 8, 16, 8, 32, 16
    key = jax.random.PRNGKey(0)
    k1, k2, k3, kp = jax.random.split(key, 4)

    features3d = jax.random.normal(k1, (B, S, F3D), jnp.float32)
    objects = jax.random.normal(k2, (B, O, H), jnp.float32)
    objects_mask = (jax.random.uniform(k3, (B, O)) > 0.7).astype(jnp.float32)
    params = init_params(kp, F3D, H, SEM)

    _buffered1_supported()   # run the probe eagerly, outside any trace

    fwd_fn = jax.jit(predicate_level_encoder)
    action_features, action_pending = fwd_fn(features3d, objects, objects_mask, params)
    jax.block_until_ready((action_features, action_pending))

    assert action_features.shape == (B, S, H)
    assert action_pending.shape == (B, SEM)
    assert bool(jnp.all(jnp.isfinite(action_features)))
    assert bool(jnp.all(jnp.isfinite(action_pending)))

    # kernel uses bf16 MXU operands (f32 accumulation) and, on v6e/v7x, bf16
    # transcendentals for the attention tanh / LSTM gates; compare vs full-f32 ref
    ref_feats, ref_pend = reference(features3d, objects, objects_mask, params)
    assert jnp.allclose(action_features, ref_feats, atol=3e-2, rtol=3e-2), \
        float(jnp.max(jnp.abs(action_features - ref_feats)))
    assert jnp.allclose(action_pending, ref_pend, atol=3e-2, rtol=3e-2), \
        float(jnp.max(jnp.abs(action_pending - ref_pend)))

    print("KERNEL_OK")
</pallas_src>

<mosaic_0001>
module attributes {stable_mosaic.version = 11 : i64} {
  func.func @_probe_kernel(%arg0: i32, %arg1: memref<8x128xf32, #tpu.memory_space<vmem>>, %arg2: memref<8x128xf32, #tpu.memory_space<vmem>>) attributes {dimension_semantics = [#tpu.dimension_semantics<arbitrary>], iteration_bounds = array<i64: 2>, scalar_prefetch = 0 : i64, scratch_operands = 0 : i64, tpu.core_type = #tpu.core_type<tc>, window_params = [{pipeline_mode = #tpu.pipeline_mode<synchronous>, transform_indices = @transform_0, window_bounds = array<i64: 8, 128>}, {pipeline_mode = #tpu.pipeline_mode<synchronous>, transform_indices = @transform_1, window_bounds = array<i64: 8, 128>}]} {
    %c0 = arith.constant 0 : index
    %c0_0 = arith.constant 0 : index
    %0 = vector.load %arg1[%c0, %c0_0] : memref<8x128xf32, #tpu.memory_space<vmem>>, vector<8x128xf32>
    %c0_1 = arith.constant 0 : index
    %c0_2 = arith.constant 0 : index
    %1 = vector.load %arg2[%c0_1, %c0_2] : memref<8x128xf32, #tpu.memory_space<vmem>>, vector<8x128xf32>
    tpu.vector_store %arg2[%c0_1, %c0_2], %0 {strides = array<i32>} : memref<8x128xf32, #tpu.memory_space<vmem>>, vector<8x128xf32>,
    return
  }
  func.func @transform_0(%arg0: i32) -> (i32, i32) {
    %c0_i32 = arith.constant 0 : i32
    %c0_i32_0 = arith.constant 0 : i32
    %c0_i32_1 = arith.constant 0 : i32
    return %c0_i32, %c0_i32_0 : i32, i32
  }
  func.func @transform_1(%arg0: i32) -> (i32, i32) {
    %c0_i32 = arith.constant 0 : i32
    %c0_i32_0 = arith.constant 0 : i32
    %c0_i32_1 = arith.constant 0 : i32
    return %c0_i32, %c0_i32_0 : i32, i32
  }
}

module attributes {stable_mosaic.version = 11 : i64} {
  func.func @_fused_kernel(%arg0: i32, %arg1: memref<1x8x16xf32, #tpu.memory_space<vmem>>, %arg2: memref<1x8x32xf32, #tpu.memory_space<vmem>>, %arg3: memref<1x1x8xf32, #tpu.memory_space<vmem>>, %arg4: memref<16x32xbf16, #tpu.memory_space<vmem>>, %arg5: memref<32x32xbf16, #tpu.memory_space<vmem>>, %arg6: memref<32x32xbf16, #tpu.memory_space<vmem>>, %arg7: memref<8x32xf32, #tpu.memory_space<vmem>>, %arg8: memref<64x128xbf16, #tpu.memory_space<vmem>>, %arg9: memref<2x16x64xbf16, #tpu.memory_space<vmem>>, %arg10: memref<1x128xf32, #tpu.memory_space<vmem>>, %arg11: memref<32x128xbf16, #tpu.memory_space<vmem>>, %arg12: memref<1x128xf32, #tpu.memory_space<vmem>>, %arg13: memref<1x1x128xf32, #tpu.memory_space<vmem>>, %arg14: memref<1x1x128xf32, #tpu.memory_space<vmem>>, %arg15: memref<1x1x128xf32, #tpu.memory_space<vmem>>) attributes {dimension_semantics = [#tpu.dimension_semantics<parallel>], iteration_bounds = array<i64: 2>, scalar_prefetch = 0 : i64, scratch_operands = 0 : i64, tpu.core_type = #tpu.core_type<tc>, window_params = [{transform_indices = @transform_0, window_bounds = array<i64: 1, 8, 16>}, {transform_indices = @transform_1, window_bounds = array<i64: 1, 8, 32>}, {transform_indices = @transform_2, window_bounds = array<i64: 1, 1, 8>}, {pipeline_mode = #tpu.pipeline_mode<synchronous>, transform_indices = @transform_3, window_bounds = array<i64: 16, 32>}, {pipeline_mode = #tpu.pipeline_mode<synchronous>, transform_indices = @transform_4, window_bounds = array<i64: 32, 32>}, {pipeline_mode = #tpu.pipeline_mode<synchronous>, transform_indices = @transform_5, window_bounds = array<i64: 32, 32>}, {pipeline_mode = #tpu.pipeline_mode<synchronous>, transform_indices = @transform_6, window_bounds = array<i64: 8, 32>}, {pipeline_mode = #tpu.pipeline_mode<synchronous>, transform_indices = @transform_7, window_bounds = array<i64: 64, 128>}, {pipeline_mode = #tpu.pipeline_mode<synchronous>, transform_indices = @transform_8, window_bounds = array<i64: 2, 16, 64>}, {pipeline_mode = #tpu.pipeline_mode<synchronous>, transform_indices = @transform_9, window_bounds = array<i64: 1, 128>}, {pipeline_mode = #tpu.pipeline_mode<synchronous>, transform_indices = @transform_10, window_bounds = array<i64: 32, 128>}, {pipeline_mode = #tpu.pipeline_mode<synchronous>, transform_indices = @transform_11, window_bounds = array<i64: 1, 128>}, {transform_indices = @transform_12, window_bounds = array<i64: 1, 1, 128>}, {transform_indices = @transform_13, window_bounds = array<i64: 1, 1, 128>}, {transform_indices = @transform_14, window_bounds = array<i64: 1, 1, 128>}]} {
    %c0 = arith.constant 0 : index
    %c0_0 = arith.constant 0 : index
    %0 = vector.load %arg7[%c0, %c0_0] : memref<8x32xf32, #tpu.memory_space<vmem>>, vector<1x32xf32>
    %c1 = arith.constant 1 : index
    %c0_1 = arith.constant 0 : index
    %1 = vector.load %arg7[%c1, %c0_1] : memref<8x32xf32, #tpu.memory_space<vmem>>, vector<1x32xf32>
    %c2 = arith.constant 2 : index
    %c0_2 = arith.constant 0 : index
    %2 = vector.load %arg7[%c2, %c0_2] : memref<8x32xf32, #tpu.memory_space<vmem>>, vector<1x32xf32>
    %c3 = arith.constant 3 : index
    %c0_3 = arith.constant 0 : index
    %3 = vector.load %arg7[%c3, %c0_3] : memref<8x32xf32, #tpu.memory_space<vmem>>, vector<1x32xf32>
    %c0_4 = arith.constant 0 : index
    %c0_5 = arith.constant 0 : index
    %c0_6 = arith.constant 0 : index
    %4 = vector.load %arg9[%c0_4, %c0_5, %c0_6] : memref<2x16x64xbf16, #tpu.memory_space<vmem>>, vector<1x16x64xbf16>
    %5 = vector.shape_cast %4 : vector<1x16x64xbf16> to vector<16x64xbf16>
    %c1_7 = arith.constant 1 : index
    %c0_8 = arith.constant 0 : index
    %c0_9 = arith.constant 0 : index
    %6 = vector.load %arg9[%c1_7, %c0_8, %c0_9] : memref<2x16x64xbf16, #tpu.memory_space<vmem>>, vector<1x16x64xbf16>
    %7 = vector.shape_cast %6 : vector<1x16x64xbf16> to vector<16x64xbf16>
    %c0_10 = arith.constant 0 : index
    %c0_11 = arith.constant 0 : index
    %c0_12 = arith.constant 0 : index
    %8 = vector.load %arg1[%c0_10, %c0_11, %c0_12] : memref<1x8x16xf32, #tpu.memory_space<vmem>>, vector<1x8x16xf32>
    %9 = vector.shape_cast %8 : vector<1x8x16xf32> to vector<8x16xf32>
    %10 = arith.truncf %9 : vector<8x16xf32> to vector<8x16xbf16>
    %c0_13 = arith.constant 0 : index
    %c0_14 = arith.constant 0 : index
    %11 = vector.load %arg4[%c0_13, %c0_14] : memref<16x32xbf16, #tpu.memory_space<vmem>>, vector<16x32xbf16>
    %cst = arith.constant dense<0.000000e+00> : vector<8x32xf32>
    %12 = tpu.matmul %10, %11, %cst {dimension_numbers = #tpu.dot_dimension_numbers<[1], [0], [0], [1], [0, 0, 1, 1], [], []>} : vector<8x16xbf16>, vector<16x32xbf16>, vector<8x32xf32> -> vector<8x32xf32>
    %13 = vector.broadcast %0 : vector<1x32xf32> to vector<8x32xf32>
    %14 = arith.addf %12, %13 : vector<8x32xf32>
    %15 = arith.truncf %14 : vector<8x32xf32> to vector<8x32xbf16>
    %c0_15 = arith.constant 0 : index
    %c0_16 = arith.constant 0 : index
    %16 = vector.load %arg5[%c0_15, %c0_16] : memref<32x32xbf16, #tpu.memory_space<vmem>>, vector<32x32xbf16>
    %cst_17 = arith.constant dense<0.000000e+00> : vector<8x32xf32>
    %17 = tpu.matmul %15, %16, %cst_17 {dimension_numbers = #tpu.dot_dimension_numbers<[1], [0], [0], [1], [0, 0, 1, 1], [], []>} : vector<8x32xbf16>, vector<32x32xbf16>, vector<8x32xf32> -> vector<8x32xf32>
    %18 = vector.broadcast %1 : vector<1x32xf32> to vector<8x32xf32>
    %19 = arith.addf %17, %18 : vector<8x32xf32>
    %c0_18 = arith.constant 0 : index
    %c0_19 = arith.constant 0 : index
    %c0_20 = arith.constant 0 : index
    %20 = vector.load %arg2[%c0_18, %c0_19, %c0_20] : memref<1x8x32xf32, #tpu.memory_space<vmem>>, vector<1x8x32xf32>
    %21 = vector.shape_cast %20 : vector<1x8x32xf32> to vector<8x32xf32>
    %22 = arith.truncf %21 : vector<8x32xf32> to vector<8x32xbf16>
    %c0_21 = arith.constant 0 : index
    %c0_22 = arith.constant 0 : index
    %23 = vector.load %arg6[%c0_21, %c0_22] : memref<32x32xbf16, #tpu.memory_space<vmem>>, vector<32x32xbf16>
    %cst_23 = arith.constant dense<0.000000e+00> : vector<8x32xf32>
    %24 = tpu.matmul %22, %23, %cst_23 {dimension_numbers = #tpu.dot_dimension_numbers<[1], [0], [0], [1], [0, 0, 1, 1], [], []>} : vector<8x32xbf16>, vector<32x32xbf16>, vector<8x32xf32> -> vector<8x32xf32>
    %25 = vector.broadcast %2 : vector<1x32xf32> to vector<8x32xf32>
    %26 = arith.addf %24, %25 : vector<8x32xf32>
    %27 = arith.truncf %26 : vector<8x32xf32> to vector<8x32xbf16>
    %c0_24 = arith.constant 0 : index
    %c0_25 = arith.constant 0 : index
    %c0_26 = arith.constant 0 : index
    %28 = vector.load %arg3[%c0_24, %c0_25, %c0_26] : memref<1x1x8xf32, #tpu.memory_space<vmem>>, vector<1x1x8xf32>
    %cst_27 = arith.constant 1.000000e+05 : f32
    %29 = vector.broadcast %cst_27 : f32 to vector<1x1x8xf32>
    %30 = arith.mulf %28, %29 : vector<1x1x8xf32>
    %31 = vector.shape_cast %19 : vector<8x32xf32> to vector<8x1x32xf32>
    %32 = vector.shape_cast %26 : vector<8x32xf32> to vector<1x8x32xf32>
    %33 = vector.broadcast %31 : vector<8x1x32xf32> to vector<8x8x32xf32>
    %34 = vector.broadcast %32 : vector<1x8x32xf32> to vector<8x8x32xf32>
    %35 = arith.addf %33, %34 : vector<8x8x32xf32>
    %36 = math.tanh %35 : vector<8x8x32xf32>
    %37 = vector.shape_cast %3 : vector<1x32xf32> to vector<1x1x32xf32>
    %38 = vector.broadcast %37 : vector<1x1x32xf32> to vector<8x8x32xf32>
    %39 = arith.mulf %36, %38 : vector<8x8x32xf32>
    %cst_28 = arith.constant dense<0.000000e+00> : vector<8x8xf32>
    %40 = vector.multi_reduction <add>, %39, %cst_28 [2] : vector<8x8x32xf32> to vector<8x8xf32>
    %41 = vector.shape_cast %30 : vector<1x1x8xf32> to vector<1x8xf32>
    %42 = vector.broadcast %41 : vector<1x8xf32> to vector<8x8xf32>
    %43 = arith.subf %40, %42 : vector<8x8xf32>
    %cst_29 = arith.constant dense<0xFF800000> : vector<8xf32>
    %44 = vector.multi_reduction <maximumf>, %43, %cst_29 [1] : vector<8x8xf32> to vector<8xf32>
    %45 = vector.shape_cast %44 : vector<8xf32> to vector<8x1xf32>
    %46 = vector.broadcast %45 : vector<8x1xf32> to vector<8x8xf32>
    %47 = arith.subf %43, %46 : vector<8x8xf32>
    %48 = math.exp %47 : vector<8x8xf32>
    %cst_30 = arith.constant dense<0.000000e+00> : vector<8xf32>
    %49 = vector.multi_reduction <add>, %48, %cst_30 [1] : vector<8x8xf32> to vector<8xf32>
    %50 = vector.shape_cast %49 : vector<8xf32> to vector<8x1xf32>
    %51 = tpu.reciprocal %50 {approx = true} : vector<8x1xf32> -> vector<8x1xf32>
    %52 = arith.truncf %48 : vector<8x8xf32> to vector<8x8xbf16>
    %cst_31 = arith.constant dense<0.000000e+00> : vector<8x32xf32>
    %53 = tpu.matmul %52, %27, %cst_31 {dimension_numbers = #tpu.dot_dimension_numbers<[1], [0], [0], [1], [0, 0, 1, 1], [], []>} : vector<8x8xbf16>, vector<8x32xbf16>, vector<8x32xf32> -> vector<8x32xf32>
    %54 = vector.broadcast %51 : vector<8x1xf32> to vector<8x32xf32>
    %55 = arith.mulf %53, %54 : vector<8x32xf32>
    %56 = arith.addf %19, %55 : vector<8x32xf32>
    %c0_32 = arith.constant 0 : index
    %c0_33 = arith.constant 0 : index
    %57 = vector.load %arg8[%c0_32, %c0_33] : memref<64x128xbf16, #tpu.memory_space<vmem>>, vector<64x128xbf16>
    %58 = vector.extract_strided_slice %57 {offsets = [0, 0], sizes = [32, 128], strides = [1, 1]} : vector<64x128xbf16> to vector<32x128xbf16>
    %cst_34 = arith.constant dense<0.000000e+00> : vector<8x128xf32>
    %59 = tpu.matmul %15, %58, %cst_34 {dimension_numbers = #tpu.dot_dimension_numbers<[1], [0], [0], [1], [0, 0, 1, 1], [], []>} : vector<8x32xbf16>, vector<32x128xbf16>, vector<8x128xf32> -> vector<8x128xf32>
    %60 = arith.truncf %56 : vector<8x32xf32> to vector<8x32xbf16>
    %61 = vector.extract_strided_slice %57 {offsets = [32, 0], sizes = [32, 128], strides = [1, 1]} : vector<64x128xbf16> to vector<32x128xbf16>
    %cst_35 = arith.constant dense<0.000000e+00> : vector<8x128xf32>
    %62 = tpu.matmul %60, %61, %cst_35 {dimension_numbers = #tpu.dot_dimension_numbers<[1], [0], [0], [1], [0, 0, 1, 1], [], []>} : vector<8x32xbf16>, vector<32x128xbf16>, vector<8x128xf32> -> vector<8x128xf32>
    %63 = arith.addf %59, %62 : vector<8x128xf32>
    %c0_36 = arith.constant 0 : index
    %c0_37 = arith.constant 0 : index
    %64 = vector.load %arg10[%c0_36, %c0_37] : memref<1x128xf32, #tpu.memory_space<vmem>>, vector<1x128xf32>
    %65 = vector.broadcast %64 : vector<1x128xf32> to vector<8x128xf32>
    %66 = arith.addf %63, %65 : vector<8x128xf32>
    %67 = vector.extract_strided_slice %66 {offsets = [0, 0], sizes = [8, 64], strides = [1, 1]} : vector<8x128xf32> to vector<8x64xf32>
    %68 = vector.shape_cast %67 : vector<8x64xf32> to vector<1x8x64xf32>
    %69 = vector.extract_strided_slice %66 {offsets = [0, 64], sizes = [8, 64], strides = [1, 1]} : vector<8x128xf32> to vector<8x64xf32>
    %70 = vector.shape_cast %69 : vector<8x64xf32> to vector<1x8x64xf32>
    %71 = vector.extract_strided_slice %68 {offsets = [0, 0, 0], sizes = [1, 1, 64], strides = [1, 1, 1]} : vector<1x8x64xf32> to vector<1x1x64xf32>
    %72 = vector.shape_cast %71 : vector<1x1x64xf32> to vector<1x64xf32>
    %73 = vector.extract_strided_slice %68 {offsets = [0, 1, 0], sizes = [1, 1, 64], strides = [1, 1, 1]} : vector<1x8x64xf32> to vector<1x1x64xf32>
    %74 = vector.shape_cast %73 : vector<1x1x64xf32> to vector<1x64xf32>
    %75 = vector.extract_strided_slice %68 {offsets = [0, 2, 0], sizes = [1, 1, 64], strides = [1, 1, 1]} : vector<1x8x64xf32> to vector<1x1x64xf32>
    %76 = vector.shape_cast %75 : vector<1x1x64xf32> to vector<1x64xf32>
    %77 = vector.extract_strided_slice %68 {offsets = [0, 3, 0], sizes = [1, 1, 64], strides = [1, 1, 1]} : vector<1x8x64xf32> to vector<1x1x64xf32>
    %78 = vector.shape_cast %77 : vector<1x1x64xf32> to vector<1x64xf32>
    %79 = vector.extract_strided_slice %68 {offsets = [0, 4, 0], sizes = [1, 1, 64], strides = [1, 1, 1]} : vector<1x8x64xf32> to vector<1x1x64xf32>
    %80 = vector.shape_cast %79 : vector<1x1x64xf32> to vector<1x64xf32>
    %81 = vector.extract_strided_slice %68 {offsets = [0, 5, 0], sizes = [1, 1, 64], strides = [1, 1, 1]} : vector<1x8x64xf32> to vector<1x1x64xf32>
    %82 = vector.shape_cast %81 : vector<1x1x64xf32> to vector<1x64xf32>
    %83 = vector.extract_strided_slice %68 {offsets = [0, 6, 0], sizes = [1, 1, 64], strides = [1, 1, 1]} : vector<1x8x64xf32> to vector<1x1x64xf32>
    %84 = vector.shape_cast %83 : vector<1x1x64xf32> to vector<1x64xf32>
    %85 = vector.extract_strided_slice %68 {offsets = [0, 7, 0], sizes = [1, 1, 64], strides = [1, 1, 1]} : vector<1x8x64xf32> to vector<1x1x64xf32>
    %86 = vector.shape_cast %85 : vector<1x1x64xf32> to vector<1x64xf32>
    %87 = vector.extract_strided_slice %70 {offsets = [0, 0, 0], sizes = [1, 1, 64], strides = [1, 1, 1]} : vector<1x8x64xf32> to vector<1x1x64xf32>
    %88 = vector.shape_cast %87 : vector<1x1x64xf32> to vector<1x64xf32>
    %89 = vector.extract_strided_slice %70 {offsets = [0, 1, 0], sizes = [1, 1, 64], strides = [1, 1, 1]} : vector<1x8x64xf32> to vector<1x1x64xf32>
    %90 = vector.shape_cast %89 : vector<1x1x64xf32> to vector<1x64xf32>
    %91 = vector.extract_strided_slice %70 {offsets = [0, 2, 0], sizes = [1, 1, 64], strides = [1, 1, 1]} : vector<1x8x64xf32> to vector<1x1x64xf32>
    %92 = vector.shape_cast %91 : vector<1x1x64xf32> to vector<1x64xf32>
    %93 = vector.extract_strided_slice %70 {offsets = [0, 3, 0], sizes = [1, 1, 64], strides = [1, 1, 1]} : vector<1x8x64xf32> to vector<1x1x64xf32>
    %94 = vector.shape_cast %93 : vector<1x1x64xf32> to vector<1x64xf32>
    %95 = vector.extract_strided_slice %70 {offsets = [0, 4, 0], sizes = [1, 1, 64], strides = [1, 1, 1]} : vector<1x8x64xf32> to vector<1x1x64xf32>
    %96 = vector.shape_cast %95 : vector<1x1x64xf32> to vector<1x64xf32>
    %97 = vector.extract_strided_slice %70 {offsets = [0, 5, 0], sizes = [1, 1, 64], strides = [1, 1, 1]} : vector<1x8x64xf32> to vector<1x1x64xf32>
    %98 = vector.shape_cast %97 : vector<1x1x64xf32> to vector<1x64xf32>
    %99 = vector.extract_strided_slice %70 {offsets = [0, 6, 0], sizes = [1, 1, 64], strides = [1, 1, 1]} : vector<1x8x64xf32> to vector<1x1x64xf32>
    %100 = vector.shape_cast %99 : vector<1x1x64xf32> to vector<1x64xf32>
    %101 = vector.extract_strided_slice %70 {offsets = [0, 7, 0], sizes = [1, 1, 64], strides = [1, 1, 1]} : vector<1x8x64xf32> to vector<1x1x64xf32>
    %102 = vector.shape_cast %101 : vector<1x1x64xf32> to vector<1x64xf32>
    %cst_38 = arith.constant 0.000000e+00 : f32
    %103 = vector.broadcast %cst_38 : f32 to vector<1x16xf32>
    %cst_39 = arith.constant 0.000000e+00 : f32
    %104 = vector.broadcast %cst_39 : f32 to vector<1x16xf32>
    %cst_40 = arith.constant 0.000000e+00 : f32
    %105 = vector.broadcast %cst_40 : f32 to vector<1x16xf32>
    %cst_41 = arith.constant 0.000000e+00 : f32
    %106 = vector.broadcast %cst_41 : f32 to vector<1x16xf32>
    %107 = arith.truncf %103 : vector<1x16xf32> to vector<1x16xbf16>
    %cst_42 = arith.constant dense<0.000000e+00> : vector<1x64xf32>
    %108 = tpu.matmul %107, %5, %cst_42 {dimension_numbers = #tpu.dot_dimension_numbers<[1], [0], [0], [1], [0, 0, 1, 1], [], []>} : vector<1x16xbf16>, vector<16x64xbf16>, vector<1x64xf32> -> vector<1x64xf32>
    %109 = arith.addf %72, %108 : vector<1x64xf32>
    %110 = arith.truncf %105 : vector<1x16xf32> to vector<1x16xbf16>
    %cst_43 = arith.constant dense<0.000000e+00> : vector<1x64xf32>
    %111 = tpu.matmul %110, %7, %cst_43 {dimension_numbers = #tpu.dot_dimension_numbers<[1], [0], [0], [1], [0, 0, 1, 1], [], []>} : vector<1x16xbf16>, vector<16x64xbf16>, vector<1x64xf32> -> vector<1x64xf32>
    %112 = arith.addf %102, %111 : vector<1x64xf32>
    %113 = vector.extract_strided_slice %109 {offsets = [0, 0], sizes = [1, 48], strides = [1, 1]} : vector<1x64xf32> to vector<1x48xf32>
    %114 = arith.negf %113 : vector<1x48xf32>
    %115 = math.exp %114 : vector<1x48xf32>
    %cst_44 = arith.constant 1.000000e+00 : f32
    %116 = vector.broadcast %cst_44 : f32 to vector<1x48xf32>
    %117 = arith.addf %116, %115 : vector<1x48xf32>
    %118 = arith.divf %116, %117 : vector<1x48xf32>
    %119 = vector.extract_strided_slice %109 {offsets = [0, 48], sizes = [1, 16], strides = [1, 1]} : vector<1x64xf32> to vector<1x16xf32>
    %120 = math.tanh %119 : vector<1x16xf32>
    %121 = vector.extract_strided_slice %118 {offsets = [0, 16], sizes = [1, 16], strides = [1, 1]} : vector<1x48xf32> to vector<1x16xf32>
    %122 = arith.mulf %121, %104 : vector<1x16xf32>
    %123 = vector.extract_strided_slice %118 {offsets = [0, 0], sizes = [1, 16], strides = [1, 1]} : vector<1x48xf32> to vector<1x16xf32>
    %124 = arith.mulf %123, %120 : vector<1x16xf32>
    %125 = arith.addf %122, %124 : vector<1x16xf32>
    %126 = vector.extract_strided_slice %118 {offsets = [0, 32], sizes = [1, 16], strides = [1, 1]} : vector<1x48xf32> to vector<1x16xf32>
    %127 = math.tanh %125 : vector<1x16xf32>
    %128 = arith.mulf %126, %127 : vector<1x16xf32>
    %129 = vector.extract_strided_slice %112 {offsets = [0, 0], sizes = [1, 48], strides = [1, 1]} : vector<1x64xf32> to vector<1x48xf32>
    %130 = arith.negf %129 : vector<1x48xf32>
    %131 = math.exp %130 : vector<1x48xf32>
    %cst_45 = arith.constant 1.000000e+00 : f32
    %132 = vector.broadcast %cst_45 : f32 to vector<1x48xf32>
    %133 = arith.addf %132, %131 : vector<1x48xf32>
    %134 = arith.divf %132, %133 : vector<1x48xf32>
    %135 = vector.extract_strided_slice %112 {offsets = [0, 48], sizes = [1, 16], strides = [1, 1]} : vector<1x64xf32> to vector<1x16xf32>
    %136 = math.tanh %135 : vector<1x16xf32>
    %137 = vector.extract_strided_slice %134 {offsets = [0, 16], sizes = [1, 16], strides = [1, 1]} : vector<1x48xf32> to vector<1x16xf32>
    %138 = arith.mulf %137, %106 : vector<1x16xf32>
    %139 = vector.extract_strided_slice %134 {offsets = [0, 0], sizes = [1, 16], strides = [1, 1]} : vector<1x48xf32> to vector<1x16xf32>
    %140 = arith.mulf %139, %136 : vector<1x16xf32>
    %141 = arith.addf %138, %140 : vector<1x16xf32>
    %142 = vector.extract_strided_slice %134 {offsets = [0, 32], sizes = [1, 16], strides = [1, 1]} : vector<1x48xf32> to vector<1x16xf32>
    %143 = math.tanh %141 : vector<1x16xf32>
    %144 = arith.mulf %142, %143 : vector<1x16xf32>
    %145 = vector.shape_cast %128 : vector<1x16xf32> to vector<1x1x16xf32>
    %c0_46 = arith.constant 0 : index
    %c0_47 = arith.constant 0 : index
    %c0_48 = arith.constant 0 : index
    %146 = vector.load %arg13[%c0_46, %c0_47, %c0_48] : memref<1x1x128xf32, #tpu.memory_space<vmem>>, vector<1x1x16xf32>
    tpu.vector_store %arg13[%c0_46, %c0_47, %c0_48], %145 {strides = array<i32>} : memref<1x1x128xf32, #tpu.memory_space<vmem>>, vector<1x1x16xf32>,
    %147 = vector.shape_cast %144 : vector<1x16xf32> to vector<1x1x16xf32>
    %c0_49 = arith.constant 0 : index
    %c0_50 = arith.constant 0 : index
    %c112 = arith.constant 112 : index
    %148 = vector.load %arg14[%c0_49, %c0_50, %c112] : memref<1x1x128xf32, #tpu.memory_space<vmem>>, vector<1x1x16xf32>
    tpu.vector_store %arg14[%c0_49, %c0_50, %c112], %147 {strides = array<i32>} : memref<1x1x128xf32, #tpu.memory_space<vmem>>, vector<1x1x16xf32>,
    %149 = arith.truncf %128 : vector<1x16xf32> to vector<1x16xbf16>
    %cst_51 = arith.constant dense<0.000000e+00> : vector<1x64xf32>
    %150 = tpu.matmul %149, %5, %cst_51 {dimension_numbers = #tpu.dot_dimension_numbers<[1], [0], [0], [1], [0, 0, 1, 1], [], []>} : vector<1x16xbf16>, vector<16x64xbf16>, vector<1x64xf32> -> vector<1x64xf32>
    %151 = arith.addf %74, %150 : vector<1x64xf32>
    %152 = arith.truncf %144 : vector<1x16xf32> to vector<1x16xbf16>
    %cst_52 = arith.constant dense<0.000000e+00> : vector<1x64xf32>
    %153 = tpu.matmul %152, %7, %cst_52 {dimension_numbers = #tpu.dot_dimension_numbers<[1], [0], [0], [1], [0, 0, 1, 1], [], []>} : vector<1x16xbf16>, vector<16x64xbf16>, vector<1x64xf32> -> vector<1x64xf32>
    %154 = arith.addf %100, %153 : vector<1x64xf32>
    %155 = vector.extract_strided_slice %151 {offsets = [0, 0], sizes = [1, 48], strides = [1, 1]} : vector<1x64xf32> to vector<1x48xf32>
    %156 = arith.negf %155 : vector<1x48xf32>
    %157 = math.exp %156 : vector<1x48xf32>
    %cst_53 = arith.constant 1.000000e+00 : f32
    %158 = vector.broadcast %cst_53 : f32 to vector<1x48xf32>
    %159 = arith.addf %158, %157 : vector<1x48xf32>
    %160 = arith.divf %158, %159 : vector<1x48xf32>
    %161 = vector.extract_strided_slice %151 {offsets = [0, 48], sizes = [1, 16], strides = [1, 1]} : vector<1x64xf32> to vector<1x16xf32>
    %162 = math.tanh %161 : vector<1x16xf32>
    %163 = vector.extract_strided_slice %160 {offsets = [0, 16], sizes = [1, 16], strides = [1, 1]} : vector<1x48xf32> to vector<1x16xf32>
    %164 = arith.mulf %163, %125 : vector<1x16xf32>
    %165 = vector.extract_strided_slice %160 {offsets = [0, 0], sizes = [1, 16], strides = [1, 1]} : vector<1x48xf32> to vector<1x16xf32>
    %166 = arith.mulf %165, %162 : vector<1x16xf32>
    %167 = arith.addf %164, %166 : vector<1x16xf32>
    %168 = vector.extract_strided_slice %160 {offsets = [0, 32], sizes = [1, 16], strides = [1, 1]} : vector<1x48xf32> to vector<1x16xf32>
    %169 = math.tanh %167 : vector<1x16xf32>
    %170 = arith.mulf %168, %169 : vector<1x16xf32>
    %171 = vector.extract_strided_slice %154 {offsets = [0, 0], sizes = [1, 48], strides = [1, 1]} : vector<1x64xf32> to vector<1x48xf32>
    %172 = arith.negf %171 : vector<1x48xf32>
    %173 = math.exp %172 : vector<1x48xf32>
    %cst_54 = arith.constant 1.000000e+00 : f32
    %174 = vector.broadcast %cst_54 : f32 to vector<1x48xf32>
    %175 = arith.addf %174, %173 : vector<1x48xf32>
    %176 = arith.divf %174, %175 : vector<1x48xf32>
    %177 = vector.extract_strided_slice %154 {offsets = [0, 48], sizes = [1, 16], strides = [1, 1]} : vector<1x64xf32> to vector<1x16xf32>
    %178 = math.tanh %177 : vector<1x16xf32>
    %179 = vector.extract_strided_slice %176 {offsets = [0, 16], sizes = [1, 16], strides = [1, 1]} : vector<1x48xf32> to vector<1x16xf32>
    %180 = arith.mulf %179, %141 : vector<1x16xf32>
    %181 = vector.extract_strided_slice %176 {offsets = [0, 0], sizes = [1, 16], strides = [1, 1]} : vector<1x48xf32> to vector<1x16xf32>
    %182 = arith.mulf %181, %178 : vector<1x16xf32>
    %183 = arith.addf %180, %182 : vector<1x16xf32>
    %184 = vector.extract_strided_slice %176 {offsets = [0, 32], sizes = [1, 16], strides = [1, 1]} : vector<1x48xf32> to vector<1x16xf32>
    %185 = math.tanh %183 : vector<1x16xf32>
    %186 = arith.mulf %184, %185 : vector<1x16xf32>
    %187 = vector.shape_cast %170 : vector<1x16xf32> to vector<1x1x16xf32>
    %c0_55 = arith.constant 0 : index
    %c0_56 = arith.constant 0 : index
    %c16 = arith.constant 16 : index
    %188 = vector.load %arg13[%c0_55, %c0_56, %c16] : memref<1x1x128xf32, #tpu.memory_space<vmem>>, vector<1x1x16xf32>
    tpu.vector_store %arg13[%c0_55, %c0_56, %c16], %187 {strides = array<i32>} : memref<1x1x128xf32, #tpu.memory_space<vmem>>, vector<1x1x16xf32>,
    %189 = vector.shape_cast %186 : vector<1x16xf32> to vector<1x1x16xf32>
    %c0_57 = arith.constant 0 : index
    %c0_58 = arith.constant 0 : index
    %c96 = arith.constant 96 : index
    %190 = vector.load %arg14[%c0_57, %c0_58, %c96] : memref<1x1x128xf32, #tpu.memory_space<vmem>>, vector<1x1x16xf32>
    tpu.vector_store %arg14[%c0_57, %c0_58, %c96], %189 {strides = array<i32>} : memref<1x1x128xf32, #tpu.memory_space<vmem>>, vector<1x1x16xf32>,
    %191 = arith.maximumf %128, %170 : vector<1x16xf32>
    %192 = arith.maximumf %144, %186 : vector<1x16xf32>
    %193 = arith.truncf %170 : vector<1x16xf32> to vector<1x16xbf16>
    %cst_59 = arith.constant dense<0.000000e+00> : vector<1x64xf32>
    %194 = tpu.matmul %193, %5, %cst_59 {dimension_numbers = #tpu.dot_dimension_numbers<[1], [0], [0], [1], [0, 0, 1, 1], [], []>} : vector<1x16xbf16>, vector<16x64xbf16>, vector<1x64xf32> -> vector<1x64xf32>
    %195 = arith.addf %76, %194 : vector<1x64xf32>
    %196 = arith.truncf %186 : vector<1x16xf32> to vector<1x16xbf16>
    %cst_60 = arith.constant dense<0.000000e+00> : vector<1x64xf32>
    %197 = tpu.matmul %196, %7, %cst_60 {dimension_numbers = #tpu.dot_dimension_numbers<[1], [0], [0], [1], [0, 0, 1, 1], [], []>} : vector<1x16xbf16>, vector<16x64xbf16>, vector<1x64xf32> -> vector<1x64xf32>
    %198 = arith.addf %98, %197 : vector<1x64xf32>
    %199 = vector.extract_strided_slice %195 {offsets = [0, 0], sizes = [1, 48], strides = [1, 1]} : vector<1x64xf32> to vector<1x48xf32>
    %200 = arith.negf %199 : vector<1x48xf32>
    %201 = math.exp %200 : vector<1x48xf32>
    %cst_61 = arith.constant 1.000000e+00 : f32
    %202 = vector.broadcast %cst_61 : f32 to vector<1x48xf32>
    %203 = arith.addf %202, %201 : vector<1x48xf32>
    %204 = arith.divf %202, %203 : vector<1x48xf32>
    %205 = vector.extract_strided_slice %195 {offsets = [0, 48], sizes = [1, 16], strides = [1, 1]} : vector<1x64xf32> to vector<1x16xf32>
    %206 = math.tanh %205 : vector<1x16xf32>
    %207 = vector.extract_strided_slice %204 {offsets = [0, 16], sizes = [1, 16], strides = [1, 1]} : vector<1x48xf32> to vector<1x16xf32>
    %208 = arith.mulf %207, %167 : vector<1x16xf32>
    %209 = vector.extract_strided_slice %204 {offsets = [0, 0], sizes = [1, 16], strides = [1, 1]} : vector<1x48xf32> to vector<1x16xf32>
    %210 = arith.mulf %209, %206 : vector<1x16xf32>
    %211 = arith.addf %208, %210 : vector<1x16xf32>
    %212 = vector.extract_strided_slice %204 {offsets = [0, 32], sizes = [1, 16], strides = [1, 1]} : vector<1x48xf32> to vector<1x16xf32>
    %213 = math.tanh %211 : vector<1x16xf32>
    %214 = arith.mulf %212, %213 : vector<1x16xf32>
    %215 = vector.extract_strided_slice %198 {offsets = [0, 0], sizes = [1, 48], strides = [1, 1]} : vector<1x64xf32> to vector<1x48xf32>
    %216 = arith.negf %215 : vector<1x48xf32>
    %217 = math.exp %216 : vector<1x48xf32>
    %cst_62 = arith.constant 1.000000e+00 : f32
    %218 = vector.broadcast %cst_62 : f32 to vector<1x48xf32>
    %219 = arith.addf %218, %217 : vector<1x48xf32>
    %220 = arith.divf %218, %219 : vector<1x48xf32>
    %221 = vector.extract_strided_slice %198 {offsets = [0, 48], sizes = [1, 16], strides = [1, 1]} : vector<1x64xf32> to vector<1x16xf32>
    %222 = math.tanh %221 : vector<1x16xf32>
    %223 = vector.extract_strided_slice %220 {offsets = [0, 16], sizes = [1, 16], strides = [1, 1]} : vector<1x48xf32> to vector<1x16xf32>
    %224 = arith.mulf %223, %183 : vector<1x16xf32>
    %225 = vector.extract_strided_slice %220 {offsets = [0, 0], sizes = [1, 16], strides = [1, 1]} : vector<1x48xf32> to vector<1x16xf32>
    %226 = arith.mulf %225, %222 : vector<1x16xf32>
    %227 = arith.addf %224, %226 : vector<1x16xf32>
    %228 = vector.extract_strided_slice %220 {offsets = [0, 32], sizes = [1, 16], strides = [1, 1]} : vector<1x48xf32> to vector<1x16xf32>
    %229 = math.tanh %227 : vector<1x16xf32>
    %230 = arith.mulf %228, %229 : vector<1x16xf32>
    %231 = vector.shape_cast %214 : vector<1x16xf32> to vector<1x1x16xf32>
    %c0_63 = arith.constant 0 : index
    %c0_64 = arith.constant 0 : index
    %c32 = arith.constant 32 : index
    %232 = vector.load %arg13[%c0_63, %c0_64, %c32] : memref<1x1x128xf32, #tpu.memory_space<vmem>>, vector<1x1x16xf32>
    tpu.vector_store %arg13[%c0_63, %c0_64, %c32], %231 {strides = array<i32>} : memref<1x1x128xf32, #tpu.memory_space<vmem>>, vector<1x1x16xf32>,
    %233 = vector.shape_cast %230 : vector<1x16xf32> to vector<1x1x16xf32>
    %c0_65 = arith.constant 0 : index
    %c0_66 = arith.constant 0 : index
    %c80 = arith.constant 80 : index
    %234 = vector.load %arg14[%c0_65, %c0_66, %c80] : memref<1x1x128xf32, #tpu.memory_space<vmem>>, vector<1x1x16xf32>
    tpu.vector_store %arg14[%c0_65, %c0_66, %c80], %233 {strides = array<i32>} : memref<1x1x128xf32, #tpu.memory_space<vmem>>, vector<1x1x16xf32>,
    %235 = arith.maximumf %191, %214 : vector<1x16xf32>
    %236 = arith.maximumf %192, %230 : vector<1x16xf32>
    %237 = arith.truncf %214 : vector<1x16xf32> to vector<1x16xbf16>
    %cst_67 = arith.constant dense<0.000000e+00> : vector<1x64xf32>
    %238 = tpu.matmul %237, %5, %cst_67 {dimension_numbers = #tpu.dot_dimension_numbers<[1], [0], [0], [1], [0, 0, 1, 1], [], []>} : vector<1x16xbf16>, vector<16x64xbf16>, vector<1x64xf32> -> vector<1x64xf32>
    %239 = arith.addf %78, %238 : vector<1x64xf32>
    %240 = arith.truncf %230 : vector<1x16xf32> to vector<1x16xbf16>
    %cst_68 = arith.constant dense<0.000000e+00> : vector<1x64xf32>
    %241 = tpu.matmul %240, %7, %cst_68 {dimension_numbers = #tpu.dot_dimension_numbers<[1], [0], [0], [1], [0, 0, 1, 1], [], []>} : vector<1x16xbf16>, vector<16x64xbf16>, vector<1x64xf32> -> vector<1x64xf32>
    %242 = arith.addf %96, %241 : vector<1x64xf32>
    %243 = vector.extract_strided_slice %239 {offsets = [0, 0], sizes = [1, 48], strides = [1, 1]} : vector<1x64xf32> to vector<1x48xf32>
    %244 = arith.negf %243 : vector<1x48xf32>
    %245 = math.exp %244 : vector<1x48xf32>
    %cst_69 = arith.constant 1.000000e+00 : f32
    %246 = vector.broadcast %cst_69 : f32 to vector<1x48xf32>
    %247 = arith.addf %246, %245 : vector<1x48xf32>
    %248 = arith.divf %246, %247 : vector<1x48xf32>
    %249 = vector.extract_strided_slice %239 {offsets = [0, 48], sizes = [1, 16], strides = [1, 1]} : vector<1x64xf32> to vector<1x16xf32>
    %250 = math.tanh %249 : vector<1x16xf32>
    %251 = vector.extract_strided_slice %248 {offsets = [0, 16], sizes = [1, 16], strides = [1, 1]} : vector<1x48xf32> to vector<1x16xf32>
    %252 = arith.mulf %251, %211 : vector<1x16xf32>
    %253 = vector.extract_strided_slice %248 {offsets = [0, 0], sizes = [1, 16], strides = [1, 1]} : vector<1x48xf32> to vector<1x16xf32>
    %254 = arith.mulf %253, %250 : vector<1x16xf32>
    %255 = arith.addf %252, %254 : vector<1x16xf32>
    %256 = vector.extract_strided_slice %248 {offsets = [0, 32], sizes = [1, 16], strides = [1, 1]} : vector<1x48xf32> to vector<1x16xf32>
    %257 = math.tanh %255 : vector<1x16xf32>
    %258 = arith.mulf %256, %257 : vector<1x16xf32>
    %259 = vector.extract_strided_slice %242 {offsets = [0, 0], sizes = [1, 48], strides = [1, 1]} : vector<1x64xf32> to vector<1x48xf32>
    %260 = arith.negf %259 : vector<1x48xf32>
    %261 = math.exp %260 : vector<1x48xf32>
    %cst_70 = arith.constant 1.000000e+00 : f32
    %262 = vector.broadcast %cst_70 : f32 to vector<1x48xf32>
    %263 = arith.addf %262, %261 : vector<1x48xf32>
    %264 = arith.divf %262, %263 : vector<1x48xf32>
    %265 = vector.extract_strided_slice %242 {offsets = [0, 48], sizes = [1, 16], strides = [1, 1]} : vector<1x64xf32> to vector<1x16xf32>
    %266 = math.tanh %265 : vector<1x16xf32>
    %267 = vector.extract_strided_slice %264 {offsets = [0, 16], sizes = [1, 16], strides = [1, 1]} : vector<1x48xf32> to vector<1x16xf32>
    %268 = arith.mulf %267, %227 : vector<1x16xf32>
    %269 = vector.extract_strided_slice %264 {offsets = [0, 0], sizes = [1, 16], strides = [1, 1]} : vector<1x48xf32> to vector<1x16xf32>
    %270 = arith.mulf %269, %266 : vector<1x16xf32>
    %271 = arith.addf %268, %270 : vector<1x16xf32>
    %272 = vector.extract_strided_slice %264 {offsets = [0, 32], sizes = [1, 16], strides = [1, 1]} : vector<1x48xf32> to vector<1x16xf32>
    %273 = math.tanh %271 : vector<1x16xf32>
    %274 = arith.mulf %272, %273 : vector<1x16xf32>
    %275 = vector.shape_cast %258 : vector<1x16xf32> to vector<1x1x16xf32>
    %c0_71 = arith.constant 0 : index
    %c0_72 = arith.constant 0 : index
    %c48 = arith.constant 48 : index
    %276 = vector.load %arg13[%c0_71, %c0_72, %c48] : memref<1x1x128xf32, #tpu.memory_space<vmem>>, vector<1x1x16xf32>
    tpu.vector_store %arg13[%c0_71, %c0_72, %c48], %275 {strides = array<i32>} : memref<1x1x128xf32, #tpu.memory_space<vmem>>, vector<1x1x16xf32>,
    %277 = vector.shape_cast %274 : vector<1x16xf32> to vector<1x1x16xf32>
    %c0_73 = arith.constant 0 : index
    %c0_74 = arith.constant 0 : index
    %c64 = arith.constant 64 : index
    %278 = vector.load %arg14[%c0_73, %c0_74, %c64] : memref<1x1x128xf32, #tpu.memory_space<vmem>>, vector<1x1x16xf32>
    tpu.vector_store %arg14[%c0_73, %c0_74, %c64], %277 {strides = array<i32>} : memref<1x1x128xf32, #tpu.memory_space<vmem>>, vector<1x1x16xf32>,
    %279 = arith.maximumf %235, %258 : vector<1x16xf32>
    %280 = arith.maximumf %236, %274 : vector<1x16xf32>
    %281 = arith.truncf %258 : vector<1x16xf32> to vector<1x16xbf16>
    %cst_75 = arith.constant dense<0.000000e+00> : vector<1x64xf32>
    %282 = tpu.matmul %281, %5, %cst_75 {dimension_numbers = #tpu.dot_dimension_numbers<[1], [0], [0], [1], [0, 0, 1, 1], [], []>} : vector<1x16xbf16>, vector<16x64xbf16>, vector<1x64xf32> -> vector<1x64xf32>
    %283 = arith.addf %80, %282 : vector<1x64xf32>
    %284 = arith.truncf %274 : vector<1x16xf32> to vector<1x16xbf16>
    %cst_76 = arith.constant dense<0.000000e+00> : vector<1x64xf32>
    %285 = tpu.matmul %284, %7, %cst_76 {dimension_numbers = #tpu.dot_dimension_numbers<[1], [0], [0], [1], [0, 0, 1, 1], [], []>} : vector<1x16xbf16>, vector<16x64xbf16>, vector<1x64xf32> -> vector<1x64xf32>
    %286 = arith.addf %94, %285 : vector<1x64xf32>
    %287 = vector.extract_strided_slice %283 {offsets = [0, 0], sizes = [1, 48], strides = [1, 1]} : vector<1x64xf32> to vector<1x48xf32>
    %288 = arith.negf %287 : vector<1x48xf32>
    %289 = math.exp %288 : vector<1x48xf32>
    %cst_77 = arith.constant 1.000000e+00 : f32
    %290 = vector.broadcast %cst_77 : f32 to vector<1x48xf32>
    %291 = arith.addf %290, %289 : vector<1x48xf32>
    %292 = arith.divf %290, %291 : vector<1x48xf32>
    %293 = vector.extract_strided_slice %283 {offsets = [0, 48], sizes = [1, 16], strides = [1, 1]} : vector<1x64xf32> to vector<1x16xf32>
    %294 = math.tanh %293 : vector<1x16xf32>
    %295 = vector.extract_strided_slice %292 {offsets = [0, 16], sizes = [1, 16], strides = [1, 1]} : vector<1x48xf32> to vector<1x16xf32>
    %296 = arith.mulf %295, %255 : vector<1x16xf32>
    %297 = vector.extract_strided_slice %292 {offsets = [0, 0], sizes = [1, 16], strides = [1, 1]} : vector<1x48xf32> to vector<1x16xf32>
    %298 = arith.mulf %297, %294 : vector<1x16xf32>
    %299 = arith.addf %296, %298 : vector<1x16xf32>
    %300 = vector.extract_strided_slice %292 {offsets = [0, 32], sizes = [1, 16], strides = [1, 1]} : vector<1x48xf32> to vector<1x16xf32>
    %301 = math.tanh %299 : vector<1x16xf32>
    %302 = arith.mulf %300, %301 : vector<1x16xf32>
    %303 = vector.extract_strided_slice %286 {offsets = [0, 0], sizes = [1, 48], strides = [1, 1]} : vector<1x64xf32> to vector<1x48xf32>
    %304 = arith.negf %303 : vector<1x48xf32>
    %305 = math.exp %304 : vector<1x48xf32>
    %cst_78 = arith.constant 1.000000e+00 : f32
    %306 = vector.broadcast %cst_78 : f32 to vector<1x48xf32>
    %307 = arith.addf %306, %305 : vector<1x48xf32>
    %308 = arith.divf %306, %307 : vector<1x48xf32>
    %309 = vector.extract_strided_slice %286 {offsets = [0, 48], sizes = [1, 16], strides = [1, 1]} : vector<1x64xf32> to vector<1x16xf32>
    %310 = math.tanh %309 : vector<1x16xf32>
    %311 = vector.extract_strided_slice %308 {offsets = [0, 16], sizes = [1, 16], strides = [1, 1]} : vector<1x48xf32> to vector<1x16xf32>
    %312 = arith.mulf %311, %271 : vector<1x16xf32>
    %313 = vector.extract_strided_slice %308 {offsets = [0, 0], sizes = [1, 16], strides = [1, 1]} : vector<1x48xf32> to vector<1x16xf32>
    %314 = arith.mulf %313, %310 : vector<1x16xf32>
    %315 = arith.addf %312, %314 : vector<1x16xf32>
    %316 = vector.extract_strided_slice %308 {offsets = [0, 32], sizes = [1, 16], strides = [1, 1]} : vector<1x48xf32> to vector<1x16xf32>
    %317 = math.tanh %315 : vector<1x16xf32>
    %318 = arith.mulf %316, %317 : vector<1x16xf32>
    %319 = vector.shape_cast %302 : vector<1x16xf32> to vector<1x1x16xf32>
    %c0_79 = arith.constant 0 : index
    %c0_80 = arith.constant 0 : index
    %c64_81 = arith.constant 64 : index
    %320 = vector.load %arg13[%c0_79, %c0_80, %c64_81] : memref<1x1x128xf32, #tpu.memory_space<vmem>>, vector<1x1x16xf32>
    tpu.vector_store %arg13[%c0_79, %c0_80, %c64_81], %319 {strides = array<i32>} : memref<1x1x128xf32, #tpu.memory_space<vmem>>, vector<1x1x16xf32>,
    %321 = vector.shape_cast %318 : vector<1x16xf32> to vector<1x1x16xf32>
    %c0_82 = arith.constant 0 : index
    %c0_83 = arith.constant 0 : index
    %c48_84 = arith.constant 48 : index
    %322 = vector.load %arg14[%c0_82, %c0_83, %c48_84] : memref<1x1x128xf32, #tpu.memory_space<vmem>>, vector<1x1x16xf32>
    tpu.vector_store %arg14[%c0_82, %c0_83, %c48_84], %321 {strides = array<i32>} : memref<1x1x128xf32, #tpu.memory_space<vmem>>, vector<1x1x16xf32>,
    %323 = arith.maximumf %279, %302 : vector<1x16xf32>
    %324 = arith.maximumf %280, %318 : vector<1x16xf32>
    %325 = arith.truncf %302 : vector<1x16xf32> to vector<1x16xbf16>
    %cst_85 = arith.constant dense<0.000000e+00> : vector<1x64xf32>
    %326 = tpu.matmul %325, %5, %cst_85 {dimension_numbers = #tpu.dot_dimension_numbers<[1], [0], [0], [1], [0, 0, 1, 1], [], []>} : vector<1x16xbf16>, vector<16x64xbf16>, vector<1x64xf32> -> vector<1x64xf32>
    %327 = arith.addf %82, %326 : vector<1x64xf32>
    %328 = arith.truncf %318 : vector<1x16xf32> to vector<1x16xbf16>
    %cst_86 = arith.constant dense<0.000000e+00> : vector<1x64xf32>
    %329 = tpu.matmul %328, %7, %cst_86 {dimension_numbers = #tpu.dot_dimension_numbers<[1], [0], [0], [1], [0, 0, 1, 1], [], []>} : vector<1x16xbf16>, vector<16x64xbf16>, vector<1x64xf32> -> vector<1x64xf32>
    %330 = arith.addf %92, %329 : vector<1x64xf32>
    %331 = vector.extract_strided_slice %327 {offsets = [0, 0], sizes = [1, 48], strides = [1, 1]} : vector<1x64xf32> to vector<1x48xf32>
    %332 = arith.negf %331 : vector<1x48xf32>
    %333 = math.exp %332 : vector<1x48xf32>
    %cst_87 = arith.constant 1.000000e+00 : f32
    %334 = vector.broadcast %cst_87 : f32 to vector<1x48xf32>
    %335 = arith.addf %334, %333 : vector<1x48xf32>
    %336 = arith.divf %334, %335 : vector<1x48xf32>
    %337 = vector.extract_strided_slice %327 {offsets = [0, 48], sizes = [1, 16], strides = [1, 1]} : vector<1x64xf32> to vector<1x16xf32>
    %338 = math.tanh %337 : vector<1x16xf32>
    %339 = vector.extract_strided_slice %336 {offsets = [0, 16], sizes = [1, 16], strides = [1, 1]} : vector<1x48xf32> to vector<1x16xf32>
    %340 = arith.mulf %339, %299 : vector<1x16xf32>
    %341 = vector.extract_strided_slice %336 {offsets = [0, 0], sizes = [1, 16], strides = [1, 1]} : vector<1x48xf32> to vector<1x16xf32>
    %342 = arith.mulf %341, %338 : vector<1x16xf32>
    %343 = arith.addf %340, %342 : vector<1x16xf32>
    %344 = vector.extract_strided_slice %336 {offsets = [0, 32], sizes = [1, 16], strides = [1, 1]} : vector<1x48xf32> to vector<1x16xf32>
    %345 = math.tanh %343 : vector<1x16xf32>
    %346 = arith.mulf %344, %345 : vector<1x16xf32>
    %347 = vector.extract_strided_slice %330 {offsets = [0, 0], sizes = [1, 48], strides = [1, 1]} : vector<1x64xf32> to vector<1x48xf32>
    %348 = arith.negf %347 : vector<1x48xf32>
    %349 = math.exp %348 : vector<1x48xf32>
    %cst_88 = arith.constant 1.000000e+00 : f32
    %350 = vector.broadcast %cst_88 : f32 to vector<1x48xf32>
    %351 = arith.addf %350, %349 : vector<1x48xf32>
    %352 = arith.divf %350, %351 : vector<1x48xf32>
    %353 = vector.extract_strided_slice %330 {offsets = [0, 48], sizes = [1, 16], strides = [1, 1]} : vector<1x64xf32> to vector<1x16xf32>
    %354 = math.tanh %353 : vector<1x16xf32>
    %355 = vector.extract_strided_slice %352 {offsets = [0, 16], sizes = [1, 16], strides = [1, 1]} : vector<1x48xf32> to vector<1x16xf32>
    %356 = arith.mulf %355, %315 : vector<1x16xf32>
    %357 = vector.extract_strided_slice %352 {offsets = [0, 0], sizes = [1, 16], strides = [1, 1]} : vector<1x48xf32> to vector<1x16xf32>
    %358 = arith.mulf %357, %354 : vector<1x16xf32>
    %359 = arith.addf %356, %358 : vector<1x16xf32>
    %360 = vector.extract_strided_slice %352 {offsets = [0, 32], sizes = [1, 16], strides = [1, 1]} : vector<1x48xf32> to vector<1x16xf32>
    %361 = math.tanh %359 : vector<1x16xf32>
    %362 = arith.mulf %360, %361 : vector<1x16xf32>
    %363 = vector.shape_cast %346 : vector<1x16xf32> to vector<1x1x16xf32>
    %c0_89 = arith.constant 0 : index
    %c0_90 = arith.constant 0 : index
    %c80_91 = arith.constant 80 : index
    %364 = vector.load %arg13[%c0_89, %c0_90, %c80_91] : memref<1x1x128xf32, #tpu.memory_space<vmem>>, vector<1x1x16xf32>
    tpu.vector_store %arg13[%c0_89, %c0_90, %c80_91], %363 {strides = array<i32>} : memref<1x1x128xf32, #tpu.memory_space<vmem>>, vector<1x1x16xf32>,
    %365 = vector.shape_cast %362 : vector<1x16xf32> to vector<1x1x16xf32>
    %c0_92 = arith.constant 0 : index
    %c0_93 = arith.constant 0 : index
    %c32_94 = arith.constant 32 : index
    %366 = vector.load %arg14[%c0_92, %c0_93, %c32_94] : memref<1x1x128xf32, #tpu.memory_space<vmem>>, vector<1x1x16xf32>
    tpu.vector_store %arg14[%c0_92, %c0_93, %c32_94], %365 {strides = array<i32>} : memref<1x1x128xf32, #tpu.memory_space<vmem>>, vector<1x1x16xf32>,
    %367 = arith.maximumf %323, %346 : vector<1x16xf32>
    %368 = arith.maximumf %324, %362 : vector<1x16xf32>
    %369 = arith.truncf %346 : vector<1x16xf32> to vector<1x16xbf16>
    %cst_95 = arith.constant dense<0.000000e+00> : vector<1x64xf32>
    %370 = tpu.matmul %369, %5, %cst_95 {dimension_numbers = #tpu.dot_dimension_numbers<[1], [0], [0], [1], [0, 0, 1, 1], [], []>} : vector<1x16xbf16>, vector<16x64xbf16>, vector<1x64xf32> -> vector<1x64xf32>
    %371 = arith.addf %84, %370 : vector<1x64xf32>
    %372 = arith.truncf %362 : vector<1x16xf32> to vector<1x16xbf16>
    %cst_96 = arith.constant dense<0.000000e+00> : vector<1x64xf32>
    %373 = tpu.matmul %372, %7, %cst_96 {dimension_numbers = #tpu.dot_dimension_numbers<[1], [0], [0], [1], [0, 0, 1, 1], [], []>} : vector<1x16xbf16>, vector<16x64xbf16>, vector<1x64xf32> -> vector<1x64xf32>
    %374 = arith.addf %90, %373 : vector<1x64xf32>
    %375 = vector.extract_strided_slice %371 {offsets = [0, 0], sizes = [1, 48], strides = [1, 1]} : vector<1x64xf32> to vector<1x48xf32>
    %376 = arith.negf %375 : vector<1x48xf32>
    %377 = math.exp %376 : vector<1x48xf32>
    %cst_97 = arith.constant 1.000000e+00 : f32
    %378 = vector.broadcast %cst_97 : f32 to vector<1x48xf32>
    %379 = arith.addf %378, %377 : vector<1x48xf32>
    %380 = arith.divf %378, %379 : vector<1x48xf32>
    %381 = vector.extract_strided_slice %371 {offsets = [0, 48], sizes = [1, 16], strides = [1, 1]} : vector<1x64xf32> to vector<1x16xf32>
    %382 = math.tanh %381 : vector<1x16xf32>
    %383 = vector.extract_strided_slice %380 {offsets = [0, 16], sizes = [1, 16], strides = [1, 1]} : vector<1x48xf32> to vector<1x16xf32>
    %384 = arith.mulf %383, %343 : vector<1x16xf32>
    %385 = vector.extract_strided_slice %380 {offsets = [0, 0], sizes = [1, 16], strides = [1, 1]} : vector<1x48xf32> to vector<1x16xf32>
    %386 = arith.mulf %385, %382 : vector<1x16xf32>
    %387 = arith.addf %384, %386 : vector<1x16xf32>
    %388 = vector.extract_strided_slice %380 {offsets = [0, 32], sizes = [1, 16], strides = [1, 1]} : vector<1x48xf32> to vector<1x16xf32>
    %389 = math.tanh %387 : vector<1x16xf32>
    %390 = arith.mulf %388, %389 : vector<1x16xf32>
    %391 = vector.extract_strided_slice %374 {offsets = [0, 0], sizes = [1, 48], strides = [1, 1]} : vector<1x64xf32> to vector<1x48xf32>
    %392 = arith.negf %391 : vector<1x48xf32>
    %393 = math.exp %392 : vector<1x48xf32>
    %cst_98 = arith.constant 1.000000e+00 : f32
    %394 = vector.broadcast %cst_98 : f32 to vector<1x48xf32>
    %395 = arith.addf %394, %393 : vector<1x48xf32>
    %396 = arith.divf %394, %395 : vector<1x48xf32>
    %397 = vector.extract_strided_slice %374 {offsets = [0, 48], sizes = [1, 16], strides = [1, 1]} : vector<1x64xf32> to vector<1x16xf32>
    %398 = math.tanh %397 : vector<1x16xf32>
    %399 = vector.extract_strided_slice %396 {offsets = [0, 16], sizes = [1, 16], strides = [1, 1]} : vector<1x48xf32> to vector<1x16xf32>
    %400 = arith.mulf %399, %359 : vector<1x16xf32>
    %401 = vector.extract_strided_slice %396 {offsets = [0, 0], sizes = [1, 16], strides = [1, 1]} : vector<1x48xf32> to vector<1x16xf32>
    %402 = arith.mulf %401, %398 : vector<1x16xf32>
    %403 = arith.addf %400, %402 : vector<1x16xf32>
    %404 = vector.extract_strided_slice %396 {offsets = [0, 32], sizes = [1, 16], strides = [1, 1]} : vector<1x48xf32> to vector<1x16xf32>
    %405 = math.tanh %403 : vector<1x16xf32>
    %406 = arith.mulf %404, %405 : vector<1x16xf32>
    %407 = vector.shape_cast %390 : vector<1x16xf32> to vector<1x1x16xf32>
    %c0_99 = arith.constant 0 : index
    %c0_100 = arith.constant 0 : index
    %c96_101 = arith.constant 96 : index
    %408 = vector.load %arg13[%c0_99, %c0_100, %c96_101] : memref<1x1x128xf32, #tpu.memory_space<vmem>>, vector<1x1x16xf32>
    tpu.vector_store %arg13[%c0_99, %c0_100, %c96_101], %407 {strides = array<i32>} : memref<1x1x128xf32, #tpu.memory_space<vmem>>, vector<1x1x16xf32>,
    %409 = vector.shape_cast %406 : vector<1x16xf32> to vector<1x1x16xf32>
    %c0_102 = arith.constant 0 : index
    %c0_103 = arith.constant 0 : index
    %c16_104 = arith.constant 16 : index
    %410 = vector.load %arg14[%c0_102, %c0_103, %c16_104] : memref<1x1x128xf32, #tpu.memory_space<vmem>>, vector<1x1x16xf32>
    tpu.vector_store %arg14[%c0_102, %c0_103, %c16_104], %409 {strides = array<i32>} : memref<1x1x128xf32, #tpu.memory_space<vmem>>, vector<1x1x16xf32>,
    %411 = arith.maximumf %367, %390 : vector<1x16xf32>
    %412 = arith.maximumf %368, %406 : vector<1x16xf32>
    %413 = arith.truncf %390 : vector<1x16xf32> to vector<1x16xbf16>
    %cst_105 = arith.constant dense<0.000000e+00> : vector<1x64xf32>
    %414 = tpu.matmul %413, %5, %cst_105 {dimension_numbers = #tpu.dot_dimension_numbers<[1], [0], [0], [1], [0, 0, 1, 1], [], []>} : vector<1x16xbf16>, vector<16x64xbf16>, vector<1x64xf32> -> vector<1x64xf32>
    %415 = arith.addf %86, %414 : vector<1x64xf32>
    %416 = arith.truncf %406 : vector<1x16xf32> to vector<1x16xbf16>
    %cst_106 = arith.constant dense<0.000000e+00> : vector<1x64xf32>
    %417 = tpu.matmul %416, %7, %cst_106 {dimension_numbers = #tpu.dot_dimension_numbers<[1], [0], [0], [1], [0, 0, 1, 1], [], []>} : vector<1x16xbf16>, vector<16x64xbf16>, vector<1x64xf32> -> vector<1x64xf32>
    %418 = arith.addf %88, %417 : vector<1x64xf32>
    %419 = vector.extract_strided_slice %415 {offsets = [0, 0], sizes = [1, 48], strides = [1, 1]} : vector<1x64xf32> to vector<1x48xf32>
    %420 = arith.negf %419 : vector<1x48xf32>
    %421 = math.exp %420 : vector<1x48xf32>
    %cst_107 = arith.constant 1.000000e+00 : f32
    %422 = vector.broadcast %cst_107 : f32 to vector<1x48xf32>
    %423 = arith.addf %422, %421 : vector<1x48xf32>
    %424 = arith.divf %422, %423 : vector<1x48xf32>
    %425 = vector.extract_strided_slice %415 {offsets = [0, 48], sizes = [1, 16], strides = [1, 1]} : vector<1x64xf32> to vector<1x16xf32>
    %426 = math.tanh %425 : vector<1x16xf32>
    %427 = vector.extract_strided_slice %424 {offsets = [0, 16], sizes = [1, 16], strides = [1, 1]} : vector<1x48xf32> to vector<1x16xf32>
    %428 = arith.mulf %427, %387 : vector<1x16xf32>
    %429 = vector.extract_strided_slice %424 {offsets = [0, 0], sizes = [1, 16], strides = [1, 1]} : vector<1x48xf32> to vector<1x16xf32>
    %430 = arith.mulf %429, %426 : vector<1x16xf32>
    %431 = arith.addf %428, %430 : vector<1x16xf32>
    %432 = vector.extract_strided_slice %424 {offsets = [0, 32], sizes = [1, 16], strides = [1, 1]} : vector<1x48xf32> to vector<1x16xf32>
    %433 = math.tanh %431 : vector<1x16xf32>
    %434 = arith.mulf %432, %433 : vector<1x16xf32>
    %435 = vector.extract_strided_slice %418 {offsets = [0, 0], sizes = [1, 48], strides = [1, 1]} : vector<1x64xf32> to vector<1x48xf32>
    %436 = arith.negf %435 : vector<1x48xf32>
    %437 = math.exp %436 : vector<1x48xf32>
    %cst_108 = arith.constant 1.000000e+00 : f32
    %438 = vector.broadcast %cst_108 : f32 to vector<1x48xf32>
    %439 = arith.addf %438, %437 : vector<1x48xf32>
    %440 = arith.divf %438, %439 : vector<1x48xf32>
    %441 = vector.extract_strided_slice %418 {offsets = [0, 48], sizes = [1, 16], strides = [1, 1]} : vector<1x64xf32> to vector<1x16xf32>
    %442 = math.tanh %441 : vector<1x16xf32>
    %443 = vector.extract_strided_slice %440 {offsets = [0, 16], sizes = [1, 16], strides = [1, 1]} : vector<1x48xf32> to vector<1x16xf32>
    %444 = arith.mulf %443, %403 : vector<1x16xf32>
    %445 = vector.extract_strided_slice %440 {offsets = [0, 0], sizes = [1, 16], strides = [1, 1]} : vector<1x48xf32> to vector<1x16xf32>
    %446 = arith.mulf %445, %442 : vector<1x16xf32>
    %447 = arith.addf %444, %446 : vector<1x16xf32>
    %448 = vector.extract_strided_slice %440 {offsets = [0, 32], sizes = [1, 16], strides = [1, 1]} : vector<1x48xf32> to vector<1x16xf32>
    %449 = math.tanh %447 : vector<1x16xf32>
    %450 = arith.mulf %448, %449 : vector<1x16xf32>
    %451 = vector.shape_cast %434 : vector<1x16xf32> to vector<1x1x16xf32>
    %c0_109 = arith.constant 0 : index
    %c0_110 = arith.constant 0 : index
    %c112_111 = arith.constant 112 : index
    %452 = vector.load %arg13[%c0_109, %c0_110, %c112_111] : memref<1x1x128xf32, #tpu.memory_space<vmem>>, vector<1x1x16xf32>
    tpu.vector_store %arg13[%c0_109, %c0_110, %c112_111], %451 {strides = array<i32>} : memref<1x1x128xf32, #tpu.memory_space<vmem>>, vector<1x1x16xf32>,
    %453 = vector.shape_cast %450 : vector<1x16xf32> to vector<1x1x16xf32>
    %c0_112 = arith.constant 0 : index
    %c0_113 = arith.constant 0 : index
    %c0_114 = arith.constant 0 : index
    %454 = vector.load %arg14[%c0_112, %c0_113, %c0_114] : memref<1x1x128xf32, #tpu.memory_space<vmem>>, vector<1x1x16xf32>
    tpu.vector_store %arg14[%c0_112, %c0_113, %c0_114], %453 {strides = array<i32>} : memref<1x1x128xf32, #tpu.memory_space<vmem>>, vector<1x1x16xf32>,
    %455 = arith.maximumf %411, %434 : vector<1x16xf32>
    %456 = arith.maximumf %412, %450 : vector<1x16xf32>
    %457 = arith.truncf %455 : vector<1x16xf32> to vector<1x16xbf16>
    %c0_115 = arith.constant 0 : index
    %c0_116 = arith.constant 0 : index
    %458 = vector.load %arg11[%c0_115, %c0_116] : memref<32x128xbf16, #tpu.memory_space<vmem>>, vector<16x128xbf16>
    %cst_117 = arith.constant dense<0.000000e+00> : vector<1x128xf32>
    %459 = tpu.matmul %457, %458, %cst_117 {dimension_numbers = #tpu.dot_dimension_numbers<[1], [0], [0], [1], [0, 0, 1, 1], [], []>} : vector<1x16xbf16>, vector<16x128xbf16>, vector<1x128xf32> -> vector<1x128xf32>
    %460 = arith.truncf %456 : vector<1x16xf32> to vector<1x16xbf16>
    %c16_118 = arith.constant 16 : index
    %c0_119 = arith.constant 0 : index
    %461 = vector.load %arg11[%c16_118, %c0_119] : memref<32x128xbf16, #tpu.memory_space<vmem>>, vector<16x128xbf16>
    %cst_120 = arith.constant dense<0.000000e+00> : vector<1x128xf32>
    %462 = tpu.matmul %460, %461, %cst_120 {dimension_numbers = #tpu.dot_dimension_numbers<[1], [0], [0], [1], [0, 0, 1, 1], [], []>} : vector<1x16xbf16>, vector<16x128xbf16>, vector<1x128xf32> -> vector<1x128xf32>
    %463 = arith.addf %459, %462 : vector<1x128xf32>
    %c0_121 = arith.constant 0 : index
    %c0_122 = arith.constant 0 : index
    %464 = vector.load %arg12[%c0_121, %c0_122] : memref<1x128xf32, #tpu.memory_space<vmem>>, vector<1x128xf32>
    %465 = arith.addf %463, %464 : vector<1x128xf32>
    %466 = vector.shape_cast %465 : vector<1x128xf32> to vector<1x1x128xf32>
    %c0_123 = arith.constant 0 : index
    %c0_124 = arith.constant 0 : index
    %c0_125 = arith.constant 0 : index
    %467 = vector.load %arg15[%c0_123, %c0_124, %c0_125] : memref<1x1x128xf32, #tpu.memory_space<vmem>>, vector<1x1x128xf32>
    tpu.vector_store %arg15[%c0_123, %c0_124, %c0_125], %466 {strides = array<i32>} : memref<1x1x128xf32, #tpu.memory_space<vmem>>, vector<1x1x128xf32>,
    return
  }
  func.func @transform_0(%arg0: i32) -> (i32, i32, i32) {
    %c0_i32 = arith.constant 0 : i32
    %c0_i32_0 = arith.constant 0 : i32
    %c0_i32_1 = arith.constant 0 : i32
    return %arg0, %c0_i32, %c0_i32_0 : i32, i32, i32
  }
  func.func @transform_1(%arg0: i32) -> (i32, i32, i32) {
    %c0_i32 = arith.constant 0 : i32
    %c0_i32_0 = arith.constant 0 : i32
    %c0_i32_1 = arith.constant 0 : i32
    return %arg0, %c0_i32, %c0_i32_0 : i32, i32, i32
  }
  func.func @transform_2(%arg0: i32) -> (i32, i32, i32) {
    %c0_i32 = arith.constant 0 : i32
    %c0_i32_0 = arith.constant 0 : i32
    %c0_i32_1 = arith.constant 0 : i32
    return %arg0, %c0_i32, %c0_i32_0 : i32, i32, i32
  }
  func.func @transform_3(%arg0: i32) -> (i32, i32) {
    %c0_i32 = arith.constant 0 : i32
    %c0_i32_0 = arith.constant 0 : i32
    %c0_i32_1 = arith.constant 0 : i32
    return %c0_i32, %c0_i32_0 : i32, i32
  }
  func.func @transform_4(%arg0: i32) -> (i32, i32) {
    %c0_i32 = arith.constant 0 : i32
    %c0_i32_0 = arith.constant 0 : i32
    %c0_i32_1 = arith.constant 0 : i32
    return %c0_i32, %c0_i32_0 : i32, i32
  }
  func.func @transform_5(%arg0: i32) -> (i32, i32) {
    %c0_i32 = arith.constant 0 : i32
    %c0_i32_0 = arith.constant 0 : i32
    %c0_i32_1 = arith.constant 0 : i32
    return %c0_i32, %c0_i32_0 : i32, i32
  }
  func.func @transform_6(%arg0: i32) -> (i32, i32) {
    %c0_i32 = arith.constant 0 : i32
    %c0_i32_0 = arith.constant 0 : i32
    %c0_i32_1 = arith.constant 0 : i32
    return %c0_i32, %c0_i32_0 : i32, i32
  }
  func.func @transform_7(%arg0: i32) -> (i32, i32) {
    %c0_i32 = arith.constant 0 : i32
    %c0_i32_0 = arith.constant 0 : i32
    %c0_i32_1 = arith.constant 0 : i32
    return %c0_i32, %c0_i32_0 : i32, i32
  }
  func.func @transform_8(%arg0: i32) -> (i32, i32, i32) {
    %c0_i32 = arith.constant 0 : i32
    %c0_i32_0 = arith.constant 0 : i32
    %c0_i32_1 = arith.constant 0 : i32
    %c0_i32_2 = arith.constant 0 : i32
    return %c0_i32, %c0_i32_0, %c0_i32_1 : i32, i32, i32
  }
  func.func @transform_9(%arg0: i32) -> (i32, i32) {
    %c0_i32 = arith.constant 0 : i32
    %c0_i32_0 = arith.constant 0 : i32
    %c0_i32_1 = arith.constant 0 : i32
    return %c0_i32, %c0_i32_0 : i32, i32
  }
  func.func @transform_10(%arg0: i32) -> (i32, i32) {
    %c0_i32 = arith.constant 0 : i32
    %c0_i32_0 = arith.constant 0 : i32
    %c0_i32_1 = arith.constant 0 : i32
    return %c0_i32, %c0_i32_0 : i32, i32
  }
  func.func @transform_11(%arg0: i32) -> (i32, i32) {
    %c0_i32 = arith.constant 0 : i32
    %c0_i32_0 = arith.constant 0 : i32
    %c0_i32_1 = arith.constant 0 : i32
    return %c0_i32, %c0_i32_0 : i32, i32
  }
  func.func @transform_12(%arg0: i32) -> (i32, i32, i32) {
    %c0_i32 = arith.constant 0 : i32
    %c0_i32_0 = arith.constant 0 : i32
    %c0_i32_1 = arith.constant 0 : i32
    return %arg0, %c0_i32, %c0_i32_0 : i32, i32, i32
  }
  func.func @transform_13(%arg0: i32) -> (i32, i32, i32) {
    %c0_i32 = arith.constant 0 : i32
    %c0_i32_0 = arith.constant 0 : i32
    %c0_i32_1 = arith.constant 0 : i32
    return %arg0, %c0_i32, %c0_i32_0 : i32, i32, i32
  }
  func.func @transform_14(%arg0: i32) -> (i32, i32, i32) {
    %c0_i32 = arith.constant 0 : i32
    %c0_i32_0 = arith.constant 0 : i32
    %c0_i32_1 = arith.constant 0 : i32
    return %arg0, %c0_i32, %c0_i32_0 : i32, i32, i32
  }
}

</mosaic_0001>

<llo_original>
// kernel: tpu_custom_call.1
$region0: #{tpu_custom_call.1}
  #allocation0 [shape = 'u32[]', space=smem, size = 0x4, offset = 0x4, fixed_abs, tag = 'smem constant byte address 0x4 - core index']
  #allocation1 [shape = 'u32[144,128]{1,0:T(1,128)}', space=vmem, size = 0x12000, scoped, tag = 'internal scratch']
  %s0 = inlined_call_operand.hbm [shape: f32[8,128], index: 0, kind: input, shape index: {}]
  %s1 = inlined_call_operand.hbm [shape: f32[8,128], index: 1, kind: output, shape index: {}]
  %s2 = sld [smem:[#allocation0]]
  $region41: #{tpu_custom_call.1} parent=0
    _
  %s4 = ssub.s32 1, %s2
  %s5 = scalar_select 0, %s4, %s2
  $region1: #{tpu_custom_call.1} parent=0
    #allocation2 [shape = 'u8[4096]{0}', space=vmem, size = 0x1000, scoped, tag = 'input window, operand 0, single buffered']
    #allocation3 [shape = 's32[2]{0}', space=sflag, size = 0x8, scoped, tag = 'scoped memory for tpu_custom_call.1']
    #allocation4 [shape = 's32[2]{0}', space=sflag, size = 0x8, scoped, tag = 'scoped memory for tpu_custom_call.1']
    #allocation5 [shape = 'u8[4096]{0}', space=vmem, size = 0x1000, scoped, tag = 'output window, operand 0, single buffered']
    %6 = vsyncpa [#allocation3], 0
    %7 = vsyncpa [#allocation4], 0
    loop: start=0, step=1, limit=4
    $region2: #{tpu_custom_call.1} parent=1 // loop_pre_header
      _
    $region3: #{tpu_custom_call.1} parent=1 // loop_header
      %s9 = sphi 0, %s13
      %p10 = scmp.ge.s32.totalorder %s9, 4
      %s17 = sphi 0, %s17
      %s19 = sphi 0, %s17
      %s20 = sphi 0, %s19
      %s34 = sphi 0, %s20
      %s38 = sphi 0, %s38
      %s40 = sphi 0, %s38
      %s41 = sphi 0, %s40
      %s55 = sphi 0, %s41
    $region4: #{tpu_custom_call.1} parent=1 // loop_header_branch
      %12 = sbr.rel (%p10) target = $region8
    $region5: #{tpu_custom_call.1} parent=1 // loop_body
      %s14 = ssub.s32 %s9, 1
      %s15 = ssub.s32 %s9, 2
      %s16 = sadd.s32 %s9, 1
      %s18 = sadd.s32 %s17, 1
      %p21 = scmp.eq.s32.totalorder %s9, 1
      %p22 = scmp.ne.s32.totalorder %s17, %s19
      %p23 = scmp.eq.s32.totalorder %s9, 0
      %p24 = por %p22, %p23
      %p25 = scmp.ne.s32.totalorder %s17, %s19
      %p26 = scmp.eq.s32.totalorder %s14, 1
      %p27 = por %p25, %p26
      %p28 = scmp.ne.s32.totalorder %s19, %s20
      %p29 = scmp.eq.s32.totalorder %s14, 0
      %p30 = por %p28, %p29
      %p31 = scmp.ne.s32.totalorder %s19, %s20
      %p32 = scmp.eq.s32.totalorder %s15, 1
      %p33 = por %p31, %p32
      %p35 = scmp.ne.s32.totalorder %s20, %s34
      %p36 = scmp.eq.s32.totalorder %s15, 0
      %p37 = por %p35, %p36
      %s39 = sadd.s32 %s38, 1
      %p42 = scmp.eq.s32.totalorder %s9, 1
      %p43 = scmp.ne.s32.totalorder %s38, %s40
      %p44 = scmp.eq.s32.totalorder %s9, 0
      %p45 = por %p43, %p44
      %p46 = scmp.ne.s32.totalorder %s38, %s40
      %p47 = scmp.eq.s32.totalorder %s14, 1
      %p48 = por %p46, %p47
      %p49 = scmp.ne.s32.totalorder %s40, %s41
      %p50 = scmp.eq.s32.totalorder %s14, 0
      %p51 = por %p49, %p50
      %p52 = scmp.ne.s32.totalorder %s40, %s41
      %p53 = scmp.eq.s32.totalorder %s15, 1
      %p54 = por %p52, %p53
      %p56 = scmp.ne.s32.totalorder %s41, %s55
      %p57 = scmp.eq.s32.totalorder %s15, 0
      %p58 = por %p56, %p57
      %p59 = scmp.le.s32.totalorder 1, %s9
      %p60 = scmp.lt.s32.totalorder %s9, 3
      %p61 = pnand %p59, %p60
      %p62 = pneg %p61
      // Predicated region
      $region9: #{tpu_custom_call.1} parent=5 // pred_check
        _
      $region10: #{tpu_custom_call.1} parent=5 // pred_check_branch
        %64 = sbr.rel (%p61) target = $region12
      $region11: #{tpu_custom_call.1} parent=5 // pred_region
        %s65 = ssub.s32 %s9, 1
        // Predicated region
        $region13: #{tpu_custom_call.1} parent=11 // pred_check
          %p66 = pneg %p30
        $region14: #{tpu_custom_call.1} parent=11 // pred_check_branch
          %68 = sbr.rel (%p66) target = $region16
        $region15: #{tpu_custom_call.1} parent=11 // pred_region
          %s70 = ssub.s32 128, 128
          %71 = vsyncadd [#allocation3], %s70
          %s73 = sshll.u32 [#allocation2], 4
          %s74 = int_to_ptr.vmem [resolvable:$true] %s73
          %76 = dma.hbm_to_vmem [thread:$0]  %s0, 128, %s74, [#allocation3]
        $region16: #{tpu_custom_call.1} parent=11 // pred_fallthru
          _
      $region12: #{tpu_custom_call.1} parent=5 // pred_fallthru
        _
      %p77 = scmp.lt.s32.totalorder %s9, 2
      // Predicated region
      $region17: #{tpu_custom_call.1} parent=5 // pred_check
        %p78 = pneg %p77
      $region18: #{tpu_custom_call.1} parent=5 // pred_check_branch
        %80 = sbr.rel (%p78) target = $region20
      $region19: #{tpu_custom_call.1} parent=5 // pred_region
        _
      $region20: #{tpu_custom_call.1} parent=5 // pred_fallthru
        _
      %p81 = scmp.le.s32.totalorder 1, %s9
      %p82 = scmp.lt.s32.totalorder %s9, 3
      %p83 = pnand %p81, %p82
      %p84 = pneg %p83
      // Predicated region
      $region21: #{tpu_custom_call.1} parent=5 // pred_check
        _
      $region22: #{tpu_custom_call.1} parent=5 // pred_check_branch
        %86 = sbr.rel (%p83) target = $region24
      $region23: #{tpu_custom_call.1} parent=5 // pred_region
        %s87 = ssub.s32 %s9, 1
        // Predicated region
        $region25: #{tpu_custom_call.1} parent=23 // pred_check
          %p88 = pneg %p30
        $region26: #{tpu_custom_call.1} parent=23 // pred_check_branch
          %90 = sbr.rel (%p88) target = $region28
        $region27: #{tpu_custom_call.1} parent=23 // pred_region
          %91 = dma.done [#allocation3], 128
        $region28: #{tpu_custom_call.1} parent=23 // pred_fallthru
          _
        %p92 = pneg %p30
        %p93 = pneg %p27
        %p94 = pneg %p51
        %p95 = pneg %p48
        %v96 = vld [vmem:[#allocation2] sm:$0xff]
        %97 = vst [vmem:[#allocation5] sm:$0xff] %v96
        // Predicated region
        $region29: #{tpu_custom_call.1} parent=23 // pred_check
          %p98 = pneg %p48
        $region30: #{tpu_custom_call.1} parent=23 // pred_check_branch
          %100 = sbr.rel (%p98) target = $region32
        $region31: #{tpu_custom_call.1} parent=23 // pred_region
          %s102 = ssub.s32 128, 128
          %103 = vsyncadd [#allocation4], %s102
          %s105 = sshll.u32 [#allocation5], 4
          %s106 = int_to_ptr.vmem [resolvable:$true] %s105
          %108 = dma.vmem_to_hbm [thread:$0]  %s106, 128, %s1, [#allocation4]
        $region32: #{tpu_custom_call.1} parent=23 // pred_fallthru
          _
        // Predicated region
        $region33: #{tpu_custom_call.1} parent=23 // pred_check
          %p109 = pneg %p48
        $region34: #{tpu_custom_call.1} parent=23 // pred_check_branch
          %111 = sbr.rel (%p109) target = $region36
        $region35: #{tpu_custom_call.1} parent=23 // pred_region
          %112 = dma.done [#allocation4], 128
        $region36: #{tpu_custom_call.1} parent=23 // pred_fallthru
          _
      $region24: #{tpu_custom_call.1} parent=5 // pred_fallthru
        _
      %p113 = scmp.le.s32.totalorder 2, %s9
      // Predicated region
      $region37: #{tpu_custom_call.1} parent=5 // pred_check
        %p114 = pneg %p113
      $region38: #{tpu_custom_call.1} parent=5 // pred_check_branch
        %116 = sbr.rel (%p114) target = $region40
      $region39: #{tpu_custom_call.1} parent=5 // pred_region
        %s117 = ssub.s32 %s9, 2
      $region40: #{tpu_custom_call.1} parent=5 // pred_fallthru
        _
    $region6: #{tpu_custom_call.1} parent=1 // loop_footer
      %s13 = sadd.s32 1, %s9
    $region7: #{tpu_custom_call.1} parent=1 // loop_footer_branch
      %8 = sbr.rel target = $region3
    $region8: #{tpu_custom_call.1} parent=1 // loop_exit
      _
    %118 = vsyncpa [#allocation3], 1
    %s119 = scalar_lea.sflag [#allocation3], 1
    %120 = vsyncpa %s119, 1
    %121 = vsyncpa [#allocation4], 1
    %s122 = scalar_lea.sflag [#allocation4], 1
    %123 = vsyncpa %s122, 1

// kernel: squeeze.13
$region0: #{squeeze.13}
  %s0 = inlined_call_operand.vmem [shape: f32[2,128], index: 0, kind: input, shape index: {}]
  %s1 = inlined_call_operand.vmem [shape: f32[2,8,16], index: 1, kind: output, shape index: {}]
  $region1: #{squeeze.13} parent=0
    #allocation0 [shape = 'u8[4096]{0}', space=vmem, size = 0x1000, scoped, tag = 'scoped mem for input reshape']
    %s3 = sshllo.u32 0, 2
    %v4 = vld [vmem:[%s0] sm:%s3]
    %5 = vst [vmem:[#allocation0] sm:%s3] %v4
    %v6 = vld [vmem:[#allocation0] sm:$0x3]
    %vm7 = vcmask 130048
    %8 = vst.msk [vmem:[%s1] ss:$8 sm:$0x3] %vm7, %v6
    %v9 = vld [vmem:[#allocation0] sm:$0x3]
    %10 = vrot.lane.b32.xlu0 %v9, 112
    %v11 = vpop.permute.xlu0 %10
    %vm12 = vcmask 130048
    %s13 = scalar_lea.vmem %s1, 1
    %14 = vst.msk [vmem:[%s13] ss:$8 sm:$0x3] %vm12, %v11
    %v15 = vld [vmem:[#allocation0] sm:$0x3]
    %16 = vrot.lane.b32.xlu0 %v15, 96
    %v17 = vpop.permute.xlu0 %16
    %vm18 = vcmask 130048
    %s19 = scalar_lea.vmem %s1, 2
    %20 = vst.msk [vmem:[%s19] ss:$8 sm:$0x3] %vm18, %v17
    %v21 = vld [vmem:[#allocation0] sm:$0x3]
    %22 = vrot.lane.b32.xlu0 %v21, 80
    %v23 = vpop.permute.xlu0 %22
    %vm24 = vcmask 130048
    %s25 = scalar_lea.vmem %s1, 3
    %26 = vst.msk [vmem:[%s25] ss:$8 sm:$0x3] %vm24, %v23
    %v27 = vld [vmem:[#allocation0] sm:$0x3]
    %28 = vrot.lane.b32.xlu0 %v27, 64
    %v29 = vpop.permute.xlu0 %28
    %vm30 = vcmask 130048
    %s31 = scalar_lea.vmem %s1, 4
    %32 = vst.msk [vmem:[%s31] ss:$8 sm:$0x3] %vm30, %v29
    %v33 = vld [vmem:[#allocation0] sm:$0x3]
    %34 = vrot.lane.b32.xlu0 %v33, 48
    %v35 = vpop.permute.xlu0 %34
    %vm36 = vcmask 130048
    %s37 = scalar_lea.vmem %s1, 5
    %38 = vst.msk [vmem:[%s37] ss:$8 sm:$0x3] %vm36, %v35
    %v39 = vld [vmem:[#allocation0] sm:$0x3]
    %40 = vrot.lane.b32.xlu0 %v39, 32
    %v41 = vpop.permute.xlu0 %40
    %vm42 = vcmask 130048
    %s43 = scalar_lea.vmem %s1, 6
    %44 = vst.msk [vmem:[%s43] ss:$8 sm:$0x3] %vm42, %v41
    %v45 = vld [vmem:[#allocation0] sm:$0x3]
    %46 = vrot.lane.b32.xlu0 %v45, 16
    %v47 = vpop.permute.xlu0 %46
    %vm48 = vcmask 130048
    %s49 = scalar_lea.vmem %s1, 7
    %50 = vst.msk [vmem:[%s49] ss:$8 sm:$0x3] %vm48, %v47

// kernel: predicate_level_encoder.1
$region0: #{predicate_level_encoder.1}
  #allocation0 [shape = 'u32[]', space=smem, size = 0x4, offset = 0x4, fixed_abs, tag = 'smem constant byte address 0x4 - core index']
  #allocation1 [shape = 'u32[144,128]{1,0:T(1,128)}', space=vmem, size = 0x12000, scoped, tag = 'internal scratch']
  %s0 = inlined_call_operand.hbm [shape: f32[2,8,16], index: 0, kind: input, shape index: {}]
  %s1 = inlined_call_operand.hbm [shape: f32[2,8,32], index: 1, kind: input, shape index: {}]
  %s2 = inlined_call_operand.hbm [shape: f32[2,1,8], index: 2, kind: input, shape index: {}]
  %s3 = inlined_call_operand.hbm [shape: bf16[16,32], index: 3, kind: input, shape index: {}]
  %s4 = inlined_call_operand.hbm [shape: bf16[32,32], index: 4, kind: input, shape index: {}]
  %s5 = inlined_call_operand.hbm [shape: bf16[32,32], index: 5, kind: input, shape index: {}]
  %s6 = inlined_call_operand.hbm [shape: f32[8,32], index: 6, kind: input, shape index: {}]
  %s7 = inlined_call_operand.hbm [shape: bf16[64,128], index: 7, kind: input, shape index: {}]
  %s8 = inlined_call_operand.hbm [shape: bf16[2,16,64], index: 8, kind: input, shape index: {}]
  %s9 = inlined_call_operand.hbm [shape: f32[1,128], index: 9, kind: input, shape index: {}]
  %s10 = inlined_call_operand.hbm [shape: bf16[32,128], index: 10, kind: input, shape index: {}]
  %s11 = inlined_call_operand.hbm [shape: f32[1,128], index: 11, kind: input, shape index: {}]
  %s12 = inlined_call_operand.hbm [shape: f32[2,1,128], index: 12, kind: output, shape index: {0}]
  %s13 = inlined_call_operand.hbm [shape: f32[2,1,128], index: 13, kind: output, shape index: {1}]
  %s14 = inlined_call_operand.hbm [shape: f32[2,1,128], index: 14, kind: output, shape index: {2}]
  %15 = xla_tuple %s12, %s13, %s14
  %s16 = sld [smem:[#allocation0]]
  $region145: #{predicate_level_encoder.1} parent=0
    _
  %s18 = ssub.s32 1, %s16
  %s19 = scalar_select 0, %s18, %s16
  $region1: #{predicate_level_encoder.1} parent=0
    #allocation2 [shape = 'u8[8192]{0}', space=vmem, size = 0x2000, scoped, tag = 'input window, operand 0']
    #allocation3 [shape = 's32[2]{0}', space=sflag, size = 0x8, scoped, tag = 'scoped memory for predicate_level_encoder.1']
    #allocation4 [shape = 's32[2]{0}', space=sflag, size = 0x8, scoped, tag = 'scoped memory for predicate_level_encoder.1']
    #allocation5 [shape = 'u8[8192]{0}', space=vmem, size = 0x2000, scoped, tag = 'input window, operand 1']
    #allocation6 [shape = 's32[2]{0}', space=sflag, size = 0x8, scoped, tag = 'scoped memory for predicate_level_encoder.1']
    #allocation7 [shape = 'u8[1024]{0}', space=vmem, size = 0x400, scoped, tag = 'input window, operand 2']
    #allocation8 [shape = 'u8[4096]{0}', space=vmem, size = 0x1000, scoped, tag = 'input window, operand 3, single buffered']
    #allocation9 [shape = 's32[1]{0}', space=sflag, size = 0x4, scoped, tag = 'scoped memory for predicate_level_encoder.1']
    #allocation10 [shape = 'u8[8192]{0}', space=vmem, size = 0x2000, scoped, tag = 'input window, operand 4, single buffered']
    #allocation11 [shape = 'u8[8192]{0}', space=vmem, size = 0x2000, scoped, tag = 'input window, operand 5, single buffered']
    #allocation12 [shape = 's32[1]{0}', space=sflag, size = 0x4, scoped, tag = 'scoped memory for predicate_level_encoder.1']
    #allocation13 [shape = 'u8[4096]{0}', space=vmem, size = 0x1000, scoped, tag = 'input window, operand 6, single buffered']
    #allocation14 [shape = 'u8[16384]{0}', space=vmem, size = 0x4000, scoped, tag = 'input window, operand 7, single buffered']
    #allocation15 [shape = 's32[1]{0}', space=sflag, size = 0x4, scoped, tag = 'scoped memory for predicate_level_encoder.1']
    #allocation16 [shape = 'u8[8192]{0}', space=vmem, size = 0x2000, scoped, tag = 'input window, operand 8, single buffered']
    #allocation17 [shape = 'u8[512]{0}', space=vmem, size = 0x400, scoped, tag = 'input window, operand 9, single buffered']
    #allocation18 [shape = 's32[1]{0}', space=sflag, size = 0x4, scoped, tag = 'scoped memory for predicate_level_encoder.1']
    #allocation19 [shape = 'u8[8192]{0}', space=vmem, size = 0x2000, scoped, tag = 'input window, operand 10, single buffered']
    #allocation20 [shape = 'u8[512]{0}', space=vmem, size = 0x400, scoped, tag = 'input window, operand 11, single buffered']
    #allocation21 [shape = 's32[1]{0}', space=sflag, size = 0x4, scoped, tag = 'scoped memory for predicate_level_encoder.1']
    #allocation22 [shape = 'u8[1024]{0}', space=vmem, size = 0x400, scoped, tag = 'output window, operand 0']
    #allocation23 [shape = 'u8[1024]{0}', space=vmem, size = 0x400, scoped, tag = 'output window, operand 1']
    #allocation24 [shape = 's32[2]{0}', space=sflag, size = 0x8, scoped, tag = 'scoped memory for predicate_level_encoder.1']
    #allocation25 [shape = 'u8[1024]{0}', space=vmem, size = 0x400, scoped, tag = 'output window, operand 2']
    %20 = vsyncpa [#allocation3], 0
    %s21 = scalar_lea.sflag [#allocation3], 1
    %22 = vsyncpa %s21, 0
    %23 = vsyncpa [#allocation6], 0
    %s24 = scalar_lea.sflag [#allocation6], 1
    %25 = vsyncpa %s24, 0
    %26 = vsyncpa [#allocation9], 0
    %27 = vsyncpa [#allocation12], 0
    %28 = vsyncpa [#allocation15], 0
    %29 = vsyncpa [#allocation18], 0
    %30 = vsyncpa [#allocation21], 0
    %31 = vsyncpa [#allocation4], 0
    %s32 = scalar_lea.sflag [#allocation4], 1
    %33 = vsyncpa %s32, 0
    %34 = vsyncpa [#allocation24], 0
    %s35 = scalar_lea.sflag [#allocation24], 1
    %36 = vsyncpa %s35, 0
    loop: start=0, step=1, limit=4
    $region2: #{predicate_level_encoder.1} parent=1 // loop_pre_header
      _
    $region3: #{predicate_level_encoder.1} parent=1 // loop_header
      %s38 = sphi 0, %s42
      %p39 = scmp.ge.s32.totalorder %s38, 4
      %s48 = sphi 0, %s50
      %s51 = sphi 0, %s48
      %s52 = sphi 0, %s51
      %s68 = sphi 0, %s52
      %s74 = sphi 0, %s76
      %s77 = sphi 0, %s74
      %s78 = sphi 0, %s77
      %s94 = sphi 0, %s78
      %s100 = sphi 0, %s102
      %s103 = sphi 0, %s100
      %s104 = sphi 0, %s103
      %s120 = sphi 0, %s104
      %s124 = sphi 0, %s124
      %s126 = sphi 0, %s124
      %s127 = sphi 0, %s126
      %s141 = sphi 0, %s127
      %s145 = sphi 0, %s145
      %s147 = sphi 0, %s145
      %s148 = sphi 0, %s147
      %s162 = sphi 0, %s148
      %s166 = sphi 0, %s166
      %s168 = sphi 0, %s166
      %s169 = sphi 0, %s168
      %s183 = sphi 0, %s169
      %s187 = sphi 0, %s187
      %s189 = sphi 0, %s187
      %s190 = sphi 0, %s189
      %s204 = sphi 0, %s190
      %s208 = sphi 0, %s208
      %s210 = sphi 0, %s208
      %s211 = sphi 0, %s210
      %s225 = sphi 0, %s211
      %s229 = sphi 0, %s229
      %s231 = sphi 0, %s229
      %s232 = sphi 0, %s231
      %s246 = sphi 0, %s232
      %s250 = sphi 0, %s250
      %s252 = sphi 0, %s250
      %s253 = sphi 0, %s252
      %s267 = sphi 0, %s253
      %s271 = sphi 0, %s271
      %s273 = sphi 0, %s271
      %s274 = sphi 0, %s273
      %s288 = sphi 0, %s274
      %s292 = sphi 0, %s292
      %s294 = sphi 0, %s292
      %s295 = sphi 0, %s294
      %s309 = sphi 0, %s295
      %s315 = sphi 0, %s317
      %s318 = sphi 0, %s315
      %s319 = sphi 0, %s318
      %s335 = sphi 0, %s319
      %s341 = sphi 0, %s343
      %s344 = sphi 0, %s341
      %s345 = sphi 0, %s344
      %s361 = sphi 0, %s345
      %s367 = sphi 0, %s369
      %s370 = sphi 0, %s367
      %s371 = sphi 0, %s370
      %s387 = sphi 0, %s371
    $region4: #{predicate_level_encoder.1} parent=1 // loop_header_branch
      %41 = sbr.rel (%p39) target = $region8
    $region5: #{predicate_level_encoder.1} parent=1 // loop_body
      %s43 = ssub.s32 %s38, 1
      %s44 = ssub.s32 %s38, 2
      %s45 = sadd.s32 %s38, 1
      %s46 = ssub.s32 %s38, %s45
      %p47 = scmp.eq.s32.totalorder %s46, 0
      %s49 = sadd.s32 %s48, 1
      %s50 = scalar_select %p47, %s48, %s49
      %p53 = pneg %p47
      %p54 = scmp.eq.s32.totalorder %s38, 1
      %p55 = por %p53, %p54
      %p56 = scmp.ne.s32.totalorder %s48, %s51
      %p57 = scmp.eq.s32.totalorder %s38, 0
      %p58 = por %p56, %p57
      %p59 = scmp.ne.s32.totalorder %s48, %s51
      %p60 = scmp.eq.s32.totalorder %s43, 1
      %p61 = por %p59, %p60
      %p62 = scmp.ne.s32.totalorder %s51, %s52
      %p63 = scmp.eq.s32.totalorder %s43, 0
      %p64 = por %p62, %p63
      %p65 = scmp.ne.s32.totalorder %s51, %s52
      %p66 = scmp.eq.s32.totalorder %s44, 1
      %p67 = por %p65, %p66
      %p69 = scmp.ne.s32.totalorder %s52, %s68
      %p70 = scmp.eq.s32.totalorder %s44, 0
      %p71 = por %p69, %p70
      %s72 = ssub.s32 %s38, %s45
      %p73 = scmp.eq.s32.totalorder %s72, 0
      %s75 = sadd.s32 %s74, 1
      %s76 = scalar_select %p73, %s74, %s75
      %p79 = pneg %p73
      %p80 = scmp.eq.s32.totalorder %s38, 1
      %p81 = por %p79, %p80
      %p82 = scmp.ne.s32.totalorder %s74, %s77
      %p83 = scmp.eq.s32.totalorder %s38, 0
      %p84 = por %p82, %p83
      %p85 = scmp.ne.s32.totalorder %s74, %s77
      %p86 = scmp.eq.s32.totalorder %s43, 1
      %p87 = por %p85, %p86
      %p88 = scmp.ne.s32.totalorder %s77, %s78
      %p89 = scmp.eq.s32.totalorder %s43, 0
      %p90 = por %p88, %p89
      %p91 = scmp.ne.s32.totalorder %s77, %s78
      %p92 = scmp.eq.s32.totalorder %s44, 1
      %p93 = por %p91, %p92
      %p95 = scmp.ne.s32.totalorder %s78, %s94
      %p96 = scmp.eq.s32.totalorder %s44, 0
      %p97 = por %p95, %p96
      %s98 = ssub.s32 %s38, %s45
      %p99 = scmp.eq.s32.totalorder %s98, 0
      %s101 = sadd.s32 %s100, 1
      %s102 = scalar_select %p99, %s100, %s101
      %p105 = pneg %p99
      %p106 = scmp.eq.s32.totalorder %s38, 1
      %p107 = por %p105, %p106
      %p108 = scmp.ne.s32.totalorder %s100, %s103
      %p109 = scmp.eq.s32.totalorder %s38, 0
      %p110 = por %p108, %p109
      %p111 = scmp.ne.s32.totalorder %s100, %s103
      %p112 = scmp.eq.s32.totalorder %s43, 1
      %p113 = por %p111, %p112
      %p114 = scmp.ne.s32.totalorder %s103, %s104
      %p115 = scmp.eq.s32.totalorder %s43, 0
      %p116 = por %p114, %p115
      %p117 = scmp.ne.s32.totalorder %s103, %s104
      %p118 = scmp.eq.s32.totalorder %s44, 1
      %p119 = por %p117, %p118
      %p121 = scmp.ne.s32.totalorder %s104, %s120
      %p122 = scmp.eq.s32.totalorder %s44, 0
      %p123 = por %p121, %p122
      %s125 = sadd.s32 %s124, 1
      %p128 = scmp.eq.s32.totalorder %s38, 1
      %p129 = scmp.ne.s32.totalorder %s124, %s126
      %p130 = scmp.eq.s32.totalorder %s38, 0
      %p131 = por %p129, %p130
      %p132 = scmp.ne.s32.totalorder %s124, %s126
      %p133 = scmp.eq.s32.totalorder %s43, 1
      %p134 = por %p132, %p133
      %p135 = scmp.ne.s32.totalorder %s126, %s127
      %p136 = scmp.eq.s32.totalorder %s43, 0
      %p137 = por %p135, %p136
      %p138 = scmp.ne.s32.totalorder %s126, %s127
      %p139 = scmp.eq.s32.totalorder %s44, 1
      %p140 = por %p138, %p139
      %p142 = scmp.ne.s32.totalorder %s127, %s141
      %p143 = scmp.eq.s32.totalorder %s44, 0
      %p144 = por %p142, %p143
      %s146 = sadd.s32 %s145, 1
      %p149 = scmp.eq.s32.totalorder %s38, 1
      %p150 = scmp.ne.s32.totalorder %s145, %s147
      %p151 = scmp.eq.s32.totalorder %s38, 0
      %p152 = por %p150, %p151
      %p153 = scmp.ne.s32.totalorder %s145, %s147
      %p154 = scmp.eq.s32.totalorder %s43, 1
      %p155 = por %p153, %p154
      %p156 = scmp.ne.s32.totalorder %s147, %s148
      %p157 = scmp.eq.s32.totalorder %s43, 0
      %p158 = por %p156, %p157
      %p159 = scmp.ne.s32.totalorder %s147, %s148
      %p160 = scmp.eq.s32.totalorder %s44, 1
      %p161 = por %p159, %p160
      %p163 = scmp.ne.s32.totalorder %s148, %s162
      %p164 = scmp.eq.s32.totalorder %s44, 0
      %p165 = por %p163, %p164
      %s167 = sadd.s32 %s166, 1
      %p170 = scmp.eq.s32.totalorder %s38, 1
      %p171 = scmp.ne.s32.totalorder %s166, %s168
      %p172 = scmp.eq.s32.totalorder %s38, 0
      %p173 = por %p171, %p172
      %p174 = scmp.ne.s32.totalorder %s166, %s168
      %p175 = scmp.eq.s32.totalorder %s43, 1
      %p176 = por %p174, %p175
      %p177 = scmp.ne.s32.totalorder %s168, %s169
      %p178 = scmp.eq.s32.totalorder %s43, 0
      %p179 = por %p177, %p178
      %p180 = scmp.ne.s32.totalorder %s168, %s169
      %p181 = scmp.eq.s32.totalorder %s44, 1
      %p182 = por %p180, %p181
      %p184 = scmp.ne.s32.totalorder %s169, %s183
      %p185 = scmp.eq.s32.totalorder %s44, 0
      %p186 = por %p184, %p185
      %s188 = sadd.s32 %s187, 1
      %p191 = scmp.eq.s32.totalorder %s38, 1
      %p192 = scmp.ne.s32.totalorder %s187, %s189
      %p193 = scmp.eq.s32.totalorder %s38, 0
      %p194 = por %p192, %p193
      %p195 = scmp.ne.s32.totalorder %s187, %s189
      %p196 = scmp.eq.s32.totalorder %s43, 1
      %p197 = por %p195, %p196
      %p198 = scmp.ne.s32.totalorder %s189, %s190
      %p199 = scmp.eq.s32.totalorder %s43, 0
      %p200 = por %p198, %p199
      %p201 = scmp.ne.s32.totalorder %s189, %s190
      %p202 = scmp.eq.s32.totalorder %s44, 1
      %p203 = por %p201, %p202
      %p205 = scmp.ne.s32.totalorder %s190, %s204
      %p206 = scmp.eq.s32.totalorder %s44, 0
      %p207 = por %p205, %p206
      %s209 = sadd.s32 %s208, 1
      %p212 = scmp.eq.s32.totalorder %s38, 1
      %p213 = scmp.ne.s32.totalorder %s208, %s210
      %p214 = scmp.eq.s32.totalorder %s38, 0
      %p215 = por %p213, %p214
      %p216 = scmp.ne.s32.totalorder %s208, %s210
      %p217 = scmp.eq.s32.totalorder %s43, 1
      %p218 = por %p216, %p217
      %p219 = scmp.ne.s32.totalorder %s210, %s211
      %p220 = scmp.eq.s32.totalorder %s43, 0
      %p221 = por %p219, %p220
      %p222 = scmp.ne.s32.totalorder %s210, %s211
      %p223 = scmp.eq.s32.totalorder %s44, 1
      %p224 = por %p222, %p223
      %p226 = scmp.ne.s32.totalorder %s211, %s225
      %p227 = scmp.eq.s32.totalorder %s44, 0
      %p228 = por %p226, %p227
      %s230 = sadd.s32 %s229, 1
      %p233 = scmp.eq.s32.totalorder %s38, 1
      %p234 = scmp.ne.s32.totalorder %s229, %s231
      %p235 = scmp.eq.s32.totalorder %s38, 0
      %p236 = por %p234, %p235
      %p237 = scmp.ne.s32.totalorder %s229, %s231
      %p238 = scmp.eq.s32.totalorder %s43, 1
      %p239 = por %p237, %p238
      %p240 = scmp.ne.s32.totalorder %s231, %s232
      %p241 = scmp.eq.s32.totalorder %s43, 0
      %p242 = por %p240, %p241
      %p243 = scmp.ne.s32.totalorder %s231, %s232
      %p244 = scmp.eq.s32.totalorder %s44, 1
      %p245 = por %p243, %p244
      %p247 = scmp.ne.s32.totalorder %s232, %s246
      %p248 = scmp.eq.s32.totalorder %s44, 0
      %p249 = por %p247, %p248
      %s251 = sadd.s32 %s250, 1
      %p254 = scmp.eq.s32.totalorder %s38, 1
      %p255 = scmp.ne.s32.totalorder %s250, %s252
      %p256 = scmp.eq.s32.totalorder %s38, 0
      %p257 = por %p255, %p256
      %p258 = scmp.ne.s32.totalorder %s250, %s252
      %p259 = scmp.eq.s32.totalorder %s43, 1
      %p260 = por %p258, %p259
      %p261 = scmp.ne.s32.totalorder %s252, %s253
      %p262 = scmp.eq.s32.totalorder %s43, 0
      %p263 = por %p261, %p262
      %p264 = scmp.ne.s32.totalorder %s252, %s253
      %p265 = scmp.eq.s32.totalorder %s44, 1
      %p266 = por %p264, %p265
      %p268 = scmp.ne.s32.totalorder %s253, %s267
      %p269 = scmp.eq.s32.totalorder %s44, 0
      %p270 = por %p268, %p269
      %s272 = sadd.s32 %s271, 1
      %p275 = scmp.eq.s32.totalorder %s38, 1
      %p276 = scmp.ne.s32.totalorder %s271, %s273
      %p277 = scmp.eq.s32.totalorder %s38, 0
      %p278 = por %p276, %p277
      %p279 = scmp.ne.s32.totalorder %s271, %s273
      %p280 = scmp.eq.s32.totalorder %s43, 1
      %p281 = por %p279, %p280
      %p282 = scmp.ne.s32.totalorder %s273, %s274
      %p283 = scmp.eq.s32.totalorder %s43, 0
      %p284 = por %p282, %p283
      %p285 = scmp.ne.s32.totalorder %s273, %s274
      %p286 = scmp.eq.s32.totalorder %s44, 1
      %p287 = por %p285, %p286
      %p289 = scmp.ne.s32.totalorder %s274, %s288
      %p290 = scmp.eq.s32.totalorder %s44, 0
      %p291 = por %p289, %p290
      %s293 = sadd.s32 %s292, 1
      %p296 = scmp.eq.s32.totalorder %s38, 1
      %p297 = scmp.ne.s32.totalorder %s292, %s294
      %p298 = scmp.eq.s32.totalorder %s38, 0
      %p299 = por %p297, %p298
      %p300 = scmp.ne.s32.totalorder %s292, %s294
      %p301 = scmp.eq.s32.totalorder %s43, 1
      %p302 = por %p300, %p301
      %p303 = scmp.ne.s32.totalorder %s294, %s295
      %p304 = scmp.eq.s32.totalorder %s43, 0
      %p305 = por %p303, %p304
      %p306 = scmp.ne.s32.totalorder %s294, %s295
      %p307 = scmp.eq.s32.totalorder %s44, 1
      %p308 = por %p306, %p307
      %p310 = scmp.ne.s32.totalorder %s295, %s309
      %p311 = scmp.eq.s32.totalorder %s44, 0
      %p312 = por %p310, %p311
      %s313 = ssub.s32 %s38, %s45
      %p314 = scmp.eq.s32.totalorder %s313, 0
      %s316 = sadd.s32 %s315, 1
      %s317 = scalar_select %p314, %s315, %s316
      %p320 = pneg %p314
      %p321 = scmp.eq.s32.totalorder %s38, 1
      %p322 = por %p320, %p321
      %p323 = scmp.ne.s32.totalorder %s315, %s318
      %p324 = scmp.eq.s32.totalorder %s38, 0
      %p325 = por %p323, %p324
      %p326 = scmp.ne.s32.totalorder %s315, %s318
      %p327 = scmp.eq.s32.totalorder %s43, 1
      %p328 = por %p326, %p327
      %p329 = scmp.ne.s32.totalorder %s318, %s319
      %p330 = scmp.eq.s32.totalorder %s43, 0
      %p331 = por %p329, %p330
      %p332 = scmp.ne.s32.totalorder %s318, %s319
      %p333 = scmp.eq.s32.totalorder %s44, 1
      %p334 = por %p332, %p333
      %p336 = scmp.ne.s32.totalorder %s319, %s335
      %p337 = scmp.eq.s32.totalorder %s44, 0
      %p338 = por %p336, %p337
      %s339 = ssub.s32 %s38, %s45
      %p340 = scmp.eq.s32.totalorder %s339, 0
      %s342 = sadd.s32 %s341, 1
      %s343 = scalar_select %p340, %s341, %s342
      %p346 = pneg %p340
      %p347 = scmp.eq.s32.totalorder %s38, 1
      %p348 = por %p346, %p347
      %p349 = scmp.ne.s32.totalorder %s341, %s344
      %p350 = scmp.eq.s32.totalorder %s38, 0
      %p351 = por %p349, %p350
      %p352 = scmp.ne.s32.totalorder %s341, %s344
      %p353 = scmp.eq.s32.totalorder %s43, 1
      %p354 = por %p352, %p353
      %p355 = scmp.ne.s32.totalorder %s344, %s345
      %p356 = scmp.eq.s32.totalorder %s43, 0
      %p357 = por %p355, %p356
      %p358 = scmp.ne.s32.totalorder %s344, %s345
      %p359 = scmp.eq.s32.totalorder %s44, 1
      %p360 = por %p358, %p359
      %p362 = scmp.ne.s32.totalorder %s345, %s361
      %p363 = scmp.eq.s32.totalorder %s44, 0
      %p364 = por %p362, %p363
      %s365 = ssub.s32 %s38, %s45
      %p366 = scmp.eq.s32.totalorder %s365, 0
      %s368 = sadd.s32 %s367, 1
      %s369 = scalar_select %p366, %s367, %s368
      %p372 = pneg %p366
      %p373 = scmp.eq.s32.totalorder %s38, 1
      %p374 = por %p372, %p373
      %p375 = scmp.ne.s32.totalorder %s367, %s370
      %p376 = scmp.eq.s32.totalorder %s38, 0
      %p377 = por %p375, %p376
      %p378 = scmp.ne.s32.totalorder %s367, %s370
      %p379 = scmp.eq.s32.totalorder %s43, 1
      %p380 = por %p378, %p379
      %p381 = scmp.ne.s32.totalorder %s370, %s371
      %p382 = scmp.eq.s32.totalorder %s43, 0
      %p383 = por %p381, %p382
      %p384 = scmp.ne.s32.totalorder %s370, %s371
      %p385 = scmp.eq.s32.totalorder %s44, 1
      %p386 = por %p384, %p385
      %p388 = scmp.ne.s32.totalorder %s371, %s387
      %p389 = scmp.eq.s32.totalorder %s44, 0
      %p390 = por %p388, %p389
      %p391 = scmp.le.s32.totalorder 1, %s38
      %p392 = scmp.lt.s32.totalorder %s38, 3
      %p393 = pnand %p391, %p392
      %p394 = pneg %p393
      // Predicated region
      $region9: #{predicate_level_encoder.1} parent=5 // pred_check
        _
      $region10: #{predicate_level_encoder.1} parent=5 // pred_check_branch
        %396 = sbr.rel (%p393) target = $region12
      $region11: #{predicate_level_encoder.1} parent=5 // pred_region
        %s397 = ssub.s32 %s38, 1
        // Predicated region
        $region13: #{predicate_level_encoder.1} parent=11 // pred_check
          %p398 = pneg %p137
        $region14: #{predicate_level_encoder.1} parent=11 // pred_check_branch
          %400 = sbr.rel (%p398) target = $region16
        $region15: #{predicate_level_encoder.1} parent=11 // pred_region
          %s402 = ssub.s32 128, 128
          %403 = vsyncadd [#allocation9], %s402
          %s404 = sshll.u32 [#allocation8], 4
          %s405 = int_to_ptr.vmem [resolvable:$true] %s404
          %410 = dma.hbm_to_vmem [thread:$0]  %s3, 128, %s405, [#allocation9], 64, 64, 4
        $region16: #{predicate_level_encoder.1} parent=11 // pred_fallthru
          _
        // Predicated region
        $region17: #{predicate_level_encoder.1} parent=11 // pred_check
          %p411 = pneg %p158
        $region18: #{predicate_level_encoder.1} parent=11 // pred_check_branch
          %413 = sbr.rel (%p411) target = $region20
        $region19: #{predicate_level_encoder.1} parent=11 // pred_region
          %s415 = ssub.s32 256, 256
          %416 = vsyncadd [#allocation9], %s415
          %s417 = sshll.u32 [#allocation10], 4
          %s418 = int_to_ptr.vmem [resolvable:$true] %s417
          %423 = dma.hbm_to_vmem [thread:$0]  %s4, 256, %s418, [#allocation9], 64, 64, 4
        $region20: #{predicate_level_encoder.1} parent=11 // pred_fallthru
          _
        // Predicated region
        $region21: #{predicate_level_encoder.1} parent=11 // pred_check
          %p424 = pneg %p179
        $region22: #{predicate_level_encoder.1} parent=11 // pred_check_branch
          %426 = sbr.rel (%p424) target = $region24
        $region23: #{predicate_level_encoder.1} parent=11 // pred_region
          %s428 = ssub.s32 256, 256
          %429 = vsyncadd [#allocation12], %s428
          %s430 = sshll.u32 [#allocation11], 4
          %s431 = int_to_ptr.vmem [resolvable:$true] %s430
          %436 = dma.hbm_to_vmem [thread:$0]  %s5, 256, %s431, [#allocation12], 64, 64, 4
        $region24: #{predicate_level_encoder.1} parent=11 // pred_fallthru
          _
        // Predicated region
        $region25: #{predicate_level_encoder.1} parent=11 // pred_check
          %p437 = pneg %p200
        $region26: #{predicate_level_encoder.1} parent=11 // pred_check_branch
          %439 = sbr.rel (%p437) target = $region28
        $region27: #{predicate_level_encoder.1} parent=11 // pred_region
          %s441 = ssub.s32 128, 128
          %442 = vsyncadd [#allocation12], %s441
          %s444 = sshll.u32 [#allocation13], 4
          %s445 = int_to_ptr.vmem [resolvable:$true] %s444
          %447 = dma.hbm_to_vmem [thread:$0]  %s6, 128, %s445, [#allocation12]
        $region28: #{predicate_level_encoder.1} parent=11 // pred_fallthru
          _
        // Predicated region
        $region29: #{predicate_level_encoder.1} parent=11 // pred_check
          %p448 = pneg %p221
        $region30: #{predicate_level_encoder.1} parent=11 // pred_check_branch
          %450 = sbr.rel (%p448) target = $region32
        $region31: #{predicate_level_encoder.1} parent=11 // pred_region
          %s452 = ssub.s32 512, 512
          %453 = vsyncadd [#allocation15], %s452
          %s454 = sshll.u32 [#allocation14], 4
          %s455 = int_to_ptr.vmem [resolvable:$true] %s454
          %460 = dma.hbm_to_vmem [thread:$0]  %s7, 512, %s455, [#allocation15], 64, 64, 4
        $region32: #{predicate_level_encoder.1} parent=11 // pred_fallthru
          _
        // Predicated region
        $region33: #{predicate_level_encoder.1} parent=11 // pred_check
          %p461 = pneg %p242
        $region34: #{predicate_level_encoder.1} parent=11 // pred_check_branch
          %463 = sbr.rel (%p461) target = $region36
        $region35: #{predicate_level_encoder.1} parent=11 // pred_region
          %s465 = ssub.s32 256, 256
          %466 = vsyncadd [#allocation15], %s465
          %s467 = sshll.u32 [#allocation16], 4
          %s468 = int_to_ptr.vmem [resolvable:$true] %s467
          %473 = dma.hbm_to_vmem [thread:$0]  %s8, 256, %s468, [#allocation15], 64, 64, 4
        $region36: #{predicate_level_encoder.1} parent=11 // pred_fallthru
          _
        // Predicated region
        $region37: #{predicate_level_encoder.1} parent=11 // pred_check
          %p474 = pneg %p263
        $region38: #{predicate_level_encoder.1} parent=11 // pred_check_branch
          %476 = sbr.rel (%p474) target = $region40
        $region39: #{predicate_level_encoder.1} parent=11 // pred_region
          %s478 = ssub.s32 16, 16
          %479 = vsyncadd [#allocation18], %s478
          %s481 = sshll.u32 [#allocation17], 4
          %s482 = int_to_ptr.vmem [resolvable:$true] %s481
          %484 = dma.hbm_to_vmem [thread:$0]  %s9, 16, %s482, [#allocation18]
        $region40: #{predicate_level_encoder.1} parent=11 // pred_fallthru
          _
        // Predicated region
        $region41: #{predicate_level_encoder.1} parent=11 // pred_check
          %p485 = pneg %p284
        $region42: #{predicate_level_encoder.1} parent=11 // pred_check_branch
          %487 = sbr.rel (%p485) target = $region44
        $region43: #{predicate_level_encoder.1} parent=11 // pred_region
          %s489 = ssub.s32 256, 256
          %490 = vsyncadd [#allocation18], %s489
          %s491 = sshll.u32 [#allocation19], 4
          %s492 = int_to_ptr.vmem [resolvable:$true] %s491
          %497 = dma.hbm_to_vmem [thread:$0]  %s10, 256, %s492, [#allocation18], 64, 64, 4
        $region44: #{predicate_level_encoder.1} parent=11 // pred_fallthru
          _
        // Predicated region
        $region45: #{predicate_level_encoder.1} parent=11 // pred_check
          %p498 = pneg %p305
        $region46: #{predicate_level_encoder.1} parent=11 // pred_check_branch
          %500 = sbr.rel (%p498) target = $region48
        $region47: #{predicate_level_encoder.1} parent=11 // pred_region
          %s502 = ssub.s32 16, 16
          %503 = vsyncadd [#allocation21], %s502
          %s505 = sshll.u32 [#allocation20], 4
          %s506 = int_to_ptr.vmem [resolvable:$true] %s505
          %508 = dma.hbm_to_vmem [thread:$0]  %s11, 16, %s506, [#allocation21]
        $region48: #{predicate_level_encoder.1} parent=11 // pred_fallthru
          _
      $region12: #{predicate_level_encoder.1} parent=5 // pred_fallthru
        _
      %p509 = scmp.lt.s32.totalorder %s38, 2
      // Predicated region
      $region49: #{predicate_level_encoder.1} parent=5 // pred_check
        %p510 = pneg %p509
      $region50: #{predicate_level_encoder.1} parent=5 // pred_check_branch
        %512 = sbr.rel (%p510) target = $region52
      $region51: #{predicate_level_encoder.1} parent=5 // pred_region
        // Predicated region
        $region53: #{predicate_level_encoder.1} parent=51 // pred_check
          %p513 = pneg %p58
        $region54: #{predicate_level_encoder.1} parent=51 // pred_check_branch
          %515 = sbr.rel (%p513) target = $region56
        $region55: #{predicate_level_encoder.1} parent=51 // pred_region
          %s516 = sand.u32 %s48, 1
          %s517 = scalar_lea.sflag [#allocation3], %s516
          %s518 = sand.u32 %s48, 1
          %s519 = smul.addr %s518, 8
          %s520 = scalar_lea.vmem [#allocation2], %s519
          %s522 = ssub.s32 128, 128
          %523 = vsyncadd %s517, %s522
          %s524 = smul.addr %s38, 128
          %s525 = scalar_lea.hbm %s0, %s524
          %s527 = sshll.u32 %s520, 4
          %s528 = int_to_ptr.vmem [resolvable:$true] %s527
          %530 = dma.hbm_to_vmem [thread:$0]  %s525, 128, %s528, %s517
        $region56: #{predicate_level_encoder.1} parent=51 // pred_fallthru
          _
        // Predicated region
        $region57: #{predicate_level_encoder.1} parent=51 // pred_check
          %p531 = pneg %p84
        $region58: #{predicate_level_encoder.1} parent=51 // pred_check_branch
          %533 = sbr.rel (%p531) target = $region60
        $region59: #{predicate_level_encoder.1} parent=51 // pred_region
          %s534 = sand.u32 %s38, 1
          %s535 = scalar_lea.sflag [#allocation6], %s534
          %s536 = sand.u32 %s74, 1
          %s537 = smul.addr %s536, 8
          %s538 = scalar_lea.vmem [#allocation5], %s537
          %s540 = ssub.s32 128, 128
          %541 = vsyncadd %s535, %s540
          %s542 = smul.addr %s38, 128
          %s543 = scalar_lea.hbm %s1, %s542
          %s545 = sshll.u32 %s538, 4
          %s546 = int_to_ptr.vmem [resolvable:$true] %s545
          %548 = dma.hbm_to_vmem [thread:$0]  %s543, 128, %s546, %s535
        $region60: #{predicate_level_encoder.1} parent=51 // pred_fallthru
          _
        // Predicated region
        $region61: #{predicate_level_encoder.1} parent=51 // pred_check
          %p549 = pneg %p110
        $region62: #{predicate_level_encoder.1} parent=51 // pred_check_branch
          %551 = sbr.rel (%p549) target = $region64
        $region63: #{predicate_level_encoder.1} parent=51 // pred_region
          %s552 = sand.u32 %s38, 1
          %s553 = scalar_lea.sflag [#allocation6], %s552
          %s554 = sand.u32 %s100, 1
          %s555 = scalar_lea.vmem [#allocation7], %s554
          %s557 = ssub.s32 16, 16
          %558 = vsyncadd %s553, %s557
          %s559 = smul.addr %s38, 16
          %s560 = scalar_lea.hbm %s2, %s559
          %s562 = sshll.u32 %s555, 4
          %s563 = int_to_ptr.vmem [resolvable:$true] %s562
          %565 = dma.hbm_to_vmem [thread:$0]  %s560, 16, %s563, %s553
        $region64: #{predicate_level_encoder.1} parent=51 // pred_fallthru
          _
      $region52: #{predicate_level_encoder.1} parent=5 // pred_fallthru
        _
      %p566 = scmp.le.s32.totalorder 1, %s38
      %p567 = scmp.lt.s32.totalorder %s38, 3
      %p568 = pnand %p566, %p567
      %p569 = pneg %p568
      // Predicated region
      $region65: #{predicate_level_encoder.1} parent=5 // pred_check
        _
      $region66: #{predicate_level_encoder.1} parent=5 // pred_check_branch
        %571 = sbr.rel (%p568) target = $region68
      $region67: #{predicate_level_encoder.1} parent=5 // pred_region
        %s572 = ssub.s32 %s38, 1
        %s573 = sand.u32 %s51, 1
        %s574 = scalar_lea.sflag [#allocation3], %s573
        %s575 = sand.u32 %s51, 1
        %s576 = smul.addr %s575, 8
        %s577 = scalar_lea.vmem [#allocation2], %s576
        // Predicated region
        $region69: #{predicate_level_encoder.1} parent=67 // pred_check
          %p578 = pneg %p64
        $region70: #{predicate_level_encoder.1} parent=67 // pred_check_branch
          %580 = sbr.rel (%p578) target = $region72
        $region71: #{predicate_level_encoder.1} parent=67 // pred_region
          %581 = dma.done %s574, 128
        $region72: #{predicate_level_encoder.1} parent=67 // pred_fallthru
          _
        %s582 = sand.u32 %s43, 1
        %s583 = scalar_lea.sflag [#allocation6], %s582
        %s584 = sand.u32 %s77, 1
        %s585 = smul.addr %s584, 8
        %s586 = scalar_lea.vmem [#allocation5], %s585
        // Predicated region
        $region73: #{predicate_level_encoder.1} parent=67 // pred_check
          %p587 = pneg %p90
        $region74: #{predicate_level_encoder.1} parent=67 // pred_check_branch
          %589 = sbr.rel (%p587) target = $region76
        $region75: #{predicate_level_encoder.1} parent=67 // pred_region
          %590 = dma.done %s583, 128
        $region76: #{predicate_level_encoder.1} parent=67 // pred_fallthru
          _
        %s591 = sand.u32 %s43, 1
        %s592 = scalar_lea.sflag [#allocation6], %s591
        %s593 = sand.u32 %s103, 1
        %s594 = scalar_lea.vmem [#allocation7], %s593
        // Predicated region
        $region77: #{predicate_level_encoder.1} parent=67 // pred_check
          %p595 = pneg %p116
        $region78: #{predicate_level_encoder.1} parent=67 // pred_check_branch
          %597 = sbr.rel (%p595) target = $region80
        $region79: #{predicate_level_encoder.1} parent=67 // pred_region
          %598 = dma.done %s592, 16
        $region80: #{predicate_level_encoder.1} parent=67 // pred_fallthru
          _
        // Predicated region
        $region81: #{predicate_level_encoder.1} parent=67 // pred_check
          %p599 = pneg %p137
        $region82: #{predicate_level_encoder.1} parent=67 // pred_check_branch
          %601 = sbr.rel (%p599) target = $region84
        $region83: #{predicate_level_encoder.1} parent=67 // pred_region
          %602 = dma.done [#allocation9], 128
        $region84: #{predicate_level_encoder.1} parent=67 // pred_fallthru
          _
        // Predicated region
        $region85: #{predicate_level_encoder.1} parent=67 // pred_check
          %p603 = pneg %p158
        $region86: #{predicate_level_encoder.1} parent=67 // pred_check_branch
          %605 = sbr.rel (%p603) target = $region88
        $region87: #{predicate_level_encoder.1} parent=67 // pred_region
          %606 = dma.done [#allocation9], 256
        $region88: #{predicate_level_encoder.1} parent=67 // pred_fallthru
          _
        // Predicated region
        $region89: #{predicate_level_encoder.1} parent=67 // pred_check
          %p607 = pneg %p179
        $region90: #{predicate_level_encoder.1} parent=67 // pred_check_branch
          %609 = sbr.rel (%p607) target = $region92
        $region91: #{predicate_level_encoder.1} parent=67 // pred_region
          %610 = dma.done [#allocation12], 256
        $region92: #{predicate_level_encoder.1} parent=67 // pred_fallthru
          _
        // Predicated region
        $region93: #{predicate_level_encoder.1} parent=67 // pred_check
          %p611 = pneg %p200
        $region94: #{predicate_level_encoder.1} parent=67 // pred_check_branch
          %613 = sbr.rel (%p611) target = $region96
        $region95: #{predicate_level_encoder.1} parent=67 // pred_region
          %614 = dma.done [#allocation12], 128
        $region96: #{predicate_level_encoder.1} parent=67 // pred_fallthru
          _
        // Predicated region
        $region97: #{predicate_level_encoder.1} parent=67 // pred_check
          %p615 = pneg %p221
        $region98: #{predicate_level_encoder.1} parent=67 // pred_check_branch
          %617 = sbr.rel (%p615) target = $region100
        $region99: #{predicate_level_encoder.1} parent=67 // pred_region
          %618 = dma.done [#allocation15], 512
        $region100: #{predicate_level_encoder.1} parent=67 // pred_fallthru
          _
        // Predicated region
        $region101: #{predicate_level_encoder.1} parent=67 // pred_check
          %p619 = pneg %p242
        $region102: #{predicate_level_encoder.1} parent=67 // pred_check_branch
          %621 = sbr.rel (%p619) target = $region104
        $region103: #{predicate_level_encoder.1} parent=67 // pred_region
          %622 = dma.done [#allocation15], 256
        $region104: #{predicate_level_encoder.1} parent=67 // pred_fallthru
          _
        // Predicated region
        $region105: #{predicate_level_encoder.1} parent=67 // pred_check
          %p623 = pneg %p263
        $region106: #{predicate_level_encoder.1} parent=67 // pred_check_branch
          %625 = sbr.rel (%p623) target = $region108
        $region107: #{predicate_level_encoder.1} parent=67 // pred_region
          %626 = dma.done [#allocation18], 16
        $region108: #{predicate_level_encoder.1} parent=67 // pred_fallthru
          _
        // Predicated region
        $region109: #{predicate_level_encoder.1} parent=67 // pred_check
          %p627 = pneg %p284
        $region110: #{predicate_level_encoder.1} parent=67 // pred_check_branch
          %629 = sbr.rel (%p627) target = $region112
        $region111: #{predicate_level_encoder.1} parent=67 // pred_region
          %630 = dma.done [#allocation18], 256
        $region112: #{predicate_level_encoder.1} parent=67 // pred_fallthru
          _
        // Predicated region
        $region113: #{predicate_level_encoder.1} parent=67 // pred_check
          %p631 = pneg %p305
        $region114: #{predicate_level_encoder.1} parent=67 // pred_check_branch
          %633 = sbr.rel (%p631) target = $region116
        $region115: #{predicate_level_encoder.1} parent=67 // pred_region
          %634 = dma.done [#allocation21], 16
        $region116: #{predicate_level_encoder.1} parent=67 // pred_fallthru
          _
        %s635 = sand.u32 %s51, 1
        %s636 = scalar_lea.sflag [#allocation3], %s635
        %s637 = sand.u32 %s51, 1
        %s638 = smul.addr %s637, 8
        %s639 = scalar_lea.vmem [#allocation2], %s638
        %p640 = pneg %p64
        %p641 = pneg %p61
        %s642 = sand.u32 %s43, 1
        %s643 = scalar_lea.sflag [#allocation6], %s642
        %s644 = sand.u32 %s77, 1
        %s645 = smul.addr %s644, 8
        %s646 = scalar_lea.vmem [#allocation5], %s645
        %p647 = pneg %p90
        %p648 = pneg %p87
        %s649 = sand.u32 %s43, 1
        %s650 = scalar_lea.sflag [#allocation6], %s649
        %s651 = sand.u32 %s103, 1
        %s652 = scalar_lea.vmem [#allocation7], %s651
        %p653 = pneg %p116
        %p654 = pneg %p113
        %p655 = pneg %p137
        %p656 = pneg %p134
        %p657 = pneg %p158
        %p658 = pneg %p155
        %p659 = pneg %p179
        %p660 = pneg %p176
        %p661 = pneg %p200
        %p662 = pneg %p197
        %p663 = pneg %p221
        %p664 = pneg %p218
        %p665 = pneg %p242
        %p666 = pneg %p239
        %p667 = pneg %p263
        %p668 = pneg %p260
        %p669 = pneg %p284
        %p670 = pneg %p281
        %p671 = pneg %p305
        %p672 = pneg %p302
        %p673 = pneg %p331
        %p674 = pneg %p328
        %s675 = sand.u32 %s318, 1
        %s676 = scalar_lea.sflag [#allocation4], %s675
        %s677 = sand.u32 %s318, 1
        %s678 = scalar_lea.vmem [#allocation22], %s677
        %p679 = pneg %p357
        %p680 = pneg %p354
        %s681 = sand.u32 %s43, 1
        %s682 = scalar_lea.sflag [#allocation24], %s681
        %s683 = sand.u32 %s344, 1
        %s684 = scalar_lea.vmem [#allocation23], %s683
        %p685 = pneg %p383
        %p686 = pneg %p380
        %s687 = sand.u32 %s43, 1
        %s688 = scalar_lea.sflag [#allocation24], %s687
        %s689 = sand.u32 %s370, 1
        %s690 = scalar_lea.vmem [#allocation25], %s689
        %v692 = vld [vmem:[#allocation13] sm:$0x1]
        %v693 = vld [vmem:[#allocation13 + $0x1] sm:$0x1]
        %v694 = vld [vmem:[#allocation13 + $0x2] sm:$0x1]
        %v695 = vld [vmem:[#allocation13 + $0x3] sm:$0x1]
        %v696 = vld [vmem:[#allocation16] sm:$0xf]
        %v697 = vld [vmem:[#allocation16 + $0x4] sm:$0xf]
        %s698 = scalar_lea.vmem [#allocation16], 8
        %v699 = vld [vmem:[%s698] sm:$0xf]
        %v700 = vld [vmem:[%s698 + $0x4] sm:$0xf]
        %v701 = vld [vmem:[%s577] sm:$0xff]
        %v702 = vpack.c.bf16 %v701, %v701
        %v703 = vld [vmem:[#allocation8] sm:$0xf]
        %v704 = vld [vmem:[#allocation8 + $0x4] sm:$0xf]
        %v705 = vlaneseq
        %v706 = vshrl.u32 %v705, 7
        %v707 = vsub.s32 0, %v706
        %v708 = vrot.slane %v692, %v707
        %v711 = vunpack.c.l.b16 %v703
        %v712 = vunpack.c.l.b16 %v704
        %v713 = vpack.c.b16 %v712, %v711
        %vm715 = vcmask 130048
        %v717 = vsel %vm715, %v702, 0
        %719 = vmatprep.subr.bf16.mxu0 0
        %720 = vmatpush1.bf16.msra.mxu0 %v713
        %721 = vmatprep.subr.bf16.mxu0 0
        %722 = vmatpush1.bf16.msra.mxu0 0
        %723 = vmatprep.subr.bf16.mxu0 0
        %724 = vmatpush1.bf16.msra.mxu0 0
        %725 = vmatprep.subr.bf16.mxu0 0
        %726 = vmatpush1.bf16.msra.mxu0 0
        %727 = vmatprep.subr.bf16.mxu0 0
        %728 = vmatpush1.bf16.msra.mxu0 0
        %729 = vmatprep.subr.bf16.mxu0 0
        %730 = vmatpush1.bf16.msra.mxu0 0
        %731 = vmatprep.subr.bf16.mxu0 0
        %732 = vmatpush1.bf16.msra.mxu0 0
        %733 = vmatprep.subr.bf16.mxu0 0
        %734 = vmatpush1.bf16.msra.mxu0 0
        %735 = vmatprep.subr.bf16.mxu0 0
        %736 = vmatpush1.bf16.msra.mxu0 0
        %737 = vmatprep.subr.bf16.mxu0 0
        %738 = vmatpush1.bf16.msra.mxu0 0
        %739 = vmatprep.subr.bf16.mxu0 0
        %740 = vmatpush1.bf16.msra.mxu0 0
        %741 = vmatprep.subr.bf16.mxu0 0
        %742 = vmatpush1.bf16.msra.mxu0 0
        %743 = vmatprep.subr.bf16.mxu0 0
        %744 = vmatpush1.bf16.msra.mxu0 0
        %745 = vmatprep.subr.bf16.mxu0 0
        %746 = vmatpush1.bf16.msra.mxu0 0
        %747 = vmatprep.subr.bf16.mxu0 0
        %748 = vmatpush1.bf16.msra.mxu0 0
        %749 = vmatprep.subr.bf16.mxu0 0
        %750 = vmatpush1.bf16.msra.mxu0 0
        %751 = vmatprep.mubr.bf16.mxu0 0
        %752 = vmatmul.mubr.bf16.gmra.mrb[0].mxu0 %v717
        %v753 = vpop.f32.mrb[0].mxu0
        %v754 = vadd.f32 %v708, %v753
        %v755 = vpop.f32.mrb[0].mxu0
        %v756 = vpop.f32.mrb[0].mxu0
        %v757 = vpop.f32.mrb[0].mxu0
        %758 = vdwg.mxu0
        %v759 = vpack.c.bf16 %v754, %v754
        %v760 = vld [vmem:[#allocation10] sm:$0xf]
        %v761 = vld [vmem:[#allocation10 + $0x4] sm:$0xf]
        %v762 = vld [vmem:[#allocation10 + $0x8] sm:$0xf]
        %v763 = vld [vmem:[#allocation10 + $0xc] sm:$0xf]
        %v764 = vlaneseq
        %v765 = vshrl.u32 %v764, 7
        %v766 = vsub.s32 0, %v765
        %v767 = vrot.slane %v693, %v766
        %v772 = vunpack.c.l.b16 %v760
        %v773 = vunpack.c.l.b16 %v761
        %v774 = vunpack.c.l.b16 %v762
        %v775 = vunpack.c.l.b16 %v763
        %v776 = vpack.c.b16 %v773, %v772
        %v777 = vpack.c.b16 %v775, %v774
        %vm780 = vcmask 261120
        %v782 = vsel %vm780, %v759, 0
        %784 = vmatprep.subr.bf16.mxu0 0
        %785 = vmatpush1.bf16.msra.mxu0 %v776
        %786 = vmatprep.subr.bf16.mxu0 0
        %787 = vmatpush1.bf16.msra.mxu0 %v777
        %788 = vmatprep.subr.bf16.mxu0 0
        %789 = vmatpush1.bf16.msra.mxu0 0
        %790 = vmatprep.subr.bf16.mxu0 0
        %791 = vmatpush1.bf16.msra.mxu0 0
        %792 = vmatprep.subr.bf16.mxu0 0
        %793 = vmatpush1.bf16.msra.mxu0 0
        %794 = vmatprep.subr.bf16.mxu0 0
        %795 = vmatpush1.bf16.msra.mxu0 0
        %796 = vmatprep.subr.bf16.mxu0 0
        %797 = vmatpush1.bf16.msra.mxu0 0
        %798 = vmatprep.subr.bf16.mxu0 0
        %799 = vmatpush1.bf16.msra.mxu0 0
        %800 = vmatprep.subr.bf16.mxu0 0
        %801 = vmatpush1.bf16.msra.mxu0 0
        %802 = vmatprep.subr.bf16.mxu0 0
        %803 = vmatpush1.bf16.msra.mxu0 0
        %804 = vmatprep.subr.bf16.mxu0 0
        %805 = vmatpush1.bf16.msra.mxu0 0
        %806 = vmatprep.subr.bf16.mxu0 0
        %807 = vmatpush1.bf16.msra.mxu0 0
        %808 = vmatprep.subr.bf16.mxu0 0
        %809 = vmatpush1.bf16.msra.mxu0 0
        %810 = vmatprep.subr.bf16.mxu0 0
        %811 = vmatpush1.bf16.msra.mxu0 0
        %812 = vmatprep.subr.bf16.mxu0 0
        %813 = vmatpush1.bf16.msra.mxu0 0
        %814 = vmatprep.subr.bf16.mxu0 0
        %815 = vmatpush1.bf16.msra.mxu0 0
        %816 = vmatprep.mubr.bf16.mxu0 0
        %817 = vmatmul.mubr.bf16.gmra.mrb[0].mxu0 %v782
        %v818 = vpop.f32.mrb[0].mxu0
        %v819 = vadd.f32 %v767, %v818
        %v820 = vpop.f32.mrb[0].mxu0
        %v821 = vpop.f32.mrb[0].mxu0
        %v822 = vpop.f32.mrb[0].mxu0
        %823 = vdwg.mxu0
        %v824 = vld [vmem:[%s586] sm:$0xff]
        %v825 = vpack.c.bf16 %v824, %v824
        %v826 = vld [vmem:[#allocation11] sm:$0xf]
        %v827 = vld [vmem:[#allocation11 + $0x4] sm:$0xf]
        %v828 = vld [vmem:[#allocation11 + $0x8] sm:$0xf]
        %v829 = vld [vmem:[#allocation11 + $0xc] sm:$0xf]
        %v830 = vlaneseq
        %v831 = vshrl.u32 %v830, 7
        %v832 = vsub.s32 0, %v831
        %v833 = vrot.slane %v694, %v832
        %v838 = vunpack.c.l.b16 %v826
        %v839 = vunpack.c.l.b16 %v827
        %v840 = vunpack.c.l.b16 %v828
        %v841 = vunpack.c.l.b16 %v829
        %v842 = vpack.c.b16 %v839, %v838
        %v843 = vpack.c.b16 %v841, %v840
        %v847 = vsel %vm780, %v825, 0
        %849 = vmatprep.subr.bf16.mxu0 0
        %850 = vmatpush1.bf16.msra.mxu0 %v842
        %851 = vmatprep.subr.bf16.mxu0 0
        %852 = vmatpush1.bf16.msra.mxu0 %v843
        %853 = vmatprep.subr.bf16.mxu0 0
        %854 = vmatpush1.bf16.msra.mxu0 0
        %855 = vmatprep.subr.bf16.mxu0 0
        %856 = vmatpush1.bf16.msra.mxu0 0
        %857 = vmatprep.subr.bf16.mxu0 0
        %858 = vmatpush1.bf16.msra.mxu0 0
        %859 = vmatprep.subr.bf16.mxu0 0
        %860 = vmatpush1.bf16.msra.mxu0 0
        %861 = vmatprep.subr.bf16.mxu0 0
        %862 = vmatpush1.bf16.msra.mxu0 0
        %863 = vmatprep.subr.bf16.mxu0 0
        %864 = vmatpush1.bf16.msra.mxu0 0
        %865 = vmatprep.subr.bf16.mxu0 0
        %866 = vmatpush1.bf16.msra.mxu0 0
        %867 = vmatprep.subr.bf16.mxu0 0
        %868 = vmatpush1.bf16.msra.mxu0 0
        %869 = vmatprep.subr.bf16.mxu0 0
        %870 = vmatpush1.bf16.msra.mxu0 0
        %871 = vmatprep.subr.bf16.mxu0 0
        %872 = vmatpush1.bf16.msra.mxu0 0
        %873 = vmatprep.subr.bf16.mxu0 0
        %874 = vmatpush1.bf16.msra.mxu0 0
        %875 = vmatprep.subr.bf16.mxu0 0
        %876 = vmatpush1.bf16.msra.mxu0 0
        %877 = vmatprep.subr.bf16.mxu0 0
        %878 = vmatpush1.bf16.msra.mxu0 0
        %879 = vmatprep.subr.bf16.mxu0 0
        %880 = vmatpush1.bf16.msra.mxu0 0
        %881 = vmatprep.mubr.bf16.mxu0 0
        %882 = vmatmul.mubr.bf16.gmra.mrb[0].mxu0 %v847
        %v883 = vpop.f32.mrb[0].mxu0
        %v884 = vadd.f32 %v833, %v883
        %v885 = vpop.f32.mrb[0].mxu0
        %v886 = vpop.f32.mrb[0].mxu0
        %v887 = vpop.f32.mrb[0].mxu0
        %888 = vdwg.mxu0
        %v889 = vpack.c.bf16 %v884, %v884
        %v890 = vld [vmem:[%s594] sm:$0x1]
        %v891 = vmul.f32 %v890, 100000.0
        %v893 = vcombine.high %v819, %v819
        %v895 = vunpack.c.l.s4 1966171168
        %v896 = vunpack.c.0.s8 %v895
        %v897 = vlaneseq
        %v898 = vshrl.u32 %v897, 7
        %v899 = vsub.s32 %v896, %v898
        %v900 = vrot.slane %v819, %v899
        %v902 = vunpack.c.l.s4 1966171168
        %v903 = vunpack.c.0.s8 %v902
        %v904 = vlaneseq
        %v905 = vshrl.u32 %v904, 7
        %v906 = vsub.s32 %v903, %v905
        %v907 = vrot.slane %v893, %v906
        %v908 = vcombine.high %v900, %v900
        %v909 = vcombine.high %v907, %v907
        %v911 = vunpack.c.l.s4 1966171168
        %v912 = vunpack.c.0.s8 %v911
        %v913 = vlaneseq
        %v914 = vshrl.u32 %v913, 7
        %v915 = vsub.s32 %v912, %v914
        %v916 = vrot.slane %v900, %v915
        %v918 = vunpack.c.l.s4 1966171168
        %v919 = vunpack.c.0.s8 %v918
        %v920 = vlaneseq
        %v921 = vshrl.u32 %v920, 7
        %v922 = vsub.s32 %v919, %v921
        %v923 = vrot.slane %v907, %v922
        %v925 = vunpack.c.l.s4 1966171168
        %v926 = vunpack.c.0.s8 %v925
        %v927 = vlaneseq
        %v928 = vshrl.u32 %v927, 7
        %v929 = vsub.s32 %v926, %v928
        %v930 = vrot.slane %v908, %v929
        %v932 = vunpack.c.l.s4 1966171168
        %v933 = vunpack.c.0.s8 %v932
        %v934 = vlaneseq
        %v935 = vshrl.u32 %v934, 7
        %v936 = vsub.s32 %v933, %v935
        %v937 = vrot.slane %v909, %v936
        %v938 = vcombine.high %v916, %v916
        %v939 = vcombine.high %v923, %v923
        %v940 = vcombine.high %v930, %v930
        %v941 = vcombine.high %v937, %v937
        %v942 = vlaneseq
        %v943 = vshrl.u32 %v942, 7
        %v944 = vsub.s32 0, %v943
        %v945 = vrot.slane %v916, %v944
        %v946 = vlaneseq
        %v947 = vshrl.u32 %v946, 7
        %v948 = vsub.s32 0, %v947
        %v949 = vrot.slane %v930, %v948
        %v950 = vlaneseq
        %v951 = vshrl.u32 %v950, 7
        %v952 = vsub.s32 0, %v951
        %v953 = vrot.slane %v938, %v952
        %v954 = vlaneseq
        %v955 = vshrl.u32 %v954, 7
        %v956 = vsub.s32 0, %v955
        %v957 = vrot.slane %v940, %v956
        %v958 = vlaneseq
        %v959 = vshrl.u32 %v958, 7
        %v960 = vsub.s32 0, %v959
        %v961 = vrot.slane %v923, %v960
        %v962 = vlaneseq
        %v963 = vshrl.u32 %v962, 7
        %v964 = vsub.s32 0, %v963
        %v965 = vrot.slane %v937, %v964
        %v966 = vlaneseq
        %v967 = vshrl.u32 %v966, 7
        %v968 = vsub.s32 0, %v967
        %v969 = vrot.slane %v939, %v968
        %v970 = vlaneseq
        %v971 = vshrl.u32 %v970, 7
        %v972 = vsub.s32 0, %v971
        %v973 = vrot.slane %v941, %v972
        %v982 = vadd.f32 %v945, %v884
        %v983 = vadd.f32 %v949, %v884
        %v984 = vadd.f32 %v953, %v884
        %v985 = vadd.f32 %v957, %v884
        %v986 = vadd.f32 %v961, %v884
        %v987 = vadd.f32 %v965, %v884
        %v988 = vadd.f32 %v969, %v884
        %v989 = vadd.f32 %v973, %v884
        %v990 = vtanh.pop %v982
        %v991 = vtanh.pop %v983
        %v992 = vtanh.pop %v984
        %v993 = vtanh.pop %v985
        %v994 = vtanh.pop %v986
        %v995 = vtanh.pop %v987
        %v996 = vtanh.pop %v988
        %v997 = vtanh.pop %v989
        %v998 = vlaneseq
        %v999 = vshrl.u32 %v998, 7
        %v1000 = vsub.s32 0, %v999
        %v1001 = vrot.slane %v695, %v1000
        %v1002 = vmul.f32 %v990, %v1001
        %v1003 = vmul.f32 %v991, %v1001
        %v1004 = vmul.f32 %v992, %v1001
        %v1005 = vmul.f32 %v993, %v1001
        %v1006 = vmul.f32 %v994, %v1001
        %v1007 = vmul.f32 %v995, %v1001
        %v1008 = vmul.f32 %v996, %v1001
        %v1009 = vmul.f32 %v997, %v1001
        %v1010 = vsel %vm780, %v1002, 0.0
        %1011 = vadd.xlane.f32.xlu0 %v1010
        %v1012 = vpop.xlane.xlu0 %1011
        %v1013 = vsel %vm780, %v1003, 0.0
        %1014 = vadd.xlane.f32.xlu0 %v1013
        %v1015 = vpop.xlane.xlu0 %1014
        %v1016 = vsel %vm780, %v1004, 0.0
        %1017 = vadd.xlane.f32.xlu0 %v1016
        %v1018 = vpop.xlane.xlu0 %1017
        %v1019 = vsel %vm780, %v1005, 0.0
        %1020 = vadd.xlane.f32.xlu0 %v1019
        %v1021 = vpop.xlane.xlu0 %1020
        %v1022 = vsel %vm780, %v1006, 0.0
        %1023 = vadd.xlane.f32.xlu0 %v1022
        %v1024 = vpop.xlane.xlu0 %1023
        %v1025 = vsel %vm780, %v1007, 0.0
        %1026 = vadd.xlane.f32.xlu0 %v1025
        %v1027 = vpop.xlane.xlu0 %1026
        %v1028 = vsel %vm780, %v1008, 0.0
        %1029 = vadd.xlane.f32.xlu0 %v1028
        %v1030 = vpop.xlane.xlu0 %1029
        %v1031 = vsel %vm780, %v1009, 0.0
        %1032 = vadd.xlane.f32.xlu0 %v1031
        %v1033 = vpop.xlane.xlu0 %1032
        %v1035 = vlaneseq
        %v1036 = vshrl.u32 %v1035, 7
        %v1037 = vsub.s32 0, %v1036
        %v1038 = vrot.slane %v891, %v1037
        %1040 = vbcast.lane.b32.xlu0 %v1038, 256
        %v1041 = vpop.permute.xlu0 %1040
        %v1043 = vsub.f32 %v1012, %v1041
        %v1044 = vsub.f32 %v1015, %v1041
        %v1045 = vsub.f32 %v1018, %v1041
        %v1046 = vsub.f32 %v1021, %v1041
        %v1047 = vsub.f32 %v1024, %v1041
        %v1048 = vsub.f32 %v1027, %v1041
        %v1049 = vsub.f32 %v1030, %v1041
        %v1050 = vsub.f32 %v1033, %v1041
        %1059 = vset.pattern.permute.xlu0 0
        %1060 = vperm.xlu0 %1059, %v1043
        %v1061 = vpop.permute.xlu0 %1060
        %1062 = vset.pattern.permute.xlu0 0
        %1063 = vperm.xlu0 %1062, %v1044
        %v1064 = vpop.permute.xlu0 %1063
        %1065 = vset.pattern.permute.xlu0 0
        %1066 = vperm.xlu0 %1065, %v1045
        %v1067 = vpop.permute.xlu0 %1066
        %1068 = vset.pattern.permute.xlu0 0
        %1069 = vperm.xlu0 %1068, %v1046
        %v1070 = vpop.permute.xlu0 %1069
        %1071 = vset.pattern.permute.xlu0 0
        %1072 = vperm.xlu0 %1071, %v1047
        %v1073 = vpop.permute.xlu0 %1072
        %1074 = vset.pattern.permute.xlu0 0
        %1075 = vperm.xlu0 %1074, %v1048
        %v1076 = vpop.permute.xlu0 %1075
        %1077 = vset.pattern.permute.xlu0 0
        %1078 = vperm.xlu0 %1077, %v1049
        %v1079 = vpop.permute.xlu0 %1078
        %1080 = vset.pattern.permute.xlu0 0
        %1081 = vperm.xlu0 %1080, %v1050
        %v1082 = vpop.permute.xlu0 %1081
        %v1083 = vlaneseq
        %v1084 = vand.u32 %v1083, 127
        %v1085 = vlaneseq
        %v1086 = vshrl.u32 %v1085, 7
        %v1087 = vsub.s32 %v1084, %v1086
        %v1088 = vrot.slane %v1061, %v1087
        %v1089 = vlaneseq
        %v1090 = vshrl.u32 %v1089, 7
        %v1091 = vsub.s32 %v1084, %v1090
        %v1092 = vrot.slane %v1064, %v1091
        %v1093 = vlaneseq
        %v1094 = vshrl.u32 %v1093, 7
        %v1095 = vsub.s32 %v1084, %v1094
        %v1096 = vrot.slane %v1067, %v1095
        %v1097 = vlaneseq
        %v1098 = vshrl.u32 %v1097, 7
        %v1099 = vsub.s32 %v1084, %v1098
        %v1100 = vrot.slane %v1070, %v1099
        %v1101 = vlaneseq
        %v1102 = vshrl.u32 %v1101, 7
        %v1103 = vsub.s32 %v1084, %v1102
        %v1104 = vrot.slane %v1073, %v1103
        %v1105 = vlaneseq
        %v1106 = vshrl.u32 %v1105, 7
        %v1107 = vsub.s32 %v1084, %v1106
        %v1108 = vrot.slane %v1076, %v1107
        %v1109 = vlaneseq
        %v1110 = vshrl.u32 %v1109, 7
        %v1111 = vsub.s32 %v1084, %v1110
        %v1112 = vrot.slane %v1079, %v1111
        %v1113 = vlaneseq
        %v1114 = vshrl.u32 %v1113, 7
        %v1115 = vsub.s32 %v1084, %v1114
        %v1116 = vrot.slane %v1082, %v1115
        %vm1117 = vcmask 1041409
        %v1118 = vsel %vm1117, %v1092, %v1088
        %vm1119 = vcmask 1042434
        %v1120 = vsel %vm1119, %v1096, %v1118
        %vm1121 = vcmask 1043459
        %v1122 = vsel %vm1121, %v1100, %v1120
        %vm1123 = vcmask 1044484
        %v1124 = vsel %vm1123, %v1104, %v1122
        %vm1125 = vcmask 1045509
        %v1126 = vsel %vm1125, %v1108, %v1124
        %vm1127 = vcmask 1046534
        %v1128 = vsel %vm1127, %v1112, %v1126
        %vm1129 = vcmask 1047559
        %v1130 = vsel %vm1129, %v1116, %v1128
        %vm1132 = vcmask 64512
        %v1133 = vsel %vm1132, %v1130, -inf
        %1134 = vmax.xlane.f32.xlu0 %v1133
        %v1135 = vpop.xlane.xlu0 %1134
        %v1137 = vlaneseq
        %v1138 = vshrl.u32 %v1137, 7
        %v1139 = vsub.s32 0, %v1138
        %v1140 = vrot.slane %v1135, %v1139
        %v1141 = vlaneseq
        %v1142 = vshrl.u32 %v1141, 7
        %v1143 = vsub.s32 1, %v1142
        %v1144 = vrot.slane %v1135, %v1143
        %v1145 = vlaneseq
        %v1146 = vshrl.u32 %v1145, 7
        %v1147 = vsub.s32 2, %v1146
        %v1148 = vrot.slane %v1135, %v1147
        %v1149 = vlaneseq
        %v1150 = vshrl.u32 %v1149, 7
        %v1151 = vsub.s32 3, %v1150
        %v1152 = vrot.slane %v1135, %v1151
        %v1153 = vlaneseq
        %v1154 = vshrl.u32 %v1153, 7
        %v1155 = vsub.s32 4, %v1154
        %v1156 = vrot.slane %v1135, %v1155
        %v1157 = vlaneseq
        %v1158 = vshrl.u32 %v1157, 7
        %v1159 = vsub.s32 5, %v1158
        %v1160 = vrot.slane %v1135, %v1159
        %v1161 = vlaneseq
        %v1162 = vshrl.u32 %v1161, 7
        %v1163 = vsub.s32 6, %v1162
        %v1164 = vrot.slane %v1135, %v1163
        %v1165 = vlaneseq
        %v1166 = vshrl.u32 %v1165, 7
        %v1167 = vsub.s32 7, %v1166
        %v1168 = vrot.slane %v1135, %v1167
        %v1177 = vsub.f32 %v1043, %v1140
        %v1178 = vsub.f32 %v1044, %v1144
        %v1179 = vsub.f32 %v1045, %v1148
        %v1180 = vsub.f32 %v1046, %v1152
        %v1181 = vsub.f32 %v1047, %v1156
        %v1182 = vsub.f32 %v1048, %v1160
        %v1183 = vsub.f32 %v1049, %v1164
        %v1184 = vsub.f32 %v1050, %v1168
        %v1185 = vmul.f32 %v1177, 1.442695
        %v1186 = vpow.pop %v1185
        %v1187 = vmul.f32 %v1178, 1.442695
        %v1188 = vpow.pop %v1187
        %v1189 = vmul.f32 %v1179, 1.442695
        %v1190 = vpow.pop %v1189
        %v1191 = vmul.f32 %v1180, 1.442695
        %v1192 = vpow.pop %v1191
        %v1193 = vmul.f32 %v1181, 1.442695
        %v1194 = vpow.pop %v1193
        %v1195 = vmul.f32 %v1182, 1.442695
        %v1196 = vpow.pop %v1195
        %v1197 = vmul.f32 %v1183, 1.442695
        %v1198 = vpow.pop %v1197
        %v1199 = vmul.f32 %v1184, 1.442695
        %v1200 = vpow.pop %v1199
        %1209 = vset.pattern.permute.xlu0 0
        %1210 = vperm.xlu0 %1209, %v1186
        %v1211 = vpop.permute.xlu0 %1210
        %1212 = vset.pattern.permute.xlu0 0
        %1213 = vperm.xlu0 %1212, %v1188
        %v1214 = vpop.permute.xlu0 %1213
        %1215 = vset.pattern.permute.xlu0 0
        %1216 = vperm.xlu0 %1215, %v1190
        %v1217 = vpop.permute.xlu0 %1216
        %1218 = vset.pattern.permute.xlu0 0
        %1219 = vperm.xlu0 %1218, %v1192
        %v1220 = vpop.permute.xlu0 %1219
        %1221 = vset.pattern.permute.xlu0 0
        %1222 = vperm.xlu0 %1221, %v1194
        %v1223 = vpop.permute.xlu0 %1222
        %1224 = vset.pattern.permute.xlu0 0
        %1225 = vperm.xlu0 %1224, %v1196
        %v1226 = vpop.permute.xlu0 %1225
        %1227 = vset.pattern.permute.xlu0 0
        %1228 = vperm.xlu0 %1227, %v1198
        %v1229 = vpop.permute.xlu0 %1228
        %1230 = vset.pattern.permute.xlu0 0
        %1231 = vperm.xlu0 %1230, %v1200
        %v1232 = vpop.permute.xlu0 %1231
        %v1233 = vlaneseq
        %v1234 = vshrl.u32 %v1233, 7
        %v1235 = vsub.s32 %v1084, %v1234
        %v1236 = vrot.slane %v1211, %v1235
        %v1237 = vlaneseq
        %v1238 = vshrl.u32 %v1237, 7
        %v1239 = vsub.s32 %v1084, %v1238
        %v1240 = vrot.slane %v1214, %v1239
        %v1241 = vlaneseq
        %v1242 = vshrl.u32 %v1241, 7
        %v1243 = vsub.s32 %v1084, %v1242
        %v1244 = vrot.slane %v1217, %v1243
        %v1245 = vlaneseq
        %v1246 = vshrl.u32 %v1245, 7
        %v1247 = vsub.s32 %v1084, %v1246
        %v1248 = vrot.slane %v1220, %v1247
        %v1249 = vlaneseq
        %v1250 = vshrl.u32 %v1249, 7
        %v1251 = vsub.s32 %v1084, %v1250
        %v1252 = vrot.slane %v1223, %v1251
        %v1253 = vlaneseq
        %v1254 = vshrl.u32 %v1253, 7
        %v1255 = vsub.s32 %v1084, %v1254
        %v1256 = vrot.slane %v1226, %v1255
        %v1257 = vlaneseq
        %v1258 = vshrl.u32 %v1257, 7
        %v1259 = vsub.s32 %v1084, %v1258
        %v1260 = vrot.slane %v1229, %v1259
        %v1261 = vlaneseq
        %v1262 = vshrl.u32 %v1261, 7
        %v1263 = vsub.s32 %v1084, %v1262
        %v1264 = vrot.slane %v1232, %v1263
        %v1265 = vsel %vm1117, %v1240, %v1236
        %v1266 = vsel %vm1119, %v1244, %v1265
        %v1267 = vsel %vm1121, %v1248, %v1266
        %v1268 = vsel %vm1123, %v1252, %v1267
        %v1269 = vsel %vm1125, %v1256, %v1268
        %v1270 = vsel %vm1127, %v1260, %v1269
        %v1271 = vsel %vm1129, %v1264, %v1270
        %v1273 = vsel %vm1132, %v1271, 0.0
        %1274 = vadd.xlane.f32.xlu0 %v1273
        %v1275 = vpop.xlane.xlu0 %1274
        %v1276 = vrcp.pop %v1275
        %v1277 = vpack.c.bf16 %v1186, %v1186
        %v1278 = vpack.c.bf16 %v1188, %v1188
        %v1279 = vpack.c.bf16 %v1190, %v1190
        %v1280 = vpack.c.bf16 %v1192, %v1192
        %v1281 = vpack.c.bf16 %v1194, %v1194
        %v1282 = vpack.c.bf16 %v1196, %v1196
        %v1283 = vpack.c.bf16 %v1198, %v1198
        %v1284 = vpack.c.bf16 %v1200, %v1200
        %v1293 = vunpack.c.l.b16 %v1277
        %v1294 = vunpack.c.l.b16 %v1278
        %v1295 = vunpack.c.l.b16 %v1279
        %v1296 = vunpack.c.l.b16 %v1280
        %v1297 = vunpack.c.l.b16 %v1281
        %v1298 = vunpack.c.l.b16 %v1282
        %v1299 = vunpack.c.l.b16 %v1283
        %v1300 = vunpack.c.l.b16 %v1284
        %1301 = vset.pattern.permute.xlu0 0
        %1302 = vperm.xlu0 %1301, %v1293
        %v1303 = vpop.permute.xlu0 %1302
        %1304 = vset.pattern.permute.xlu0 0
        %1305 = vperm.xlu0 %1304, %v1294
        %v1306 = vpop.permute.xlu0 %1305
        %1307 = vset.pattern.permute.xlu0 0
        %1308 = vperm.xlu0 %1307, %v1295
        %v1309 = vpop.permute.xlu0 %1308
        %1310 = vset.pattern.permute.xlu0 0
        %1311 = vperm.xlu0 %1310, %v1296
        %v1312 = vpop.permute.xlu0 %1311
        %1313 = vset.pattern.permute.xlu0 0
        %1314 = vperm.xlu0 %1313, %v1297
        %v1315 = vpop.permute.xlu0 %1314
        %1316 = vset.pattern.permute.xlu0 0
        %1317 = vperm.xlu0 %1316, %v1298
        %v1318 = vpop.permute.xlu0 %1317
        %1319 = vset.pattern.permute.xlu0 0
        %1320 = vperm.xlu0 %1319, %v1299
        %v1321 = vpop.permute.xlu0 %1320
        %1322 = vset.pattern.permute.xlu0 0
        %1323 = vperm.xlu0 %1322, %v1300
        %v1324 = vpop.permute.xlu0 %1323
        %v1325 = vlaneseq
        %v1326 = vshrl.u32 %v1325, 7
        %v1327 = vsub.s32 %v1084, %v1326
        %v1328 = vrot.slane %v1303, %v1327
        %v1329 = vlaneseq
        %v1330 = vshrl.u32 %v1329, 7
        %v1331 = vsub.s32 %v1084, %v1330
        %v1332 = vrot.slane %v1306, %v1331
        %v1333 = vlaneseq
        %v1334 = vshrl.u32 %v1333, 7
        %v1335 = vsub.s32 %v1084, %v1334
        %v1336 = vrot.slane %v1309, %v1335
        %v1337 = vlaneseq
        %v1338 = vshrl.u32 %v1337, 7
        %v1339 = vsub.s32 %v1084, %v1338
        %v1340 = vrot.slane %v1312, %v1339
        %v1341 = vlaneseq
        %v1342 = vshrl.u32 %v1341, 7
        %v1343 = vsub.s32 %v1084, %v1342
        %v1344 = vrot.slane %v1315, %v1343
        %v1345 = vlaneseq
        %v1346 = vshrl.u32 %v1345, 7
        %v1347 = vsub.s32 %v1084, %v1346
        %v1348 = vrot.slane %v1318, %v1347
        %v1349 = vlaneseq
        %v1350 = vshrl.u32 %v1349, 7
        %v1351 = vsub.s32 %v1084, %v1350
        %v1352 = vrot.slane %v1321, %v1351
        %v1353 = vlaneseq
        %v1354 = vshrl.u32 %v1353, 7
        %v1355 = vsub.s32 %v1084, %v1354
        %v1356 = vrot.slane %v1324, %v1355
        %v1357 = vsel %vm1117, %v1332, %v1328
        %v1358 = vsel %vm1119, %v1336, %v1357
        %v1359 = vsel %vm1121, %v1340, %v1358
        %v1360 = vsel %vm1123, %v1344, %v1359
        %v1361 = vsel %vm1125, %v1348, %v1360
        %v1362 = vsel %vm1127, %v1352, %v1361
        %v1363 = vsel %vm1129, %v1356, %v1362
        %v1364 = vpack.c.b16 %v1363, %v1363
        %v1366 = vsel %vm1132, %v1364, 0
        %vm1368 = vcmask 1043456
        %v1370 = vsel %vm1368, %v889, 0
        %1372 = vmatprep.subr.bf16.mxu0 0
        %1373 = vmatpush1.bf16.msra.mxu0 %v1370
        %1374 = vmatprep.subr.bf16.mxu0 0
        %1375 = vmatpush1.bf16.msra.mxu0 0
        %1376 = vmatprep.subr.bf16.mxu0 0
        %1377 = vmatpush1.bf16.msra.mxu0 0
        %1378 = vmatprep.subr.bf16.mxu0 0
        %1379 = vmatpush1.bf16.msra.mxu0 0
        %1380 = vmatprep.subr.bf16.mxu0 0
        %1381 = vmatpush1.bf16.msra.mxu0 0
        %1382 = vmatprep.subr.bf16.mxu0 0
        %1383 = vmatpush1.bf16.msra.mxu0 0
        %1384 = vmatprep.subr.bf16.mxu0 0
        %1385 = vmatpush1.bf16.msra.mxu0 0
        %1386 = vmatprep.subr.bf16.mxu0 0
        %1387 = vmatpush1.bf16.msra.mxu0 0
        %1388 = vmatprep.subr.bf16.mxu0 0
        %1389 = vmatpush1.bf16.msra.mxu0 0
        %1390 = vmatprep.subr.bf16.mxu0 0
        %1391 = vmatpush1.bf16.msra.mxu0 0
        %1392 = vmatprep.subr.bf16.mxu0 0
        %1393 = vmatpush1.bf16.msra.mxu0 0
        %1394 = vmatprep.subr.bf16.mxu0 0
        %1395 = vmatpush1.bf16.msra.mxu0 0
        %1396 = vmatprep.subr.bf16.mxu0 0
        %1397 = vmatpush1.bf16.msra.mxu0 0
        %1398 = vmatprep.subr.bf16.mxu0 0
        %1399 = vmatpush1.bf16.msra.mxu0 0
        %1400 = vmatprep.subr.bf16.mxu0 0
        %1401 = vmatpush1.bf16.msra.mxu0 0
        %1402 = vmatprep.subr.bf16.mxu0 0
        %1403 = vmatpush1.bf16.msra.mxu0 0
        %1404 = vmatprep.mubr.bf16.mxu0 0
        %1405 = vmatmul.mubr.bf16.gmra.mrb[0].mxu0 %v1366
        %v1406 = vpop.f32.mrb[0].mxu0
        %v1407 = vadd.f32 0.0, %v1406
        %v1408 = vpop.f32.mrb[0].mxu0
        %v1409 = vpop.f32.mrb[0].mxu0
        %v1410 = vpop.f32.mrb[0].mxu0
        %1411 = vdwg.mxu0
        %v1412 = vmul.f32 %v1407, %v1276
        %v1413 = vadd.f32 %v819, %v1412
        %v1414 = vld [vmem:[#allocation14] sm:$0xf]
        %v1415 = vld [vmem:[#allocation14 + $0x4] sm:$0xf]
        %v1416 = vld [vmem:[#allocation14 + $0x8] sm:$0xf]
        %v1417 = vld [vmem:[#allocation14 + $0xc] sm:$0xf]
        %v1418 = vld [vmem:[#allocation14 + $0x10] sm:$0xf]
        %v1419 = vld [vmem:[#allocation14 + $0x14] sm:$0xf]
        %v1420 = vld [vmem:[#allocation14 + $0x18] sm:$0xf]
        %v1421 = vld [vmem:[#allocation14 + $0x1c] sm:$0xf]
        %v1422 = vpack.c.bf16 %v1413, %v1413
        %v1427 = vunpack.c.l.b16 %v1418
        %v1428 = vunpack.c.l.b16 %v1419
        %v1429 = vunpack.c.l.b16 %v1420
        %v1430 = vunpack.c.l.b16 %v1421
        %v1431 = vpack.c.b16 %v1428, %v1427
        %v1432 = vpack.c.b16 %v1430, %v1429
        %v1436 = vsel %vm780, %v1422, 0
        %1438 = vmatprep.subr.bf16.mxu0 0
        %1439 = vmatpush1.bf16.msra.mxu0 %v1431
        %1440 = vmatprep.subr.bf16.mxu0 0
        %1441 = vmatpush1.bf16.msra.mxu0 %v1432
        %1442 = vmatprep.subr.bf16.mxu0 0
        %1443 = vmatpush1.bf16.msra.mxu0 0
        %1444 = vmatprep.subr.bf16.mxu0 0
        %1445 = vmatpush1.bf16.msra.mxu0 0
        %1446 = vmatprep.subr.bf16.mxu0 0
        %1447 = vmatpush1.bf16.msra.mxu0 0
        %1448 = vmatprep.subr.bf16.mxu0 0
        %1449 = vmatpush1.bf16.msra.mxu0 0
        %1450 = vmatprep.subr.bf16.mxu0 0
        %1451 = vmatpush1.bf16.msra.mxu0 0
        %1452 = vmatprep.subr.bf16.mxu0 0
        %1453 = vmatpush1.bf16.msra.mxu0 0
        %1454 = vmatprep.subr.bf16.mxu0 0
        %1455 = vmatpush1.bf16.msra.mxu0 0
        %1456 = vmatprep.subr.bf16.mxu0 0
        %1457 = vmatpush1.bf16.msra.mxu0 0
        %1458 = vmatprep.subr.bf16.mxu0 0
        %1459 = vmatpush1.bf16.msra.mxu0 0
        %1460 = vmatprep.subr.bf16.mxu0 0
        %1461 = vmatpush1.bf16.msra.mxu0 0
        %1462 = vmatprep.subr.bf16.mxu0 0
        %1463 = vmatpush1.bf16.msra.mxu0 0
        %1464 = vmatprep.subr.bf16.mxu0 0
        %1465 = vmatpush1.bf16.msra.mxu0 0
        %1466 = vmatprep.subr.bf16.mxu0 0
        %1467 = vmatpush1.bf16.msra.mxu0 0
        %1468 = vmatprep.subr.bf16.mxu0 0
        %1469 = vmatpush1.bf16.msra.mxu0 0
        %1470 = vmatprep.mubr.bf16.mxu0 0
        %1471 = vmatmul.mubr.bf16.gmra.mrb[0].mxu0 %v1436
        %v1472 = vpop.f32.mrb[0].mxu0
        %v1473 = vadd.f32 0.0, %v1472
        %v1474 = vpop.f32.mrb[0].mxu0
        %v1475 = vpop.f32.mrb[0].mxu0
        %v1476 = vpop.f32.mrb[0].mxu0
        %1477 = vdwg.mxu0
        %v1482 = vunpack.c.l.b16 %v1414
        %v1483 = vunpack.c.l.b16 %v1415
        %v1484 = vunpack.c.l.b16 %v1416
        %v1485 = vunpack.c.l.b16 %v1417
        %v1486 = vpack.c.b16 %v1483, %v1482
        %v1487 = vpack.c.b16 %v1485, %v1484
        %1490 = vmatprep.subr.bf16.mxu0 0
        %1491 = vmatpush1.bf16.msra.mxu0 %v1486
        %1492 = vmatprep.subr.bf16.mxu0 0
        %1493 = vmatpush1.bf16.msra.mxu0 %v1487
        %1494 = vmatprep.subr.bf16.mxu0 0
        %1495 = vmatpush1.bf16.msra.mxu0 0
        %1496 = vmatprep.subr.bf16.mxu0 0
        %1497 = vmatpush1.bf16.msra.mxu0 0
        %1498 = vmatprep.subr.bf16.mxu0 0
        %1499 = vmatpush1.bf16.msra.mxu0 0
        %1500 = vmatprep.subr.bf16.mxu0 0
        %1501 = vmatpush1.bf16.msra.mxu0 0
        %1502 = vmatprep.subr.bf16.mxu0 0
        %1503 = vmatpush1.bf16.msra.mxu0 0
        %1504 = vmatprep.subr.bf16.mxu0 0
        %1505 = vmatpush1.bf16.msra.mxu0 0
        %1506 = vmatprep.subr.bf16.mxu0 0
        %1507 = vmatpush1.bf16.msra.mxu0 0
        %1508 = vmatprep.subr.bf16.mxu0 0
        %1509 = vmatpush1.bf16.msra.mxu0 0
        %1510 = vmatprep.subr.bf16.mxu0 0
        %1511 = vmatpush1.bf16.msra.mxu0 0
        %1512 = vmatprep.subr.bf16.mxu0 0
        %1513 = vmatpush1.bf16.msra.mxu0 0
        %1514 = vmatprep.subr.bf16.mxu0 0
        %1515 = vmatpush1.bf16.msra.mxu0 0
        %1516 = vmatprep.subr.bf16.mxu0 0
        %1517 = vmatpush1.bf16.msra.mxu0 0
        %1518 = vmatprep.subr.bf16.mxu0 0
        %1519 = vmatpush1.bf16.msra.mxu0 0
        %1520 = vmatprep.subr.bf16.mxu0 0
        %1521 = vmatpush1.bf16.msra.mxu0 0
        %1522 = vmatprep.mubr.bf16.mxu0 0
        %1523 = vmatmul.mubr.bf16.gmra.mrb[0].mxu0 %v782
        %v1524 = vpop.f32.mrb[0].mxu0
        %v1525 = vadd.f32 %v1473, %v1524
        %v1526 = vpop.f32.mrb[0].mxu0
        %v1527 = vpop.f32.mrb[0].mxu0
        %v1528 = vpop.f32.mrb[0].mxu0
        %1529 = vdwg.mxu0
        %v1530 = vld [vmem:[#allocation17] sm:$0x1]
        %v1532 = vlaneseq
        %v1533 = vshrl.u32 %v1532, 7
        %v1534 = vsub.s32 0, %v1533
        %v1535 = vrot.slane %v1530, %v1534
        %v1537 = vadd.f32 %v1525, %v1535
        %v1540 = vunpack.c.l.b16 %v696
        %v1541 = vunpack.c.l.b16 %v697
        %v1542 = vpack.c.b16 %v1541, %v1540
        %v1545 = vsel %vm715, 0, 0
        %1547 = vmatprep.subr.bf16.mxu0 0
        %1548 = vmatpush1.bf16.msra.mxu0 %v1542
        %1549 = vmatprep.subr.bf16.mxu0 0
        %1550 = vmatpush1.bf16.msra.mxu0 0
        %1551 = vmatprep.subr.bf16.mxu0 0
        %1552 = vmatpush1.bf16.msra.mxu0 0
        %1553 = vmatprep.subr.bf16.mxu0 0
        %1554 = vmatpush1.bf16.msra.mxu0 0
        %1555 = vmatprep.subr.bf16.mxu0 0
        %1556 = vmatpush1.bf16.msra.mxu0 0
        %1557 = vmatprep.subr.bf16.mxu0 0
        %1558 = vmatpush1.bf16.msra.mxu0 0
        %1559 = vmatprep.subr.bf16.mxu0 0
        %1560 = vmatpush1.bf16.msra.mxu0 0
        %1561 = vmatprep.subr.bf16.mxu0 0
        %1562 = vmatpush1.bf16.msra.mxu0 0
        %1563 = vmatprep.subr.bf16.mxu0 0
        %1564 = vmatpush1.bf16.msra.mxu0 0
        %1565 = vmatprep.subr.bf16.mxu0 0
        %1566 = vmatpush1.bf16.msra.mxu0 0
        %1567 = vmatprep.subr.bf16.mxu0 0
        %1568 = vmatpush1.bf16.msra.mxu0 0
        %1569 = vmatprep.subr.bf16.mxu0 0
        %1570 = vmatpush1.bf16.msra.mxu0 0
        %1571 = vmatprep.subr.bf16.mxu0 0
        %1572 = vmatpush1.bf16.msra.mxu0 0
        %1573 = vmatprep.subr.bf16.mxu0 0
        %1574 = vmatpush1.bf16.msra.mxu0 0
        %1575 = vmatprep.subr.bf16.mxu0 0
        %1576 = vmatpush1.bf16.msra.mxu0 0
        %1577 = vmatprep.subr.bf16.mxu0 0
        %1578 = vmatpush1.bf16.msra.mxu0 0
        %1579 = vmatprep.mubr.bf16.mxu0 0
        %1580 = vmatmul.mubr.bf16.gmra.mrb[0].mxu0 %v1545
        %v1581 = vpop.f32.mrb[0].mxu0
        %v1582 = vadd.f32 0.0, %v1581
        %v1583 = vpop.f32.mrb[0].mxu0
        %v1584 = vpop.f32.mrb[0].mxu0
        %v1585 = vpop.f32.mrb[0].mxu0
        %1586 = vdwg.mxu0
        %v1587 = vadd.f32 %v1537, %v1582
        %v1590 = vunpack.c.l.b16 %v699
        %v1591 = vunpack.c.l.b16 %v700
        %v1592 = vpack.c.b16 %v1591, %v1590
        %1594 = vmatprep.subr.bf16.mxu0 0
        %1595 = vmatpush1.bf16.msra.mxu0 %v1592
        %1596 = vmatprep.subr.bf16.mxu0 0
        %1597 = vmatpush1.bf16.msra.mxu0 0
        %1598 = vmatprep.subr.bf16.mxu0 0
        %1599 = vmatpush1.bf16.msra.mxu0 0
        %1600 = vmatprep.subr.bf16.mxu0 0
        %1601 = vmatpush1.bf16.msra.mxu0 0
        %1602 = vmatprep.subr.bf16.mxu0 0
        %1603 = vmatpush1.bf16.msra.mxu0 0
        %1604 = vmatprep.subr.bf16.mxu0 0
        %1605 = vmatpush1.bf16.msra.mxu0 0
        %1606 = vmatprep.subr.bf16.mxu0 0
        %1607 = vmatpush1.bf16.msra.mxu0 0
        %1608 = vmatprep.subr.bf16.mxu0 0
        %1609 = vmatpush1.bf16.msra.mxu0 0
        %1610 = vmatprep.subr.bf16.mxu0 0
        %1611 = vmatpush1.bf16.msra.mxu0 0
        %1612 = vmatprep.subr.bf16.mxu0 0
        %1613 = vmatpush1.bf16.msra.mxu0 0
        %1614 = vmatprep.subr.bf16.mxu0 0
        %1615 = vmatpush1.bf16.msra.mxu0 0
        %1616 = vmatprep.subr.bf16.mxu0 0
        %1617 = vmatpush1.bf16.msra.mxu0 0
        %1618 = vmatprep.subr.bf16.mxu0 0
        %1619 = vmatpush1.bf16.msra.mxu0 0
        %1620 = vmatprep.subr.bf16.mxu0 0
        %1621 = vmatpush1.bf16.msra.mxu0 0
        %1622 = vmatprep.subr.bf16.mxu0 0
        %1623 = vmatpush1.bf16.msra.mxu0 0
        %1624 = vmatprep.subr.bf16.mxu0 0
        %1625 = vmatpush1.bf16.msra.mxu0 0
        %1626 = vmatprep.mubr.bf16.mxu0 0
        %1627 = vmatmul.mubr.bf16.gmra.mrb[0].mxu0 %v1545
        %v1628 = vpop.f32.mrb[0].mxu0
        %v1629 = vadd.f32 0.0, %v1628
        %v1630 = vpop.f32.mrb[0].mxu0
        %v1631 = vpop.f32.mrb[0].mxu0
        %v1632 = vpop.f32.mrb[0].mxu0
        %1633 = vdwg.mxu0
        %v1635 = vrot.slane %v1629, 1
        %1636 = vrot.lane.b32.xlu0 %v1635, 64
        %v1637 = vpop.permute.xlu0 %1636
        %v1639 = vadd.f32 %v1537, %v1637
        %v1640 = vxor.u32 %v1587, 2147483648
        %v1641 = vmul.f32 %v1640, 1.442695
        %v1642 = vpow.pop %v1641
        %v1643 = vadd.f32 %v1642, 1.0
        %v1644 = vrcp.pop %v1643
        %v1645 = vmul.f32 1.0, %v1644
        %v1646 = vtanh.pop %v1587
        %v1647 = vmul.f32 %v1645, 0.0
        %1649 = vrot.lane.b32.xlu0 %v1646, 80
        %v1650 = vpop.permute.xlu0 %1649
        %v1652 = vmul.f32 %v1645, %v1650
        %1654 = vrot.lane.b32.xlu0 %v1652, 16
        %v1655 = vpop.permute.xlu0 %1654
        %v1657 = vadd.f32 %v1647, %v1655
        %v1658 = vtanh.pop %v1657
        %1660 = vrot.lane.b32.xlu0 %v1658, 16
        %v1661 = vpop.permute.xlu0 %1660
        %v1663 = vmul.f32 %v1645, %v1661
        %v1664 = vxor.u32 %v1639, 2147483648
        %v1665 = vmul.f32 %v1664, 1.442695
        %v1666 = vpow.pop %v1665
        %v1667 = vadd.f32 %v1666, 1.0
        %v1668 = vrcp.pop %v1667
        %v1669 = vmul.f32 1.0, %v1668
        %v1670 = vtanh.pop %v1639
        %v1671 = vmul.f32 %v1669, 0.0
        %1673 = vrot.lane.b32.xlu0 %v1670, 80
        %v1674 = vpop.permute.xlu0 %1673
        %v1676 = vmul.f32 %v1669, %v1674
        %1678 = vrot.lane.b32.xlu0 %v1676, 16
        %v1679 = vpop.permute.xlu0 %1678
        %v1681 = vadd.f32 %v1671, %v1679
        %v1682 = vtanh.pop %v1681
        %1684 = vrot.lane.b32.xlu0 %v1682, 16
        %v1685 = vpop.permute.xlu0 %1684
        %v1687 = vmul.f32 %v1669, %v1685
        %1689 = vrot.lane.b32.xlu0 %v1663, 96
        %v1690 = vpop.permute.xlu0 %1689
        %vm1692 = vcmask 122880
        %1693 = vst.msk [vmem:[%s678] sm:$0x1] %vm1692, %v1690
        %1695 = vrot.lane.b32.xlu0 %v1687, 16
        %v1696 = vpop.permute.xlu0 %1695
        %vm1698 = vcmask 1048455
        %1699 = vst.msk [vmem:[%s684 - $0x7] sm:$0x80] %vm1698, %v1696
        %v1700 = vpack.c.bf16 %v1663, %v1663
        %1702 = vrot.lane.b32.xlu0 %v1700, 96
        %v1703 = vpop.permute.xlu0 %1702
        %v1705 = vsel %vm715, %v1703, 0
        %1707 = vmatprep.subr.bf16.mxu0 0
        %1708 = vmatpush1.bf16.msra.mxu0 %v1542
        %1709 = vmatprep.subr.bf16.mxu0 0
        %1710 = vmatpush1.bf16.msra.mxu0 0
        %1711 = vmatprep.subr.bf16.mxu0 0
        %1712 = vmatpush1.bf16.msra.mxu0 0
        %1713 = vmatprep.subr.bf16.mxu0 0
        %1714 = vmatpush1.bf16.msra.mxu0 0
        %1715 = vmatprep.subr.bf16.mxu0 0
        %1716 = vmatpush1.bf16.msra.mxu0 0
        %1717 = vmatprep.subr.bf16.mxu0 0
        %1718 = vmatpush1.bf16.msra.mxu0 0
        %1719 = vmatprep.subr.bf16.mxu0 0
        %1720 = vmatpush1.bf16.msra.mxu0 0
        %1721 = vmatprep.subr.bf16.mxu0 0
        %1722 = vmatpush1.bf16.msra.mxu0 0
        %1723 = vmatprep.subr.bf16.mxu0 0
        %1724 = vmatpush1.bf16.msra.mxu0 0
        %1725 = vmatprep.subr.bf16.mxu0 0
        %1726 = vmatpush1.bf16.msra.mxu0 0
        %1727 = vmatprep.subr.bf16.mxu0 0
        %1728 = vmatpush1.bf16.msra.mxu0 0
        %1729 = vmatprep.subr.bf16.mxu0 0
        %1730 = vmatpush1.bf16.msra.mxu0 0
        %1731 = vmatprep.subr.bf16.mxu0 0
        %1732 = vmatpush1.bf16.msra.mxu0 0
        %1733 = vmatprep.subr.bf16.mxu0 0
        %1734 = vmatpush1.bf16.msra.mxu0 0
        %1735 = vmatprep.subr.bf16.mxu0 0
        %1736 = vmatpush1.bf16.msra.mxu0 0
        %1737 = vmatprep.subr.bf16.mxu0 0
        %1738 = vmatpush1.bf16.msra.mxu0 0
        %1739 = vmatprep.mubr.bf16.mxu0 0
        %1740 = vmatmul.mubr.bf16.gmra.mrb[0].mxu0 %v1705
        %v1741 = vpop.f32.mrb[0].mxu0
        %v1742 = vadd.f32 0.0, %v1741
        %v1743 = vpop.f32.mrb[0].mxu0
        %v1744 = vpop.f32.mrb[0].mxu0
        %v1745 = vpop.f32.mrb[0].mxu0
        %1746 = vdwg.mxu0
        %v1748 = vrot.slane %v1742, 7
        %v1750 = vadd.f32 %v1537, %v1748
        %v1751 = vpack.c.bf16 %v1687, %v1687
        %v1753 = vshrl.u32 %v1751, 16
        %v1755 = vrot.slane %v1753, 3
        %1756 = vrot.lane.b32.xlu0 %v1755, 32
        %v1757 = vpop.permute.xlu0 %1756
        %v1759 = vsel %vm715, %v1757, 0
        %1761 = vmatprep.subr.bf16.mxu0 0
        %1762 = vmatpush1.bf16.msra.mxu0 %v1592
        %1763 = vmatprep.subr.bf16.mxu0 0
        %1764 = vmatpush1.bf16.msra.mxu0 0
        %1765 = vmatprep.subr.bf16.mxu0 0
        %1766 = vmatpush1.bf16.msra.mxu0 0
        %1767 = vmatprep.subr.bf16.mxu0 0
        %1768 = vmatpush1.bf16.msra.mxu0 0
        %1769 = vmatprep.subr.bf16.mxu0 0
        %1770 = vmatpush1.bf16.msra.mxu0 0
        %1771 = vmatprep.subr.bf16.mxu0 0
        %1772 = vmatpush1.bf16.msra.mxu0 0
        %1773 = vmatprep.subr.bf16.mxu0 0
        %1774 = vmatpush1.bf16.msra.mxu0 0
        %1775 = vmatprep.subr.bf16.mxu0 0
        %1776 = vmatpush1.bf16.msra.mxu0 0
        %1777 = vmatprep.subr.bf16.mxu0 0
        %1778 = vmatpush1.bf16.msra.mxu0 0
        %1779 = vmatprep.subr.bf16.mxu0 0
        %1780 = vmatpush1.bf16.msra.mxu0 0
        %1781 = vmatprep.subr.bf16.mxu0 0
        %1782 = vmatpush1.bf16.msra.mxu0 0
        %1783 = vmatprep.subr.bf16.mxu0 0
        %1784 = vmatpush1.bf16.msra.mxu0 0
        %1785 = vmatprep.subr.bf16.mxu0 0
        %1786 = vmatpush1.bf16.msra.mxu0 0
        %1787 = vmatprep.subr.bf16.mxu0 0
        %1788 = vmatpush1.bf16.msra.mxu0 0
        %1789 = vmatprep.subr.bf16.mxu0 0
        %1790 = vmatpush1.bf16.msra.mxu0 0
        %1791 = vmatprep.subr.bf16.mxu0 0
        %1792 = vmatpush1.bf16.msra.mxu0 0
        %1793 = vmatprep.mubr.bf16.mxu0 0
        %1794 = vmatmul.mubr.bf16.gmra.mrb[0].mxu0 %v1759
        %v1795 = vpop.f32.mrb[0].mxu0
        %v1796 = vadd.f32 0.0, %v1795
        %v1797 = vpop.f32.mrb[0].mxu0
        %v1798 = vpop.f32.mrb[0].mxu0
        %v1799 = vpop.f32.mrb[0].mxu0
        %1800 = vdwg.mxu0
        %v1802 = vrot.slane %v1796, 2
        %1803 = vrot.lane.b32.xlu0 %v1802, 64
        %v1804 = vpop.permute.xlu0 %1803
        %v1806 = vadd.f32 %v1537, %v1804
        %v1807 = vxor.u32 %v1750, 2147483648
        %v1808 = vmul.f32 %v1807, 1.442695
        %v1809 = vpow.pop %v1808
        %v1810 = vadd.f32 %v1809, 1.0
        %v1811 = vrcp.pop %v1810
        %v1812 = vmul.f32 1.0, %v1811
        %v1813 = vtanh.pop %v1750
        %v1815 = vrot.slane %v1657, 7
        %v1817 = vmul.f32 %v1812, %v1815
        %1819 = vrot.lane.b32.xlu0 %v1813, 80
        %v1820 = vpop.permute.xlu0 %1819
        %v1822 = vmul.f32 %v1812, %v1820
        %1824 = vrot.lane.b32.xlu0 %v1822, 16
        %v1825 = vpop.permute.xlu0 %1824
        %v1827 = vadd.f32 %v1817, %v1825
        %v1828 = vtanh.pop %v1827
        %1830 = vrot.lane.b32.xlu0 %v1828, 16
        %v1831 = vpop.permute.xlu0 %1830
        %v1833 = vmul.f32 %v1812, %v1831
        %v1834 = vxor.u32 %v1806, 2147483648
        %v1835 = vmul.f32 %v1834, 1.442695
        %v1836 = vpow.pop %v1835
        %v1837 = vadd.f32 %v1836, 1.0
        %v1838 = vrcp.pop %v1837
        %v1839 = vmul.f32 1.0, %v1838
        %v1840 = vtanh.pop %v1806
        %v1842 = vrot.slane %v1681, 1
        %v1844 = vmul.f32 %v1839, %v1842
        %1846 = vrot.lane.b32.xlu0 %v1840, 80
        %v1847 = vpop.permute.xlu0 %1846
        %v1849 = vmul.f32 %v1839, %v1847
        %1851 = vrot.lane.b32.xlu0 %v1849, 16
        %v1852 = vpop.permute.xlu0 %1851
        %v1854 = vadd.f32 %v1844, %v1852
        %v1855 = vtanh.pop %v1854
        %1857 = vrot.lane.b32.xlu0 %v1855, 16
        %v1858 = vpop.permute.xlu0 %1857
        %v1860 = vmul.f32 %v1839, %v1858
        %1862 = vrot.lane.b32.xlu0 %v1833, 112
        %v1863 = vpop.permute.xlu0 %1862
        %vm1865 = vcmask 255105
        %1866 = vst.msk [vmem:[%s678 - $0x1] sm:$0x2] %vm1865, %v1863
        %vm1867 = vcmask 916230
        %1868 = vst.msk [vmem:[%s684 - $0x6] sm:$0x40] %vm1867, %v1860
        %v1869 = vrot.slane %v1833, 1
        %v1871 = vmax.f32 %v1663, %v1869
        %v1873 = vrot.slane %v1860, 7
        %v1875 = vmax.f32 %v1687, %v1873
        %v1876 = vpack.c.bf16 %v1833, %v1833
        %v1878 = vshrl.u32 %v1876, 16
        %1880 = vrot.lane.b32.xlu0 %v1878, 96
        %v1881 = vpop.permute.xlu0 %1880
        %v1883 = vsel %vm715, %v1881, 0
        %1885 = vmatprep.subr.bf16.mxu0 0
        %1886 = vmatpush1.bf16.msra.mxu0 %v1542
        %1887 = vmatprep.subr.bf16.mxu0 0
        %1888 = vmatpush1.bf16.msra.mxu0 0
        %1889 = vmatprep.subr.bf16.mxu0 0
        %1890 = vmatpush1.bf16.msra.mxu0 0
        %1891 = vmatprep.subr.bf16.mxu0 0
        %1892 = vmatpush1.bf16.msra.mxu0 0
        %1893 = vmatprep.subr.bf16.mxu0 0
        %1894 = vmatpush1.bf16.msra.mxu0 0
        %1895 = vmatprep.subr.bf16.mxu0 0
        %1896 = vmatpush1.bf16.msra.mxu0 0
        %1897 = vmatprep.subr.bf16.mxu0 0
        %1898 = vmatpush1.bf16.msra.mxu0 0
        %1899 = vmatprep.subr.bf16.mxu0 0
        %1900 = vmatpush1.bf16.msra.mxu0 0
        %1901 = vmatprep.subr.bf16.mxu0 0
        %1902 = vmatpush1.bf16.msra.mxu0 0
        %1903 = vmatprep.subr.bf16.mxu0 0
        %1904 = vmatpush1.bf16.msra.mxu0 0
        %1905 = vmatprep.subr.bf16.mxu0 0
        %1906 = vmatpush1.bf16.msra.mxu0 0
        %1907 = vmatprep.subr.bf16.mxu0 0
        %1908 = vmatpush1.bf16.msra.mxu0 0
        %1909 = vmatprep.subr.bf16.mxu0 0
        %1910 = vmatpush1.bf16.msra.mxu0 0
        %1911 = vmatprep.subr.bf16.mxu0 0
        %1912 = vmatpush1.bf16.msra.mxu0 0
        %1913 = vmatprep.subr.bf16.mxu0 0
        %1914 = vmatpush1.bf16.msra.mxu0 0
        %1915 = vmatprep.subr.bf16.mxu0 0
        %1916 = vmatpush1.bf16.msra.mxu0 0
        %1917 = vmatprep.mubr.bf16.mxu0 0
        %1918 = vmatmul.mubr.bf16.gmra.mrb[0].mxu0 %v1883
        %v1919 = vpop.f32.mrb[0].mxu0
        %v1920 = vadd.f32 0.0, %v1919
        %v1921 = vpop.f32.mrb[0].mxu0
        %v1922 = vpop.f32.mrb[0].mxu0
        %v1923 = vpop.f32.mrb[0].mxu0
        %1924 = vdwg.mxu0
        %v1926 = vrot.slane %v1920, 6
        %v1928 = vadd.f32 %v1537, %v1926
        %v1929 = vpack.c.bf16 %v1860, %v1860
        %v1931 = vrot.slane %v1929, 3
        %1932 = vrot.lane.b32.xlu0 %v1931, 32
        %v1933 = vpop.permute.xlu0 %1932
        %v1935 = vsel %vm715, %v1933, 0
        %1937 = vmatprep.subr.bf16.mxu0 0
        %1938 = vmatpush1.bf16.msra.mxu0 %v1592
        %1939 = vmatprep.subr.bf16.mxu0 0
        %1940 = vmatpush1.bf16.msra.mxu0 0
        %1941 = vmatprep.subr.bf16.mxu0 0
        %1942 = vmatpush1.bf16.msra.mxu0 0
        %1943 = vmatprep.subr.bf16.mxu0 0
        %1944 = vmatpush1.bf16.msra.mxu0 0
        %1945 = vmatprep.subr.bf16.mxu0 0
        %1946 = vmatpush1.bf16.msra.mxu0 0
        %1947 = vmatprep.subr.bf16.mxu0 0
        %1948 = vmatpush1.bf16.msra.mxu0 0
        %1949 = vmatprep.subr.bf16.mxu0 0
        %1950 = vmatpush1.bf16.msra.mxu0 0
        %1951 = vmatprep.subr.bf16.mxu0 0
        %1952 = vmatpush1.bf16.msra.mxu0 0
        %1953 = vmatprep.subr.bf16.mxu0 0
        %1954 = vmatpush1.bf16.msra.mxu0 0
        %1955 = vmatprep.subr.bf16.mxu0 0
        %1956 = vmatpush1.bf16.msra.mxu0 0
        %1957 = vmatprep.subr.bf16.mxu0 0
        %1958 = vmatpush1.bf16.msra.mxu0 0
        %1959 = vmatprep.subr.bf16.mxu0 0
        %1960 = vmatpush1.bf16.msra.mxu0 0
        %1961 = vmatprep.subr.bf16.mxu0 0
        %1962 = vmatpush1.bf16.msra.mxu0 0
        %1963 = vmatprep.subr.bf16.mxu0 0
        %1964 = vmatpush1.bf16.msra.mxu0 0
        %1965 = vmatprep.subr.bf16.mxu0 0
        %1966 = vmatpush1.bf16.msra.mxu0 0
        %1967 = vmatprep.subr.bf16.mxu0 0
        %1968 = vmatpush1.bf16.msra.mxu0 0
        %1969 = vmatprep.mubr.bf16.mxu0 0
        %1970 = vmatmul.mubr.bf16.gmra.mrb[0].mxu0 %v1935
        %v1971 = vpop.f32.mrb[0].mxu0
        %v1972 = vadd.f32 0.0, %v1971
        %v1973 = vpop.f32.mrb[0].mxu0
        %v1974 = vpop.f32.mrb[0].mxu0
        %v1975 = vpop.f32.mrb[0].mxu0
        %1976 = vdwg.mxu0
        %v1978 = vrot.slane %v1972, 3
        %1979 = vrot.lane.b32.xlu0 %v1978, 64
        %v1980 = vpop.permute.xlu0 %1979
        %v1982 = vadd.f32 %v1537, %v1980
        %v1983 = vxor.u32 %v1928, 2147483648
        %v1984 = vmul.f32 %v1983, 1.442695
        %v1985 = vpow.pop %v1984
        %v1986 = vadd.f32 %v1985, 1.0
        %v1987 = vrcp.pop %v1986
        %v1988 = vmul.f32 1.0, %v1987
        %v1989 = vtanh.pop %v1928
        %v1991 = vrot.slane %v1827, 7
        %v1993 = vmul.f32 %v1988, %v1991
        %1995 = vrot.lane.b32.xlu0 %v1989, 80
        %v1996 = vpop.permute.xlu0 %1995
        %v1998 = vmul.f32 %v1988, %v1996
        %2000 = vrot.lane.b32.xlu0 %v1998, 16
        %v2001 = vpop.permute.xlu0 %2000
        %v2003 = vadd.f32 %v1993, %v2001
        %v2004 = vtanh.pop %v2003
        %2006 = vrot.lane.b32.xlu0 %v2004, 16
        %v2007 = vpop.permute.xlu0 %2006
        %v2009 = vmul.f32 %v1988, %v2007
        %v2010 = vxor.u32 %v1982, 2147483648
        %v2011 = vmul.f32 %v2010, 1.442695
        %v2012 = vpow.pop %v2011
        %v2013 = vadd.f32 %v2012, 1.0
        %v2014 = vrcp.pop %v2013
        %v2015 = vmul.f32 1.0, %v2014
        %v2016 = vtanh.pop %v1982
        %v2018 = vrot.slane %v1854, 1
        %v2020 = vmul.f32 %v2015, %v2018
        %2022 = vrot.lane.b32.xlu0 %v2016, 80
        %v2023 = vpop.permute.xlu0 %2022
        %v2025 = vmul.f32 %v2015, %v2023
        %2027 = vrot.lane.b32.xlu0 %v2025, 16
        %v2028 = vpop.permute.xlu0 %2027
        %v2030 = vadd.f32 %v2020, %v2028
        %v2031 = vtanh.pop %v2030
        %2033 = vrot.lane.b32.xlu0 %v2031, 16
        %v2034 = vpop.permute.xlu0 %2033
        %v2036 = vmul.f32 %v2015, %v2034
        %vm2037 = vcmask 387330
        %2038 = vst.msk [vmem:[%s678 - $0x2] sm:$0x4] %vm2037, %v2009
        %2040 = vrot.lane.b32.xlu0 %v2036, 112
        %v2041 = vpop.permute.xlu0 %2040
        %vm2043 = vcmask 784005
        %2044 = vst.msk [vmem:[%s684 - $0x5] sm:$0x20] %vm2043, %v2041
        %v2046 = vrot.slane %v2009, 2
        %v2048 = vmax.f32 %v1871, %v2046
        %v2049 = vrot.slane %v2036, 6
        %v2051 = vmax.f32 %v1875, %v2049
        %v2052 = vpack.c.bf16 %v2009, %v2009
        %v2054 = vrot.slane %v2052, 1
        %2055 = vrot.lane.b32.xlu0 %v2054, 96
        %v2056 = vpop.permute.xlu0 %2055
        %v2058 = vsel %vm715, %v2056, 0
        %2060 = vmatprep.subr.bf16.mxu0 0
        %2061 = vmatpush1.bf16.msra.mxu0 %v1542
        %2062 = vmatprep.subr.bf16.mxu0 0
        %2063 = vmatpush1.bf16.msra.mxu0 0
        %2064 = vmatprep.subr.bf16.mxu0 0
        %2065 = vmatpush1.bf16.msra.mxu0 0
        %2066 = vmatprep.subr.bf16.mxu0 0
        %2067 = vmatpush1.bf16.msra.mxu0 0
        %2068 = vmatprep.subr.bf16.mxu0 0
        %2069 = vmatpush1.bf16.msra.mxu0 0
        %2070 = vmatprep.subr.bf16.mxu0 0
        %2071 = vmatpush1.bf16.msra.mxu0 0
        %2072 = vmatprep.subr.bf16.mxu0 0
        %2073 = vmatpush1.bf16.msra.mxu0 0
        %2074 = vmatprep.subr.bf16.mxu0 0
        %2075 = vmatpush1.bf16.msra.mxu0 0
        %2076 = vmatprep.subr.bf16.mxu0 0
        %2077 = vmatpush1.bf16.msra.mxu0 0
        %2078 = vmatprep.subr.bf16.mxu0 0
        %2079 = vmatpush1.bf16.msra.mxu0 0
        %2080 = vmatprep.subr.bf16.mxu0 0
        %2081 = vmatpush1.bf16.msra.mxu0 0
        %2082 = vmatprep.subr.bf16.mxu0 0
        %2083 = vmatpush1.bf16.msra.mxu0 0
        %2084 = vmatprep.subr.bf16.mxu0 0
        %2085 = vmatpush1.bf16.msra.mxu0 0
        %2086 = vmatprep.subr.bf16.mxu0 0
        %2087 = vmatpush1.bf16.msra.mxu0 0
        %2088 = vmatprep.subr.bf16.mxu0 0
        %2089 = vmatpush1.bf16.msra.mxu0 0
        %2090 = vmatprep.subr.bf16.mxu0 0
        %2091 = vmatpush1.bf16.msra.mxu0 0
        %2092 = vmatprep.mubr.bf16.mxu0 0
        %2093 = vmatmul.mubr.bf16.gmra.mrb[0].mxu0 %v2058
        %v2094 = vpop.f32.mrb[0].mxu0
        %v2095 = vadd.f32 0.0, %v2094
        %v2096 = vpop.f32.mrb[0].mxu0
        %v2097 = vpop.f32.mrb[0].mxu0
        %v2098 = vpop.f32.mrb[0].mxu0
        %2099 = vdwg.mxu0
        %v2101 = vrot.slane %v2095, 5
        %v2103 = vadd.f32 %v1537, %v2101
        %v2104 = vpack.c.bf16 %v2036, %v2036
        %v2106 = vshrl.u32 %v2104, 16
        %v2108 = vrot.slane %v2106, 2
        %2109 = vrot.lane.b32.xlu0 %v2108, 32
        %v2110 = vpop.permute.xlu0 %2109
        %v2112 = vsel %vm715, %v2110, 0
        %2114 = vmatprep.subr.bf16.mxu0 0
        %2115 = vmatpush1.bf16.msra.mxu0 %v1592
        %2116 = vmatprep.subr.bf16.mxu0 0
        %2117 = vmatpush1.bf16.msra.mxu0 0
        %2118 = vmatprep.subr.bf16.mxu0 0
        %2119 = vmatpush1.bf16.msra.mxu0 0
        %2120 = vmatprep.subr.bf16.mxu0 0
        %2121 = vmatpush1.bf16.msra.mxu0 0
        %2122 = vmatprep.subr.bf16.mxu0 0
        %2123 = vmatpush1.bf16.msra.mxu0 0
        %2124 = vmatprep.subr.bf16.mxu0 0
        %2125 = vmatpush1.bf16.msra.mxu0 0
        %2126 = vmatprep.subr.bf16.mxu0 0
        %2127 = vmatpush1.bf16.msra.mxu0 0
        %2128 = vmatprep.subr.bf16.mxu0 0
        %2129 = vmatpush1.bf16.msra.mxu0 0
        %2130 = vmatprep.subr.bf16.mxu0 0
        %2131 = vmatpush1.bf16.msra.mxu0 0
        %2132 = vmatprep.subr.bf16.mxu0 0
        %2133 = vmatpush1.bf16.msra.mxu0 0
        %2134 = vmatprep.subr.bf16.mxu0 0
        %2135 = vmatpush1.bf16.msra.mxu0 0
        %2136 = vmatprep.subr.bf16.mxu0 0
        %2137 = vmatpush1.bf16.msra.mxu0 0
        %2138 = vmatprep.subr.bf16.mxu0 0
        %2139 = vmatpush1.bf16.msra.mxu0 0
        %2140 = vmatprep.subr.bf16.mxu0 0
        %2141 = vmatpush1.bf16.msra.mxu0 0
        %2142 = vmatprep.subr.bf16.mxu0 0
        %2143 = vmatpush1.bf16.msra.mxu0 0
        %2144 = vmatprep.subr.bf16.mxu0 0
        %2145 = vmatpush1.bf16.msra.mxu0 0
        %2146 = vmatprep.mubr.bf16.mxu0 0
        %2147 = vmatmul.mubr.bf16.gmra.mrb[0].mxu0 %v2112
        %v2148 = vpop.f32.mrb[0].mxu0
        %v2149 = vadd.f32 0.0, %v2148
        %v2150 = vpop.f32.mrb[0].mxu0
        %v2151 = vpop.f32.mrb[0].mxu0
        %v2152 = vpop.f32.mrb[0].mxu0
        %2153 = vdwg.mxu0
        %v2155 = vrot.slane %v2149, 4
        %2156 = vrot.lane.b32.xlu0 %v2155, 64
        %v2157 = vpop.permute.xlu0 %2156
        %v2159 = vadd.f32 %v1537, %v2157
        %v2160 = vxor.u32 %v2103, 2147483648
        %v2161 = vmul.f32 %v2160, 1.442695
        %v2162 = vpow.pop %v2161
        %v2163 = vadd.f32 %v2162, 1.0
        %v2164 = vrcp.pop %v2163
        %v2165 = vmul.f32 1.0, %v2164
        %v2166 = vtanh.pop %v2103
        %v2168 = vrot.slane %v2003, 7
        %v2170 = vmul.f32 %v2165, %v2168
        %2172 = vrot.lane.b32.xlu0 %v2166, 80
        %v2173 = vpop.permute.xlu0 %2172
        %v2175 = vmul.f32 %v2165, %v2173
        %2177 = vrot.lane.b32.xlu0 %v2175, 16
        %v2178 = vpop.permute.xlu0 %2177
        %v2180 = vadd.f32 %v2170, %v2178
        %v2181 = vtanh.pop %v2180
        %2183 = vrot.lane.b32.xlu0 %v2181, 16
        %v2184 = vpop.permute.xlu0 %2183
        %v2186 = vmul.f32 %v2165, %v2184
        %v2187 = vxor.u32 %v2159, 2147483648
        %v2188 = vmul.f32 %v2187, 1.442695
        %v2189 = vpow.pop %v2188
        %v2190 = vadd.f32 %v2189, 1.0
        %v2191 = vrcp.pop %v2190
        %v2192 = vmul.f32 1.0, %v2191
        %v2193 = vtanh.pop %v2159
        %v2195 = vrot.slane %v2030, 1
        %v2197 = vmul.f32 %v2192, %v2195
        %2199 = vrot.lane.b32.xlu0 %v2193, 80
        %v2200 = vpop.permute.xlu0 %2199
        %v2202 = vmul.f32 %v2192, %v2200
        %2204 = vrot.lane.b32.xlu0 %v2202, 16
        %v2205 = vpop.permute.xlu0 %2204
        %v2207 = vadd.f32 %v2197, %v2205
        %v2208 = vtanh.pop %v2207
        %2210 = vrot.lane.b32.xlu0 %v2208, 16
        %v2211 = vpop.permute.xlu0 %2210
        %v2213 = vmul.f32 %v2192, %v2211
        %2215 = vrot.lane.b32.xlu0 %v2186, 16
        %v2216 = vpop.permute.xlu0 %2215
        %vm2218 = vcmask 519555
        %2219 = vst.msk [vmem:[%s678 - $0x3] sm:$0x8] %vm2218, %v2216
        %2221 = vrot.lane.b32.xlu0 %v2213, 96
        %v2222 = vpop.permute.xlu0 %2221
        %vm2224 = vcmask 651780
        %2225 = vst.msk [vmem:[%s684 - $0x4] sm:$0x10] %vm2224, %v2222
        %v2226 = vrot.slane %v2186, 3
        %v2228 = vmax.f32 %v2048, %v2226
        %v2229 = vrot.slane %v2213, 5
        %v2231 = vmax.f32 %v2051, %v2229
        %v2232 = vpack.c.bf16 %v2186, %v2186
        %v2234 = vshrl.u32 %v2232, 16
        %v2236 = vrot.slane %v2234, 1
        %2237 = vrot.lane.b32.xlu0 %v2236, 96
        %v2238 = vpop.permute.xlu0 %2237
        %v2240 = vsel %vm715, %v2238, 0
        %2242 = vmatprep.subr.bf16.mxu0 0
        %2243 = vmatpush1.bf16.msra.mxu0 %v1542
        %2244 = vmatprep.subr.bf16.mxu0 0
        %2245 = vmatpush1.bf16.msra.mxu0 0
        %2246 = vmatprep.subr.bf16.mxu0 0
        %2247 = vmatpush1.bf16.msra.mxu0 0
        %2248 = vmatprep.subr.bf16.mxu0 0
        %2249 = vmatpush1.bf16.msra.mxu0 0
        %2250 = vmatprep.subr.bf16.mxu0 0
        %2251 = vmatpush1.bf16.msra.mxu0 0
        %2252 = vmatprep.subr.bf16.mxu0 0
        %2253 = vmatpush1.bf16.msra.mxu0 0
        %2254 = vmatprep.subr.bf16.mxu0 0
        %2255 = vmatpush1.bf16.msra.mxu0 0
        %2256 = vmatprep.subr.bf16.mxu0 0
        %2257 = vmatpush1.bf16.msra.mxu0 0
        %2258 = vmatprep.subr.bf16.mxu0 0
        %2259 = vmatpush1.bf16.msra.mxu0 0
        %2260 = vmatprep.subr.bf16.mxu0 0
        %2261 = vmatpush1.bf16.msra.mxu0 0
        %2262 = vmatprep.subr.bf16.mxu0 0
        %2263 = vmatpush1.bf16.msra.mxu0 0
        %2264 = vmatprep.subr.bf16.mxu0 0
        %2265 = vmatpush1.bf16.msra.mxu0 0
        %2266 = vmatprep.subr.bf16.mxu0 0
        %2267 = vmatpush1.bf16.msra.mxu0 0
        %2268 = vmatprep.subr.bf16.mxu0 0
        %2269 = vmatpush1.bf16.msra.mxu0 0
        %2270 = vmatprep.subr.bf16.mxu0 0
        %2271 = vmatpush1.bf16.msra.mxu0 0
        %2272 = vmatprep.subr.bf16.mxu0 0
        %2273 = vmatpush1.bf16.msra.mxu0 0
        %2274 = vmatprep.mubr.bf16.mxu0 0
        %2275 = vmatmul.mubr.bf16.gmra.mrb[0].mxu0 %v2240
        %v2276 = vpop.f32.mrb[0].mxu0
        %v2277 = vadd.f32 0.0, %v2276
        %v2278 = vpop.f32.mrb[0].mxu0
        %v2279 = vpop.f32.mrb[0].mxu0
        %v2280 = vpop.f32.mrb[0].mxu0
        %2281 = vdwg.mxu0
        %v2283 = vrot.slane %v2277, 4
        %v2285 = vadd.f32 %v1537, %v2283
        %v2286 = vpack.c.bf16 %v2213, %v2213
        %v2288 = vrot.slane %v2286, 2
        %2289 = vrot.lane.b32.xlu0 %v2288, 32
        %v2290 = vpop.permute.xlu0 %2289
        %v2292 = vsel %vm715, %v2290, 0
        %2294 = vmatprep.subr.bf16.mxu0 0
        %2295 = vmatpush1.bf16.msra.mxu0 %v1592
        %2296 = vmatprep.subr.bf16.mxu0 0
        %2297 = vmatpush1.bf16.msra.mxu0 0
        %2298 = vmatprep.subr.bf16.mxu0 0
        %2299 = vmatpush1.bf16.msra.mxu0 0
        %2300 = vmatprep.subr.bf16.mxu0 0
        %2301 = vmatpush1.bf16.msra.mxu0 0
        %2302 = vmatprep.subr.bf16.mxu0 0
        %2303 = vmatpush1.bf16.msra.mxu0 0
        %2304 = vmatprep.subr.bf16.mxu0 0
        %2305 = vmatpush1.bf16.msra.mxu0 0
        %2306 = vmatprep.subr.bf16.mxu0 0
        %2307 = vmatpush1.bf16.msra.mxu0 0
        %2308 = vmatprep.subr.bf16.mxu0 0
        %2309 = vmatpush1.bf16.msra.mxu0 0
        %2310 = vmatprep.subr.bf16.mxu0 0
        %2311 = vmatpush1.bf16.msra.mxu0 0
        %2312 = vmatprep.subr.bf16.mxu0 0
        %2313 = vmatpush1.bf16.msra.mxu0 0
        %2314 = vmatprep.subr.bf16.mxu0 0
        %2315 = vmatpush1.bf16.msra.mxu0 0
        %2316 = vmatprep.subr.bf16.mxu0 0
        %2317 = vmatpush1.bf16.msra.mxu0 0
        %2318 = vmatprep.subr.bf16.mxu0 0
        %2319 = vmatpush1.bf16.msra.mxu0 0
        %2320 = vmatprep.subr.bf16.mxu0 0
        %2321 = vmatpush1.bf16.msra.mxu0 0
        %2322 = vmatprep.subr.bf16.mxu0 0
        %2323 = vmatpush1.bf16.msra.mxu0 0
        %2324 = vmatprep.subr.bf16.mxu0 0
        %2325 = vmatpush1.bf16.msra.mxu0 0
        %2326 = vmatprep.mubr.bf16.mxu0 0
        %2327 = vmatmul.mubr.bf16.gmra.mrb[0].mxu0 %v2292
        %v2328 = vpop.f32.mrb[0].mxu0
        %v2329 = vadd.f32 0.0, %v2328
        %v2330 = vpop.f32.mrb[0].mxu0
        %v2331 = vpop.f32.mrb[0].mxu0
        %v2332 = vpop.f32.mrb[0].mxu0
        %2333 = vdwg.mxu0
        %v2335 = vrot.slane %v2329, 5
        %2336 = vrot.lane.b32.xlu0 %v2335, 64
        %v2337 = vpop.permute.xlu0 %2336
        %v2339 = vadd.f32 %v1537, %v2337
        %v2340 = vxor.u32 %v2285, 2147483648
        %v2341 = vmul.f32 %v2340, 1.442695
        %v2342 = vpow.pop %v2341
        %v2343 = vadd.f32 %v2342, 1.0
        %v2344 = vrcp.pop %v2343
        %v2345 = vmul.f32 1.0, %v2344
        %v2346 = vtanh.pop %v2285
        %v2348 = vrot.slane %v2180, 7
        %v2350 = vmul.f32 %v2345, %v2348
        %2352 = vrot.lane.b32.xlu0 %v2346, 80
        %v2353 = vpop.permute.xlu0 %2352
        %v2355 = vmul.f32 %v2345, %v2353
        %2357 = vrot.lane.b32.xlu0 %v2355, 16
        %v2358 = vpop.permute.xlu0 %2357
        %v2360 = vadd.f32 %v2350, %v2358
        %v2361 = vtanh.pop %v2360
        %2363 = vrot.lane.b32.xlu0 %v2361, 16
        %v2364 = vpop.permute.xlu0 %2363
        %v2366 = vmul.f32 %v2345, %v2364
        %v2367 = vxor.u32 %v2339, 2147483648
        %v2368 = vmul.f32 %v2367, 1.442695
        %v2369 = vpow.pop %v2368
        %v2370 = vadd.f32 %v2369, 1.0
        %v2371 = vrcp.pop %v2370
        %v2372 = vmul.f32 1.0, %v2371
        %v2373 = vtanh.pop %v2339
        %v2375 = vrot.slane %v2207, 1
        %v2377 = vmul.f32 %v2372, %v2375
        %2379 = vrot.lane.b32.xlu0 %v2373, 80
        %v2380 = vpop.permute.xlu0 %2379
        %v2382 = vmul.f32 %v2372, %v2380
        %2384 = vrot.lane.b32.xlu0 %v2382, 16
        %v2385 = vpop.permute.xlu0 %2384
        %v2387 = vadd.f32 %v2377, %v2385
        %v2388 = vtanh.pop %v2387
        %2390 = vrot.lane.b32.xlu0 %v2388, 16
        %v2391 = vpop.permute.xlu0 %2390
        %v2393 = vmul.f32 %v2372, %v2391
        %2395 = vrot.lane.b32.xlu0 %v2366, 32
        %v2396 = vpop.permute.xlu0 %2395
        %2398 = vst.msk [vmem:[%s678 - $0x4] sm:$0x10] %vm2224, %v2396
        %2400 = vrot.lane.b32.xlu0 %v2393, 80
        %v2401 = vpop.permute.xlu0 %2400
        %2403 = vst.msk [vmem:[%s684 - $0x3] sm:$0x8] %vm2218, %v2401
        %v2404 = vrot.slane %v2366, 4
        %v2406 = vmax.f32 %v2228, %v2404
        %v2407 = vrot.slane %v2393, 4
        %v2409 = vmax.f32 %v2231, %v2407
        %v2410 = vpack.c.bf16 %v2366, %v2366
        %v2412 = vrot.slane %v2410, 2
        %2413 = vrot.lane.b32.xlu0 %v2412, 96
        %v2414 = vpop.permute.xlu0 %2413
        %v2416 = vsel %vm715, %v2414, 0
        %2418 = vmatprep.subr.bf16.mxu0 0
        %2419 = vmatpush1.bf16.msra.mxu0 %v1542
        %2420 = vmatprep.subr.bf16.mxu0 0
        %2421 = vmatpush1.bf16.msra.mxu0 0
        %2422 = vmatprep.subr.bf16.mxu0 0
        %2423 = vmatpush1.bf16.msra.mxu0 0
        %2424 = vmatprep.subr.bf16.mxu0 0
        %2425 = vmatpush1.bf16.msra.mxu0 0
        %2426 = vmatprep.subr.bf16.mxu0 0
        %2427 = vmatpush1.bf16.msra.mxu0 0
        %2428 = vmatprep.subr.bf16.mxu0 0
        %2429 = vmatpush1.bf16.msra.mxu0 0
        %2430 = vmatprep.subr.bf16.mxu0 0
        %2431 = vmatpush1.bf16.msra.mxu0 0
        %2432 = vmatprep.subr.bf16.mxu0 0
        %2433 = vmatpush1.bf16.msra.mxu0 0
        %2434 = vmatprep.subr.bf16.mxu0 0
        %2435 = vmatpush1.bf16.msra.mxu0 0
        %2436 = vmatprep.subr.bf16.mxu0 0
        %2437 = vmatpush1.bf16.msra.mxu0 0
        %2438 = vmatprep.subr.bf16.mxu0 0
        %2439 = vmatpush1.bf16.msra.mxu0 0
        %2440 = vmatprep.subr.bf16.mxu0 0
        %2441 = vmatpush1.bf16.msra.mxu0 0
        %2442 = vmatprep.subr.bf16.mxu0 0
        %2443 = vmatpush1.bf16.msra.mxu0 0
        %2444 = vmatprep.subr.bf16.mxu0 0
        %2445 = vmatpush1.bf16.msra.mxu0 0
        %2446 = vmatprep.subr.bf16.mxu0 0
        %2447 = vmatpush1.bf16.msra.mxu0 0
        %2448 = vmatprep.subr.bf16.mxu0 0
        %2449 = vmatpush1.bf16.msra.mxu0 0
        %2450 = vmatprep.mubr.bf16.mxu0 0
        %2451 = vmatmul.mubr.bf16.gmra.mrb[0].mxu0 %v2416
        %v2452 = vpop.f32.mrb[0].mxu0
        %v2453 = vadd.f32 0.0, %v2452
        %v2454 = vpop.f32.mrb[0].mxu0
        %v2455 = vpop.f32.mrb[0].mxu0
        %v2456 = vpop.f32.mrb[0].mxu0
        %2457 = vdwg.mxu0
        %v2459 = vrot.slane %v2453, 3
        %v2461 = vadd.f32 %v1537, %v2459
        %v2462 = vpack.c.bf16 %v2393, %v2393
        %v2464 = vshrl.u32 %v2462, 16
        %v2466 = vrot.slane %v2464, 1
        %2467 = vrot.lane.b32.xlu0 %v2466, 32
        %v2468 = vpop.permute.xlu0 %2467
        %v2470 = vsel %vm715, %v2468, 0
        %2472 = vmatprep.subr.bf16.mxu0 0
        %2473 = vmatpush1.bf16.msra.mxu0 %v1592
        %2474 = vmatprep.subr.bf16.mxu0 0
        %2475 = vmatpush1.bf16.msra.mxu0 0
        %2476 = vmatprep.subr.bf16.mxu0 0
        %2477 = vmatpush1.bf16.msra.mxu0 0
        %2478 = vmatprep.subr.bf16.mxu0 0
        %2479 = vmatpush1.bf16.msra.mxu0 0
        %2480 = vmatprep.subr.bf16.mxu0 0
        %2481 = vmatpush1.bf16.msra.mxu0 0
        %2482 = vmatprep.subr.bf16.mxu0 0
        %2483 = vmatpush1.bf16.msra.mxu0 0
        %2484 = vmatprep.subr.bf16.mxu0 0
        %2485 = vmatpush1.bf16.msra.mxu0 0
        %2486 = vmatprep.subr.bf16.mxu0 0
        %2487 = vmatpush1.bf16.msra.mxu0 0
        %2488 = vmatprep.subr.bf16.mxu0 0
        %2489 = vmatpush1.bf16.msra.mxu0 0
        %2490 = vmatprep.subr.bf16.mxu0 0
        %2491 = vmatpush1.bf16.msra.mxu0 0
        %2492 = vmatprep.subr.bf16.mxu0 0
        %2493 = vmatpush1.bf16.msra.mxu0 0
        %2494 = vmatprep.subr.bf16.mxu0 0
        %2495 = vmatpush1.bf16.msra.mxu0 0
        %2496 = vmatprep.subr.bf16.mxu0 0
        %2497 = vmatpush1.bf16.msra.mxu0 0
        %2498 = vmatprep.subr.bf16.mxu0 0
        %2499 = vmatpush1.bf16.msra.mxu0 0
        %2500 = vmatprep.subr.bf16.mxu0 0
        %2501 = vmatpush1.bf16.msra.mxu0 0
        %2502 = vmatprep.subr.bf16.mxu0 0
        %2503 = vmatpush1.bf16.msra.mxu0 0
        %2504 = vmatprep.mubr.bf16.mxu0 0
        %2505 = vmatmul.mubr.bf16.gmra.mrb[0].mxu0 %v2470
        %v2506 = vpop.f32.mrb[0].mxu0
        %v2507 = vadd.f32 0.0, %v2506
        %v2508 = vpop.f32.mrb[0].mxu0
        %v2509 = vpop.f32.mrb[0].mxu0
        %v2510 = vpop.f32.mrb[0].mxu0
        %2511 = vdwg.mxu0
        %v2513 = vrot.slane %v2507, 6
        %2514 = vrot.lane.b32.xlu0 %v2513, 64
        %v2515 = vpop.permute.xlu0 %2514
        %v2517 = vadd.f32 %v1537, %v2515
        %v2518 = vxor.u32 %v2461, 2147483648
        %v2519 = vmul.f32 %v2518, 1.442695
        %v2520 = vpow.pop %v2519
        %v2521 = vadd.f32 %v2520, 1.0
        %v2522 = vrcp.pop %v2521
        %v2523 = vmul.f32 1.0, %v2522
        %v2524 = vtanh.pop %v2461
        %v2526 = vrot.slane %v2360, 7
        %v2528 = vmul.f32 %v2523, %v2526
        %2530 = vrot.lane.b32.xlu0 %v2524, 80
        %v2531 = vpop.permute.xlu0 %2530
        %v2533 = vmul.f32 %v2523, %v2531
        %2535 = vrot.lane.b32.xlu0 %v2533, 16
        %v2536 = vpop.permute.xlu0 %2535
        %v2538 = vadd.f32 %v2528, %v2536
        %v2539 = vtanh.pop %v2538
        %2541 = vrot.lane.b32.xlu0 %v2539, 16
        %v2542 = vpop.permute.xlu0 %2541
        %v2544 = vmul.f32 %v2523, %v2542
        %v2545 = vxor.u32 %v2517, 2147483648
        %v2546 = vmul.f32 %v2545, 1.442695
        %v2547 = vpow.pop %v2546
        %v2548 = vadd.f32 %v2547, 1.0
        %v2549 = vrcp.pop %v2548
        %v2550 = vmul.f32 1.0, %v2549
        %v2551 = vtanh.pop %v2517
        %v2553 = vrot.slane %v2387, 1
        %v2555 = vmul.f32 %v2550, %v2553
        %2557 = vrot.lane.b32.xlu0 %v2551, 80
        %v2558 = vpop.permute.xlu0 %2557
        %v2560 = vmul.f32 %v2550, %v2558
        %2562 = vrot.lane.b32.xlu0 %v2560, 16
        %v2563 = vpop.permute.xlu0 %2562
        %v2565 = vadd.f32 %v2555, %v2563
        %v2566 = vtanh.pop %v2565
        %2568 = vrot.lane.b32.xlu0 %v2566, 16
        %v2569 = vpop.permute.xlu0 %2568
        %v2571 = vmul.f32 %v2550, %v2569
        %2573 = vrot.lane.b32.xlu0 %v2544, 48
        %v2574 = vpop.permute.xlu0 %2573
        %2576 = vst.msk [vmem:[%s678 - $0x5] sm:$0x20] %vm2043, %v2574
        %2578 = vrot.lane.b32.xlu0 %v2571, 64
        %v2579 = vpop.permute.xlu0 %2578
        %2581 = vst.msk [vmem:[%s684 - $0x2] sm:$0x4] %vm2037, %v2579
        %v2582 = vrot.slane %v2544, 5
        %v2584 = vmax.f32 %v2406, %v2582
        %v2585 = vrot.slane %v2571, 3
        %v2587 = vmax.f32 %v2409, %v2585
        %v2588 = vpack.c.bf16 %v2544, %v2544
        %v2590 = vshrl.u32 %v2588, 16
        %v2592 = vrot.slane %v2590, 2
        %2593 = vrot.lane.b32.xlu0 %v2592, 96
        %v2594 = vpop.permute.xlu0 %2593
        %v2596 = vsel %vm715, %v2594, 0
        %2598 = vmatprep.subr.bf16.mxu0 0
        %2599 = vmatpush1.bf16.msra.mxu0 %v1542
        %2600 = vmatprep.subr.bf16.mxu0 0
        %2601 = vmatpush1.bf16.msra.mxu0 0
        %2602 = vmatprep.subr.bf16.mxu0 0
        %2603 = vmatpush1.bf16.msra.mxu0 0
        %2604 = vmatprep.subr.bf16.mxu0 0
        %2605 = vmatpush1.bf16.msra.mxu0 0
        %2606 = vmatprep.subr.bf16.mxu0 0
        %2607 = vmatpush1.bf16.msra.mxu0 0
        %2608 = vmatprep.subr.bf16.mxu0 0
        %2609 = vmatpush1.bf16.msra.mxu0 0
        %2610 = vmatprep.subr.bf16.mxu0 0
        %2611 = vmatpush1.bf16.msra.mxu0 0
        %2612 = vmatprep.subr.bf16.mxu0 0
        %2613 = vmatpush1.bf16.msra.mxu0 0
        %2614 = vmatprep.subr.bf16.mxu0 0
        %2615 = vmatpush1.bf16.msra.mxu0 0
        %2616 = vmatprep.subr.bf16.mxu0 0
        %2617 = vmatpush1.bf16.msra.mxu0 0
        %2618 = vmatprep.subr.bf16.mxu0 0
        %2619 = vmatpush1.bf16.msra.mxu0 0
        %2620 = vmatprep.subr.bf16.mxu0 0
        %2621 = vmatpush1.bf16.msra.mxu0 0
        %2622 = vmatprep.subr.bf16.mxu0 0
        %2623 = vmatpush1.bf16.msra.mxu0 0
        %2624 = vmatprep.subr.bf16.mxu0 0
        %2625 = vmatpush1.bf16.msra.mxu0 0
        %2626 = vmatprep.subr.bf16.mxu0 0
        %2627 = vmatpush1.bf16.msra.mxu0 0
        %2628 = vmatprep.subr.bf16.mxu0 0
        %2629 = vmatpush1.bf16.msra.mxu0 0
        %2630 = vmatprep.mubr.bf16.mxu0 0
        %2631 = vmatmul.mubr.bf16.gmra.mrb[0].mxu0 %v2596
        %v2632 = vpop.f32.mrb[0].mxu0
        %v2633 = vadd.f32 0.0, %v2632
        %v2634 = vpop.f32.mrb[0].mxu0
        %v2635 = vpop.f32.mrb[0].mxu0
        %v2636 = vpop.f32.mrb[0].mxu0
        %2637 = vdwg.mxu0
        %v2639 = vrot.slane %v2633, 2
        %v2641 = vadd.f32 %v1537, %v2639
        %v2642 = vpack.c.bf16 %v2571, %v2571
        %v2644 = vrot.slane %v2642, 1
        %2645 = vrot.lane.b32.xlu0 %v2644, 32
        %v2646 = vpop.permute.xlu0 %2645
        %v2648 = vsel %vm715, %v2646, 0
        %2650 = vmatprep.subr.bf16.mxu0 0
        %2651 = vmatpush1.bf16.msra.mxu0 %v1592
        %2652 = vmatprep.subr.bf16.mxu0 0
        %2653 = vmatpush1.bf16.msra.mxu0 0
        %2654 = vmatprep.subr.bf16.mxu0 0
        %2655 = vmatpush1.bf16.msra.mxu0 0
        %2656 = vmatprep.subr.bf16.mxu0 0
        %2657 = vmatpush1.bf16.msra.mxu0 0
        %2658 = vmatprep.subr.bf16.mxu0 0
        %2659 = vmatpush1.bf16.msra.mxu0 0
        %2660 = vmatprep.subr.bf16.mxu0 0
        %2661 = vmatpush1.bf16.msra.mxu0 0
        %2662 = vmatprep.subr.bf16.mxu0 0
        %2663 = vmatpush1.bf16.msra.mxu0 0
        %2664 = vmatprep.subr.bf16.mxu0 0
        %2665 = vmatpush1.bf16.msra.mxu0 0
        %2666 = vmatprep.subr.bf16.mxu0 0
        %2667 = vmatpush1.bf16.msra.mxu0 0
        %2668 = vmatprep.subr.bf16.mxu0 0
        %2669 = vmatpush1.bf16.msra.mxu0 0
        %2670 = vmatprep.subr.bf16.mxu0 0
        %2671 = vmatpush1.bf16.msra.mxu0 0
        %2672 = vmatprep.subr.bf16.mxu0 0
        %2673 = vmatpush1.bf16.msra.mxu0 0
        %2674 = vmatprep.subr.bf16.mxu0 0
        %2675 = vmatpush1.bf16.msra.mxu0 0
        %2676 = vmatprep.subr.bf16.mxu0 0
        %2677 = vmatpush1.bf16.msra.mxu0 0
        %2678 = vmatprep.subr.bf16.mxu0 0
        %2679 = vmatpush1.bf16.msra.mxu0 0
        %2680 = vmatprep.subr.bf16.mxu0 0
        %2681 = vmatpush1.bf16.msra.mxu0 0
        %2682 = vmatprep.mubr.bf16.mxu0 0
        %2683 = vmatmul.mubr.bf16.gmra.mrb[0].mxu0 %v2648
        %v2684 = vpop.f32.mrb[0].mxu0
        %v2685 = vadd.f32 0.0, %v2684
        %v2686 = vpop.f32.mrb[0].mxu0
        %v2687 = vpop.f32.mrb[0].mxu0
        %v2688 = vpop.f32.mrb[0].mxu0
        %2689 = vdwg.mxu0
        %v2691 = vrot.slane %v2685, 7
        %2692 = vrot.lane.b32.xlu0 %v2691, 64
        %v2693 = vpop.permute.xlu0 %2692
        %v2695 = vadd.f32 %v1537, %v2693
        %v2696 = vxor.u32 %v2641, 2147483648
        %v2697 = vmul.f32 %v2696, 1.442695
        %v2698 = vpow.pop %v2697
        %v2699 = vadd.f32 %v2698, 1.0
        %v2700 = vrcp.pop %v2699
        %v2701 = vmul.f32 1.0, %v2700
        %v2702 = vtanh.pop %v2641
        %v2704 = vrot.slane %v2538, 7
        %v2706 = vmul.f32 %v2701, %v2704
        %2708 = vrot.lane.b32.xlu0 %v2702, 80
        %v2709 = vpop.permute.xlu0 %2708
        %v2711 = vmul.f32 %v2701, %v2709
        %2713 = vrot.lane.b32.xlu0 %v2711, 16
        %v2714 = vpop.permute.xlu0 %2713
        %v2716 = vadd.f32 %v2706, %v2714
        %v2717 = vtanh.pop %v2716
        %2719 = vrot.lane.b32.xlu0 %v2717, 16
        %v2720 = vpop.permute.xlu0 %2719
        %v2722 = vmul.f32 %v2701, %v2720
        %v2723 = vxor.u32 %v2695, 2147483648
        %v2724 = vmul.f32 %v2723, 1.442695
        %v2725 = vpow.pop %v2724
        %v2726 = vadd.f32 %v2725, 1.0
        %v2727 = vrcp.pop %v2726
        %v2728 = vmul.f32 1.0, %v2727
        %v2729 = vtanh.pop %v2695
        %v2731 = vrot.slane %v2565, 1
        %v2733 = vmul.f32 %v2728, %v2731
        %2735 = vrot.lane.b32.xlu0 %v2729, 80
        %v2736 = vpop.permute.xlu0 %2735
        %v2738 = vmul.f32 %v2728, %v2736
        %2740 = vrot.lane.b32.xlu0 %v2738, 16
        %v2741 = vpop.permute.xlu0 %2740
        %v2743 = vadd.f32 %v2733, %v2741
        %v2744 = vtanh.pop %v2743
        %2746 = vrot.lane.b32.xlu0 %v2744, 16
        %v2747 = vpop.permute.xlu0 %2746
        %v2749 = vmul.f32 %v2728, %v2747
        %2751 = vrot.lane.b32.xlu0 %v2722, 64
        %v2752 = vpop.permute.xlu0 %2751
        %2754 = vst.msk [vmem:[%s678 - $0x6] sm:$0x40] %vm1867, %v2752
        %2756 = vrot.lane.b32.xlu0 %v2749, 48
        %v2757 = vpop.permute.xlu0 %2756
        %2759 = vst.msk [vmem:[%s684 - $0x1] sm:$0x2] %vm1865, %v2757
        %v2760 = vrot.slane %v2722, 6
        %v2762 = vmax.f32 %v2584, %v2760
        %v2763 = vrot.slane %v2749, 2
        %v2765 = vmax.f32 %v2587, %v2763
        %v2766 = vpack.c.bf16 %v2722, %v2722
        %v2768 = vrot.slane %v2766, 3
        %2769 = vrot.lane.b32.xlu0 %v2768, 96
        %v2770 = vpop.permute.xlu0 %2769
        %v2772 = vsel %vm715, %v2770, 0
        %2774 = vmatprep.subr.bf16.mxu0 0
        %2775 = vmatpush1.bf16.msra.mxu0 %v1542
        %2776 = vmatprep.subr.bf16.mxu0 0
        %2777 = vmatpush1.bf16.msra.mxu0 0
        %2778 = vmatprep.subr.bf16.mxu0 0
        %2779 = vmatpush1.bf16.msra.mxu0 0
        %2780 = vmatprep.subr.bf16.mxu0 0
        %2781 = vmatpush1.bf16.msra.mxu0 0
        %2782 = vmatprep.subr.bf16.mxu0 0
        %2783 = vmatpush1.bf16.msra.mxu0 0
        %2784 = vmatprep.subr.bf16.mxu0 0
        %2785 = vmatpush1.bf16.msra.mxu0 0
        %2786 = vmatprep.subr.bf16.mxu0 0
        %2787 = vmatpush1.bf16.msra.mxu0 0
        %2788 = vmatprep.subr.bf16.mxu0 0
        %2789 = vmatpush1.bf16.msra.mxu0 0
        %2790 = vmatprep.subr.bf16.mxu0 0
        %2791 = vmatpush1.bf16.msra.mxu0 0
        %2792 = vmatprep.subr.bf16.mxu0 0
        %2793 = vmatpush1.bf16.msra.mxu0 0
        %2794 = vmatprep.subr.bf16.mxu0 0
        %2795 = vmatpush1.bf16.msra.mxu0 0
        %2796 = vmatprep.subr.bf16.mxu0 0
        %2797 = vmatpush1.bf16.msra.mxu0 0
        %2798 = vmatprep.subr.bf16.mxu0 0
        %2799 = vmatpush1.bf16.msra.mxu0 0
        %2800 = vmatprep.subr.bf16.mxu0 0
        %2801 = vmatpush1.bf16.msra.mxu0 0
        %2802 = vmatprep.subr.bf16.mxu0 0
        %2803 = vmatpush1.bf16.msra.mxu0 0
        %2804 = vmatprep.subr.bf16.mxu0 0
        %2805 = vmatpush1.bf16.msra.mxu0 0
        %2806 = vmatprep.mubr.bf16.mxu0 0
        %2807 = vmatmul.mubr.bf16.gmra.mrb[0].mxu0 %v2772
        %v2808 = vpop.f32.mrb[0].mxu0
        %v2809 = vadd.f32 0.0, %v2808
        %v2810 = vpop.f32.mrb[0].mxu0
        %v2811 = vpop.f32.mrb[0].mxu0
        %v2812 = vpop.f32.mrb[0].mxu0
        %2813 = vdwg.mxu0
        %v2815 = vrot.slane %v2809, 1
        %v2817 = vadd.f32 %v1537, %v2815
        %v2818 = vpack.c.bf16 %v2749, %v2749
        %v2820 = vshrl.u32 %v2818, 16
        %2822 = vrot.lane.b32.xlu0 %v2820, 32
        %v2823 = vpop.permute.xlu0 %2822
        %v2825 = vsel %vm715, %v2823, 0
        %2827 = vmatprep.subr.bf16.mxu0 0
        %2828 = vmatpush1.bf16.msra.mxu0 %v1592
        %2829 = vmatprep.subr.bf16.mxu0 0
        %2830 = vmatpush1.bf16.msra.mxu0 0
        %2831 = vmatprep.subr.bf16.mxu0 0
        %2832 = vmatpush1.bf16.msra.mxu0 0
        %2833 = vmatprep.subr.bf16.mxu0 0
        %2834 = vmatpush1.bf16.msra.mxu0 0
        %2835 = vmatprep.subr.bf16.mxu0 0
        %2836 = vmatpush1.bf16.msra.mxu0 0
        %2837 = vmatprep.subr.bf16.mxu0 0
        %2838 = vmatpush1.bf16.msra.mxu0 0
        %2839 = vmatprep.subr.bf16.mxu0 0
        %2840 = vmatpush1.bf16.msra.mxu0 0
        %2841 = vmatprep.subr.bf16.mxu0 0
        %2842 = vmatpush1.bf16.msra.mxu0 0
        %2843 = vmatprep.subr.bf16.mxu0 0
        %2844 = vmatpush1.bf16.msra.mxu0 0
        %2845 = vmatprep.subr.bf16.mxu0 0
        %2846 = vmatpush1.bf16.msra.mxu0 0
        %2847 = vmatprep.subr.bf16.mxu0 0
        %2848 = vmatpush1.bf16.msra.mxu0 0
        %2849 = vmatprep.subr.bf16.mxu0 0
        %2850 = vmatpush1.bf16.msra.mxu0 0
        %2851 = vmatprep.subr.bf16.mxu0 0
        %2852 = vmatpush1.bf16.msra.mxu0 0
        %2853 = vmatprep.subr.bf16.mxu0 0
        %2854 = vmatpush1.bf16.msra.mxu0 0
        %2855 = vmatprep.subr.bf16.mxu0 0
        %2856 = vmatpush1.bf16.msra.mxu0 0
        %2857 = vmatprep.subr.bf16.mxu0 0
        %2858 = vmatpush1.bf16.msra.mxu0 0
        %2859 = vmatprep.mubr.bf16.mxu0 0
        %2860 = vmatmul.mubr.bf16.gmra.mrb[0].mxu0 %v2825
        %v2861 = vpop.f32.mrb[0].mxu0
        %v2862 = vadd.f32 0.0, %v2861
        %v2863 = vpop.f32.mrb[0].mxu0
        %v2864 = vpop.f32.mrb[0].mxu0
        %v2865 = vpop.f32.mrb[0].mxu0
        %2866 = vdwg.mxu0
        %2868 = vrot.lane.b32.xlu0 %v2862, 64
        %v2869 = vpop.permute.xlu0 %2868
        %v2871 = vadd.f32 %v1537, %v2869
        %v2872 = vxor.u32 %v2817, 2147483648
        %v2873 = vmul.f32 %v2872, 1.442695
        %v2874 = vpow.pop %v2873
        %v2875 = vadd.f32 %v2874, 1.0
        %v2876 = vrcp.pop %v2875
        %v2877 = vmul.f32 1.0, %v2876
        %v2878 = vtanh.pop %v2817
        %v2880 = vrot.slane %v2716, 7
        %v2882 = vmul.f32 %v2877, %v2880
        %2884 = vrot.lane.b32.xlu0 %v2878, 80
        %v2885 = vpop.permute.xlu0 %2884
        %v2887 = vmul.f32 %v2877, %v2885
        %2889 = vrot.lane.b32.xlu0 %v2887, 16
        %v2890 = vpop.permute.xlu0 %2889
        %v2892 = vadd.f32 %v2882, %v2890
        %v2893 = vtanh.pop %v2892
        %2895 = vrot.lane.b32.xlu0 %v2893, 16
        %v2896 = vpop.permute.xlu0 %2895
        %v2898 = vmul.f32 %v2877, %v2896
        %v2899 = vxor.u32 %v2871, 2147483648
        %v2900 = vmul.f32 %v2899, 1.442695
        %v2901 = vpow.pop %v2900
        %v2902 = vadd.f32 %v2901, 1.0
        %v2903 = vrcp.pop %v2902
        %v2904 = vmul.f32 1.0, %v2903
        %v2905 = vtanh.pop %v2871
        %v2907 = vrot.slane %v2743, 1
        %v2909 = vmul.f32 %v2904, %v2907
        %2911 = vrot.lane.b32.xlu0 %v2905, 80
        %v2912 = vpop.permute.xlu0 %2911
        %v2914 = vmul.f32 %v2904, %v2912
        %2916 = vrot.lane.b32.xlu0 %v2914, 16
        %v2917 = vpop.permute.xlu0 %2916
        %v2919 = vadd.f32 %v2909, %v2917
        %v2920 = vtanh.pop %v2919
        %2922 = vrot.lane.b32.xlu0 %v2920, 16
        %v2923 = vpop.permute.xlu0 %2922
        %v2925 = vmul.f32 %v2904, %v2923
        %2927 = vrot.lane.b32.xlu0 %v2898, 80
        %v2928 = vpop.permute.xlu0 %2927
        %2930 = vst.msk [vmem:[%s678 - $0x7] sm:$0x80] %vm1698, %v2928
        %2932 = vrot.lane.b32.xlu0 %v2925, 32
        %v2933 = vpop.permute.xlu0 %2932
        %2935 = vst.msk [vmem:[%s684] sm:$0x1] %vm1692, %v2933
        %v2936 = vrot.slane %v2898, 7
        %v2938 = vmax.f32 %v2762, %v2936
        %v2939 = vrot.slane %v2925, 1
        %v2941 = vmax.f32 %v2765, %v2939
        %v2942 = vpack.c.bf16 %v2938, %v2938
        %v2943 = vld [vmem:[#allocation19] sm:$0xf]
        %v2944 = vld [vmem:[#allocation19 + $0x4] sm:$0xf]
        %v2945 = vpack.c.bf16 %v2941, %v2941
        %v2946 = vld [vmem:[#allocation19 + $0x8] sm:$0xf]
        %v2947 = vld [vmem:[#allocation19 + $0xc] sm:$0xf]
        %v2949 = vshrl.u32 %v2945, 16
        %v2951 = vrot.slane %v2949, 3
        %2952 = vrot.lane.b32.xlu0 %v2951, 32
        %v2953 = vpop.permute.xlu0 %2952
        %v2956 = vunpack.c.l.b16 %v2946
        %v2957 = vunpack.c.l.b16 %v2947
        %v2958 = vpack.c.b16 %v2957, %v2956
        %v2961 = vsel %vm715, %v2953, 0
        %2963 = vmatprep.subr.bf16.mxu0 0
        %2964 = vmatpush1.bf16.msra.mxu0 %v2958
        %2965 = vmatprep.subr.bf16.mxu0 0
        %2966 = vmatpush1.bf16.msra.mxu0 0
        %2967 = vmatprep.subr.bf16.mxu0 0
        %2968 = vmatpush1.bf16.msra.mxu0 0
        %2969 = vmatprep.subr.bf16.mxu0 0
        %2970 = vmatpush1.bf16.msra.mxu0 0
        %2971 = vmatprep.subr.bf16.mxu0 0
        %2972 = vmatpush1.bf16.msra.mxu0 0
        %2973 = vmatprep.subr.bf16.mxu0 0
        %2974 = vmatpush1.bf16.msra.mxu0 0
        %2975 = vmatprep.subr.bf16.mxu0 0
        %2976 = vmatpush1.bf16.msra.mxu0 0
        %2977 = vmatprep.subr.bf16.mxu0 0
        %2978 = vmatpush1.bf16.msra.mxu0 0
        %2979 = vmatprep.subr.bf16.mxu0 0
        %2980 = vmatpush1.bf16.msra.mxu0 0
        %2981 = vmatprep.subr.bf16.mxu0 0
        %2982 = vmatpush1.bf16.msra.mxu0 0
        %2983 = vmatprep.subr.bf16.mxu0 0
        %2984 = vmatpush1.bf16.msra.mxu0 0
        %2985 = vmatprep.subr.bf16.mxu0 0
        %2986 = vmatpush1.bf16.msra.mxu0 0
        %2987 = vmatprep.subr.bf16.mxu0 0
        %2988 = vmatpush1.bf16.msra.mxu0 0
        %2989 = vmatprep.subr.bf16.mxu0 0
        %2990 = vmatpush1.bf16.msra.mxu0 0
        %2991 = vmatprep.subr.bf16.mxu0 0
        %2992 = vmatpush1.bf16.msra.mxu0 0
        %2993 = vmatprep.subr.bf16.mxu0 0
        %2994 = vmatpush1.bf16.msra.mxu0 0
        %2995 = vmatprep.mubr.bf16.mxu0 0
        %2996 = vmatmul.mubr.bf16.gmra.mrb[0].mxu0 %v2961
        %v2997 = vpop.f32.mrb[0].mxu0
        %v2998 = vadd.f32 0.0, %v2997
        %v2999 = vpop.f32.mrb[0].mxu0
        %v3000 = vpop.f32.mrb[0].mxu0
        %v3001 = vpop.f32.mrb[0].mxu0
        %3002 = vdwg.mxu0
        %3004 = vrot.lane.b32.xlu0 %v2942, 96
        %v3005 = vpop.permute.xlu0 %3004
        %v3008 = vunpack.c.l.b16 %v2943
        %v3009 = vunpack.c.l.b16 %v2944
        %v3010 = vpack.c.b16 %v3009, %v3008
        %v3013 = vsel %vm715, %v3005, 0
        %3015 = vmatprep.subr.bf16.mxu0 0
        %3016 = vmatpush1.bf16.msra.mxu0 %v3010
        %3017 = vmatprep.subr.bf16.mxu0 0
        %3018 = vmatpush1.bf16.msra.mxu0 0
        %3019 = vmatprep.subr.bf16.mxu0 0
        %3020 = vmatpush1.bf16.msra.mxu0 0
        %3021 = vmatprep.subr.bf16.mxu0 0
        %3022 = vmatpush1.bf16.msra.mxu0 0
        %3023 = vmatprep.subr.bf16.mxu0 0
        %3024 = vmatpush1.bf16.msra.mxu0 0
        %3025 = vmatprep.subr.bf16.mxu0 0
        %3026 = vmatpush1.bf16.msra.mxu0 0
        %3027 = vmatprep.subr.bf16.mxu0 0
        %3028 = vmatpush1.bf16.msra.mxu0 0
        %3029 = vmatprep.subr.bf16.mxu0 0
        %3030 = vmatpush1.bf16.msra.mxu0 0
        %3031 = vmatprep.subr.bf16.mxu0 0
        %3032 = vmatpush1.bf16.msra.mxu0 0
        %3033 = vmatprep.subr.bf16.mxu0 0
        %3034 = vmatpush1.bf16.msra.mxu0 0
        %3035 = vmatprep.subr.bf16.mxu0 0
        %3036 = vmatpush1.bf16.msra.mxu0 0
        %3037 = vmatprep.subr.bf16.mxu0 0
        %3038 = vmatpush1.bf16.msra.mxu0 0
        %3039 = vmatprep.subr.bf16.mxu0 0
        %3040 = vmatpush1.bf16.msra.mxu0 0
        %3041 = vmatprep.subr.bf16.mxu0 0
        %3042 = vmatpush1.bf16.msra.mxu0 0
        %3043 = vmatprep.subr.bf16.mxu0 0
        %3044 = vmatpush1.bf16.msra.mxu0 0
        %3045 = vmatprep.subr.bf16.mxu0 0
        %3046 = vmatpush1.bf16.msra.mxu0 0
        %3047 = vmatprep.mubr.bf16.mxu0 0
        %3048 = vmatmul.mubr.bf16.gmra.mrb[0].mxu0 %v3013
        %v3049 = vpop.f32.mrb[0].mxu0
        %v3050 = vadd.f32 %v2998, %v3049
        %v3051 = vpop.f32.mrb[0].mxu0
        %v3052 = vpop.f32.mrb[0].mxu0
        %v3053 = vpop.f32.mrb[0].mxu0
        %3054 = vdwg.mxu0
        %v3055 = vld [vmem:[#allocation20] sm:$0x1]
        %v3056 = vadd.f32 %v3050, %v3055
        %3057 = vst [vmem:[%s690] sm:$0x1] %v3056
        %s3058 = sand.u32 %s318, 1
        %s3059 = scalar_lea.sflag [#allocation4], %s3058
        %s3060 = sand.u32 %s318, 1
        %s3061 = scalar_lea.vmem [#allocation22], %s3060
        %s3062 = sand.u32 %s43, 1
        %s3063 = scalar_lea.sflag [#allocation24], %s3062
        %s3064 = sand.u32 %s344, 1
        %s3065 = scalar_lea.vmem [#allocation23], %s3064
        %s3066 = sand.u32 %s43, 1
        %s3067 = scalar_lea.sflag [#allocation24], %s3066
        %s3068 = sand.u32 %s370, 1
        %s3069 = scalar_lea.vmem [#allocation25], %s3068
        // Predicated region
        $region117: #{predicate_level_encoder.1} parent=67 // pred_check
          %p3070 = pneg %p328
        $region118: #{predicate_level_encoder.1} parent=67 // pred_check_branch
          %3072 = sbr.rel (%p3070) target = $region120
        $region119: #{predicate_level_encoder.1} parent=67 // pred_region
          %s3074 = ssub.s32 16, 16
          %3075 = vsyncadd %s3059, %s3074
          %s3076 = smul.addr %s43, 16
          %s3077 = scalar_lea.hbm %s12, %s3076
          %s3079 = sshll.u32 %s3061, 4
          %s3080 = int_to_ptr.vmem [resolvable:$true] %s3079
          %3082 = dma.vmem_to_hbm [thread:$0]  %s3080, 16, %s3077, %s3059
        $region120: #{predicate_level_encoder.1} parent=67 // pred_fallthru
          _
        // Predicated region
        $region121: #{predicate_level_encoder.1} parent=67 // pred_check
          %p3083 = pneg %p354
        $region122: #{predicate_level_encoder.1} parent=67 // pred_check_branch
          %3085 = sbr.rel (%p3083) target = $region124
        $region123: #{predicate_level_encoder.1} parent=67 // pred_region
          %s3087 = ssub.s32 16, 16
          %3088 = vsyncadd %s3063, %s3087
          %s3089 = smul.addr %s43, 16
          %s3090 = scalar_lea.hbm %s13, %s3089
          %s3092 = sshll.u32 %s3065, 4
          %s3093 = int_to_ptr.vmem [resolvable:$true] %s3092
          %3095 = dma.vmem_to_hbm [thread:$0]  %s3093, 16, %s3090, %s3063
        $region124: #{predicate_level_encoder.1} parent=67 // pred_fallthru
          _
        // Predicated region
        $region125: #{predicate_level_encoder.1} parent=67 // pred_check
          %p3096 = pneg %p380
        $region126: #{predicate_level_encoder.1} parent=67 // pred_check_branch
          %3098 = sbr.rel (%p3096) target = $region128
        $region127: #{predicate_level_encoder.1} parent=67 // pred_region
          %s3100 = ssub.s32 16, 16
          %3101 = vsyncadd %s3067, %s3100
          %s3102 = smul.addr %s43, 16
          %s3103 = scalar_lea.hbm %s14, %s3102
          %s3105 = sshll.u32 %s3069, 4
          %s3106 = int_to_ptr.vmem [resolvable:$true] %s3105
          %3108 = dma.vmem_to_hbm [thread:$0]  %s3106, 16, %s3103, %s3067
        $region128: #{predicate_level_encoder.1} parent=67 // pred_fallthru
          _
      $region68: #{predicate_level_encoder.1} parent=5 // pred_fallthru
        _
      %p3109 = scmp.le.s32.totalorder 2, %s38
      // Predicated region
      $region129: #{predicate_level_encoder.1} parent=5 // pred_check
        %p3110 = pneg %p3109
      $region130: #{predicate_level_encoder.1} parent=5 // pred_check_branch
        %3112 = sbr.rel (%p3110) target = $region132
      $region131: #{predicate_level_encoder.1} parent=5 // pred_region
        %s3113 = ssub.s32 %s38, 2
        // Predicated region
        $region133: #{predicate_level_encoder.1} parent=131 // pred_check
          %p3114 = pneg %p334
        $region134: #{predicate_level_encoder.1} parent=131 // pred_check_branch
          %3116 = sbr.rel (%p3114) target = $region136
        $region135: #{predicate_level_encoder.1} parent=131 // pred_region
          %s3117 = sand.u32 %s319, 1
          %s3118 = scalar_lea.sflag [#allocation4], %s3117
          %s3119 = sand.u32 %s319, 1
          %s3120 = scalar_lea.vmem [#allocation22], %s3119
          %3121 = dma.done %s3118, 16
        $region136: #{predicate_level_encoder.1} parent=131 // pred_fallthru
          _
        // Predicated region
        $region137: #{predicate_level_encoder.1} parent=131 // pred_check
          %p3122 = pneg %p360
        $region138: #{predicate_level_encoder.1} parent=131 // pred_check_branch
          %3124 = sbr.rel (%p3122) target = $region140
        $region139: #{predicate_level_encoder.1} parent=131 // pred_region
          %s3125 = sand.u32 %s44, 1
          %s3126 = scalar_lea.sflag [#allocation24], %s3125
          %s3127 = sand.u32 %s345, 1
          %s3128 = scalar_lea.vmem [#allocation23], %s3127
          %3129 = dma.done %s3126, 16
        $region140: #{predicate_level_encoder.1} parent=131 // pred_fallthru
          _
        // Predicated region
        $region141: #{predicate_level_encoder.1} parent=131 // pred_check
          %p3130 = pneg %p386
        $region142: #{predicate_level_encoder.1} parent=131 // pred_check_branch
          %3132 = sbr.rel (%p3130) target = $region144
        $region143: #{predicate_level_encoder.1} parent=131 // pred_region
          %s3133 = sand.u32 %s44, 1
          %s3134 = scalar_lea.sflag [#allocation24], %s3133
          %s3135 = sand.u32 %s371, 1
          %s3136 = scalar_lea.vmem [#allocation25], %s3135
          %3137 = dma.done %s3134, 16
        $region144: #{predicate_level_encoder.1} parent=131 // pred_fallthru
          _
      $region132: #{predicate_level_encoder.1} parent=5 // pred_fallthru
        _
    $region6: #{predicate_level_encoder.1} parent=1 // loop_footer
      %s42 = sadd.s32 1, %s38
    $region7: #{predicate_level_encoder.1} parent=1 // loop_footer_branch
      %37 = sbr.rel target = $region3
    $region8: #{predicate_level_encoder.1} parent=1 // loop_exit
      _
    %3138 = vsyncpa [#allocation3], 1
    %s3139 = scalar_lea.sflag [#allocation3], 1
    %3140 = vsyncpa %s3139, 1
    %3141 = vsyncpa [#allocation6], 1
    %s3142 = scalar_lea.sflag [#allocation6], 1
    %3143 = vsyncpa %s3142, 1
    %3144 = vsyncpa [#allocation9], 1
    %3145 = vsyncpa [#allocation12], 1
    %3146 = vsyncpa [#allocation15], 1
    %3147 = vsyncpa [#allocation18], 1
    %3148 = vsyncpa [#allocation21], 1
    %3149 = vsyncpa [#allocation4], 1
    %s3150 = scalar_lea.sflag [#allocation4], 1
    %3151 = vsyncpa %s3150, 1
    %3152 = vsyncpa [#allocation24], 1
    %s3153 = scalar_lea.sflag [#allocation24], 1
    %3154 = vsyncpa %s3153, 1

</llo_original>
